<compile_context>
chip_gen: v5e
topology: v5e:2x2
jax: 0.10.0
libtpu: 0.0.40
codegen_flags: <defaults>
</compile_context>

<pallas_src>
import jax
import jax.numpy as jnp
from jax.experimental import pallas as pl
from jax.experimental.pallas import tpu as pltpu

# ----- synthetic backbone config (small, lane-aligned shapes) -----
B, S = 2, 16                 # batch, seq
NH, HD = 2, 128              # heads, head_dim (lane-aligned)
H = NH * HD                  # hidden = 256
F = 512                      # MLP intermediate
V = 256                      # vocab size
L = 2                        # transformer layers
EPS = 1e-5
IGNORE_INDEX = -100


def _layernorm(x, g, b):
    mu = jnp.mean(x, axis=-1, keepdims=True)
    var = jnp.mean((x - mu) ** 2, axis=-1, keepdims=True)
    return (x - mu) * jax.lax.rsqrt(var + EPS) * g + b


def _gelu(x):
    # tanh-approx GELU (VPU/EUP ops)
    return 0.5 * x * (1.0 + jnp.tanh(0.7978845608028654 * (x + 0.044715 * x * x * x)))


# --------------------- fused forward kernel (grid = (B, L)) ---------------------
def fused_forward_kernel(x_ref, mask_ref, lab_ref,
                         wq_ref, wk_ref, wv_ref, wo_ref,
                         ln1g_ref, ln1b_ref, ln2g_ref, ln2b_ref,
                         w1_ref, w2_ref,
                         lnfg_ref, lnfb_ref, wh_ref,
                         logits_ref, nll_ref, valid_ref,
                         x_scr):
    l = pl.program_id(1)

    # load embedded tokens into the resident activation scratch at layer 0
    @pl.when(l == 0)
    def _():
        x_scr[...] = x_ref[0]

    x = x_scr[...]                                        # (S, H) f32

    # ---- causal + key-padding mask, built in-kernel (no HBM bias tensor) ----
    row = jax.lax.broadcasted_iota(jnp.int32, (S, S), 0)
    col = jax.lax.broadcasted_iota(jnp.int32, (S, S), 1)
    allowed = (col <= row) & (mask_ref[0] > 0.5)          # (S,S) & (1,S) -> (S,S)

    # ---- multi-head self attention (pre-LN) ----
    h1 = _layernorm(x, ln1g_ref[0], ln1b_ref[0]).astype(jnp.bfloat16)
    wq = wq_ref[0]
    wk = wk_ref[0]
    wv = wv_ref[0]
    wo = wo_ref[0]
    q = jnp.dot(h1, wq, preferred_element_type=jnp.float32)   # 1/sqrt(HD) folded into wq
    k = jnp.dot(h1, wk, preferred_element_type=jnp.float32)
    v = jnp.dot(h1, wv, preferred_element_type=jnp.float32)

    attn_out = jnp.zeros((S, H), jnp.float32)
    for hh in range(NH):                                   # unrolled; HD=128 lane-aligned slices
        sl = slice(hh * HD, (hh + 1) * HD)
        qh = q[:, sl].astype(jnp.bfloat16)
        kh = k[:, sl].astype(jnp.bfloat16)
        vh = v[:, sl].astype(jnp.bfloat16)
        s = jax.lax.dot_general(qh, kh, (((1,), (1,)), ((), ())),
                                preferred_element_type=jnp.float32)   # (S, S) = q @ k^T
        s = jnp.where(allowed, s, -1e9)
        s = s - jnp.max(s, axis=-1, keepdims=True)
        p = jnp.exp(s)
        p = p * pl.reciprocal(jnp.sum(p, axis=-1, keepdims=True), approx=True)
        oh = jnp.dot(p.astype(jnp.bfloat16), vh, preferred_element_type=jnp.float32)  # (S, HD)
        # per-head accumulate through the matching slice of wo (no concat)
        attn_out = attn_out + jnp.dot(oh.astype(jnp.bfloat16), wo[sl, :],
                                      preferred_element_type=jnp.float32)
    x = x + attn_out

    # ---- MLP (pre-LN) ----
    h2 = _layernorm(x, ln2g_ref[0], ln2b_ref[0]).astype(jnp.bfloat16)
    m = _gelu(jnp.dot(h2, w1_ref[0], preferred_element_type=jnp.float32))
    x = x + jnp.dot(m.astype(jnp.bfloat16), w2_ref[0], preferred_element_type=jnp.float32)
    x_scr[...] = x

    # ---- LM head + shifted cross-entropy, only on the last layer ----
    @pl.when(l == pl.num_programs(1) - 1)
    def _():
        hf = _layernorm(x_scr[...], lnfg_ref[...], lnfb_ref[...]).astype(jnp.bfloat16)
        logits = jnp.dot(hf, wh_ref[...], preferred_element_type=jnp.float32)  # (S, V)
        logits_ref[0] = logits

        lab = lab_ref[0]                                    # (S, 1) int32, next-token targets
        mx = jnp.max(logits, axis=-1, keepdims=True)        # (S, 1)
        lse = mx + jnp.log(jnp.sum(jnp.exp(logits - mx), axis=-1, keepdims=True))
        col_v = jax.lax.broadcasted_iota(jnp.int32, (S, V), 1)
        picked = jnp.sum(jnp.where(col_v == lab, logits, 0.0), axis=-1, keepdims=True)
        valid = (lab != IGNORE_INDEX).astype(jnp.float32)   # (S, 1)
        nll = (lse - picked) * valid
        nll_ref[0] = jnp.sum(nll, axis=0, keepdims=True)       # (1, 1)
        valid_ref[0] = jnp.sum(valid, axis=0, keepdims=True)   # (1, 1)


def run_fused_forward(x_emb, mask3, labels_sh, p):
    return pl.pallas_call(
        fused_forward_kernel,
        out_shape=(jax.ShapeDtypeStruct((B, S, V), jnp.float32),
                   jax.ShapeDtypeStruct((B, 1, 1), jnp.float32),
                   jax.ShapeDtypeStruct((B, 1, 1), jnp.float32)),
        grid=(B, L),
        in_specs=[
            pl.BlockSpec((1, S, H), lambda b, l: (b, 0, 0)),   # embedded tokens
            pl.BlockSpec((1, 1, S), lambda b, l: (b, 0, 0)),   # attention mask (keys)
            pl.BlockSpec((1, S, 1), lambda b, l: (b, 0, 0)),   # shifted labels
            pl.BlockSpec((1, H, H), lambda b, l: (l, 0, 0)),   # wq (stacked over L)
            pl.BlockSpec((1, H, H), lambda b, l: (l, 0, 0)),   # wk
            pl.BlockSpec((1, H, H), lambda b, l: (l, 0, 0)),   # wv
            pl.BlockSpec((1, H, H), lambda b, l: (l, 0, 0)),   # wo
            pl.BlockSpec((1, 1, H), lambda b, l: (l, 0, 0)),   # ln1 gamma
            pl.BlockSpec((1, 1, H), lambda b, l: (l, 0, 0)),   # ln1 beta
            pl.BlockSpec((1, 1, H), lambda b, l: (l, 0, 0)),   # ln2 gamma
            pl.BlockSpec((1, 1, H), lambda b, l: (l, 0, 0)),   # ln2 beta
            pl.BlockSpec((1, H, F), lambda b, l: (l, 0, 0)),   # w1
            pl.BlockSpec((1, F, H), lambda b, l: (l, 0, 0)),   # w2
            pl.BlockSpec((1, H), lambda b, l: (0, 0)),         # final LN gamma
            pl.BlockSpec((1, H), lambda b, l: (0, 0)),         # final LN beta
            pl.BlockSpec((H, V), lambda b, l: (0, 0)),         # LM head
        ],
        out_specs=(
            pl.BlockSpec((1, S, V), lambda b, l: (b, 0, 0)),   # logits (written at l=L-1)
            pl.BlockSpec((1, 1, 1), lambda b, l: (b, 0, 0)),   # per-sample nll sum
            pl.BlockSpec((1, 1, 1), lambda b, l: (b, 0, 0)),   # per-sample valid count
        ),
        scratch_shapes=[pltpu.VMEM((S, H), jnp.float32)],      # resident activations
        compiler_params=pltpu.CompilerParams(
            dimension_semantics=("parallel", "arbitrary")),
    )(x_emb, mask3, labels_sh,
      p["wq"], p["wk"], p["wv"], p["wo"],
      p["ln1g"], p["ln1b"], p["ln2g"], p["ln2b"],
      p["w1"], p["w2"], p["lnfg"], p["lnfb"], p["wh"])


# ------------------------------ full forward ------------------------------
def init_params(key):
    ks = jax.random.split(key, 8)
    std = 0.02

    def w(k, shape):
        return std * jax.random.normal(k, shape, jnp.float32)

    return {
        "emb": w(ks[0], (V, H)),
        # attention scale 1/sqrt(HD) folded into wq; matmul weights stored in bf16
        "wq": (w(ks[1], (L, H, H)) * (HD ** -0.5)).astype(jnp.bfloat16),
        "wk": w(ks[2], (L, H, H)).astype(jnp.bfloat16),
        "wv": w(ks[3], (L, H, H)).astype(jnp.bfloat16),
        "wo": w(ks[4], (L, H, H)).astype(jnp.bfloat16),
        "ln1g": jnp.ones((L, 1, H), jnp.float32),
        "ln1b": jnp.zeros((L, 1, H), jnp.float32),
        "ln2g": jnp.ones((L, 1, H), jnp.float32),
        "ln2b": jnp.zeros((L, 1, H), jnp.float32),
        "w1": w(ks[5], (L, H, F)).astype(jnp.bfloat16),
        "w2": w(ks[6], (L, F, H)).astype(jnp.bfloat16),
        "lnfg": jnp.ones((1, H), jnp.float32),
        "lnfb": jnp.zeros((1, H), jnp.float32),
        "wh": w(ks[7], (H, V)).astype(jnp.bfloat16),
    }


def llm_forward(params, input_ids, attention_mask, labels):
    # glue: embedding gather, mask reshape, host-side next-token label shift
    x = params["emb"][input_ids]                                   # (B, S, H) f32
    mask3 = attention_mask.astype(jnp.float32)[:, None, :]         # (B, 1, S)
    labels_sh = jnp.concatenate(
        [labels[:, 1:], jnp.full((labels.shape[0], 1), IGNORE_INDEX, labels.dtype)],
        axis=1)[:, :, None]                                        # (B, S, 1)

    logits, nll_sum, valid_sum = run_fused_forward(x, mask3, labels_sh, params)

    nll = nll_sum[:, 0, 0]
    val = valid_sum[:, 0, 0]
    # trivial final reductions (glue): token-averaged loss + per-sample perplexity
    loss = jnp.sum(nll) / jnp.maximum(jnp.sum(val), 1.0)
    per_sample = jnp.exp(nll / jnp.maximum(val, 1.0))
    return {"logits": logits, "loss": loss, "perplexity": per_sample}


if __name__ == "__main__":
    key = jax.random.PRNGKey(0)
    kp, ki = jax.random.split(key)
    params = init_params(kp)

    input_ids = jax.random.randint(ki, (B, S), 0, V, dtype=jnp.int32)
    # sample 0: full length; sample 1: last 4 positions are padding
    attention_mask = jnp.stack(
        [jnp.ones((S,), jnp.int32),
         jnp.concatenate([jnp.ones((S - 4,), jnp.int32), jnp.zeros((4,), jnp.int32)])]
    )
    labels = jnp.where(attention_mask == 1, input_ids, IGNORE_INDEX).astype(jnp.int32)

    # TODO(synk): HF plumbing (batch_padding, LoRA wrapping, quantization, dropout,
    # tokenizer/generation config) has no Pallas equivalent; only the backbone
    # forward + CE loss + per-sample perplexity are kernelized.
    out = llm_forward(params, input_ids, attention_mask, labels)
    jax.block_until_ready(out["loss"])
    jax.block_until_ready(out["perplexity"])
    print("KERNEL_OK")
</pallas_src>

<mosaic_0001>
module attributes {stable_mosaic.version = 11 : i64} {
  func.func @fused_forward_kernel(%arg0: i32, %arg1: i32, %arg2: memref<1x16x256xf32, #tpu.memory_space<vmem>>, %arg3: memref<1x1x16xf32, #tpu.memory_space<vmem>>, %arg4: memref<1x16x1xi32, #tpu.memory_space<vmem>>, %arg5: memref<1x256x256xbf16, #tpu.memory_space<vmem>>, %arg6: memref<1x256x256xbf16, #tpu.memory_space<vmem>>, %arg7: memref<1x256x256xbf16, #tpu.memory_space<vmem>>, %arg8: memref<1x256x256xbf16, #tpu.memory_space<vmem>>, %arg9: memref<1x1x256xf32, #tpu.memory_space<vmem>>, %arg10: memref<1x1x256xf32, #tpu.memory_space<vmem>>, %arg11: memref<1x1x256xf32, #tpu.memory_space<vmem>>, %arg12: memref<1x1x256xf32, #tpu.memory_space<vmem>>, %arg13: memref<1x256x512xbf16, #tpu.memory_space<vmem>>, %arg14: memref<1x512x256xbf16, #tpu.memory_space<vmem>>, %arg15: memref<1x256xf32, #tpu.memory_space<vmem>>, %arg16: memref<1x256xf32, #tpu.memory_space<vmem>>, %arg17: memref<256x256xbf16, #tpu.memory_space<vmem>>, %arg18: memref<1x16x256xf32, #tpu.memory_space<vmem>>, %arg19: memref<1x1x1xf32, #tpu.memory_space<vmem>>, %arg20: memref<1x1x1xf32, #tpu.memory_space<vmem>>, %arg21: memref<16x256xf32, #tpu.memory_space<vmem>>) attributes {dimension_semantics = [#tpu.dimension_semantics<parallel>, #tpu.dimension_semantics<arbitrary>], iteration_bounds = array<i64: 2, 2>, scalar_prefetch = 0 : i64, scratch_operands = 1 : i64, tpu.core_type = #tpu.core_type<tc>, window_params = [{transform_indices = @transform_0, window_bounds = array<i64: 1, 16, 256>}, {transform_indices = @transform_1, window_bounds = array<i64: 1, 1, 16>}, {transform_indices = @transform_2, window_bounds = array<i64: 1, 16, 1>}, {transform_indices = @transform_3, window_bounds = array<i64: 1, 256, 256>}, {transform_indices = @transform_4, window_bounds = array<i64: 1, 256, 256>}, {transform_indices = @transform_5, window_bounds = array<i64: 1, 256, 256>}, {transform_indices = @transform_6, window_bounds = array<i64: 1, 256, 256>}, {transform_indices = @transform_7, window_bounds = array<i64: 1, 1, 256>}, {transform_indices = @transform_8, window_bounds = array<i64: 1, 1, 256>}, {transform_indices = @transform_9, window_bounds = array<i64: 1, 1, 256>}, {transform_indices = @transform_10, window_bounds = array<i64: 1, 1, 256>}, {transform_indices = @transform_11, window_bounds = array<i64: 1, 256, 512>}, {transform_indices = @transform_12, window_bounds = array<i64: 1, 512, 256>}, {pipeline_mode = #tpu.pipeline_mode<synchronous>, transform_indices = @transform_13, window_bounds = array<i64: 1, 256>}, {pipeline_mode = #tpu.pipeline_mode<synchronous>, transform_indices = @transform_14, window_bounds = array<i64: 1, 256>}, {pipeline_mode = #tpu.pipeline_mode<synchronous>, transform_indices = @transform_15, window_bounds = array<i64: 256, 256>}, {transform_indices = @transform_16, window_bounds = array<i64: 1, 16, 256>}, {transform_indices = @transform_17, window_bounds = array<i64: 1, 1, 1>}, {transform_indices = @transform_18, window_bounds = array<i64: 1, 1, 1>}]} {
    %c0_i32 = arith.constant 0 : i32
    %0 = arith.cmpi eq, %arg1, %c0_i32 : i32
    %1 = arith.extui %0 : i1 to i32
    %c0_i32_0 = arith.constant 0 : i32
    %2 = arith.cmpi ne, %1, %c0_i32_0 : i32
    scf.if %2 {
      %c0_70 = arith.constant 0 : index
      %c0_71 = arith.constant 0 : index
      %c0_72 = arith.constant 0 : index
      %155 = vector.load %arg2[%c0_70, %c0_71, %c0_72] : memref<1x16x256xf32, #tpu.memory_space<vmem>>, vector<1x16x256xf32>
      %156 = vector.shape_cast %155 : vector<1x16x256xf32> to vector<16x256xf32>
      %c0_73 = arith.constant 0 : index
      %c0_74 = arith.constant 0 : index
      %157 = vector.load %arg21[%c0_73, %c0_74] : memref<16x256xf32, #tpu.memory_space<vmem>>, vector<16x256xf32>
      tpu.vector_store %arg21[%c0_73, %c0_74], %156 {strides = array<i32>} : memref<16x256xf32, #tpu.memory_space<vmem>>, vector<16x256xf32>,
    } else {
    }
    %c0 = arith.constant 0 : index
    %c0_1 = arith.constant 0 : index
    %3 = vector.load %arg21[%c0, %c0_1] : memref<16x256xf32, #tpu.memory_space<vmem>>, vector<16x256xf32>
    %4 = tpu.iota {dimensions = array<i32: 0>} : vector<16x16xi32>
    %5 = tpu.iota {dimensions = array<i32: 1>} : vector<16x16xi32>
    %6 = arith.cmpi sle, %5, %4 : vector<16x16xi32>
    %c0_2 = arith.constant 0 : index
    %c0_3 = arith.constant 0 : index
    %c0_4 = arith.constant 0 : index
    %7 = vector.load %arg3[%c0_2, %c0_3, %c0_4] : memref<1x1x16xf32, #tpu.memory_space<vmem>>, vector<1x1x16xf32>
    %8 = vector.shape_cast %7 : vector<1x1x16xf32> to vector<1x16xf32>
    %cst = arith.constant 5.000000e-01 : f32
    %9 = vector.broadcast %cst : f32 to vector<1x16xf32>
    %10 = arith.cmpf ogt, %8, %9 : vector<1x16xf32>
    %11 = vector.broadcast %10 : vector<1x16xi1> to vector<16x16xi1>
    %12 = arith.andi %6, %11 : vector<16x16xi1>
    %c0_5 = arith.constant 0 : index
    %c0_6 = arith.constant 0 : index
    %c0_7 = arith.constant 0 : index
    %13 = vector.load %arg9[%c0_5, %c0_6, %c0_7] : memref<1x1x256xf32, #tpu.memory_space<vmem>>, vector<1x1x256xf32>
    %14 = vector.shape_cast %13 : vector<1x1x256xf32> to vector<1x256xf32>
    %c0_8 = arith.constant 0 : index
    %c0_9 = arith.constant 0 : index
    %c0_10 = arith.constant 0 : index
    %15 = vector.load %arg10[%c0_8, %c0_9, %c0_10] : memref<1x1x256xf32, #tpu.memory_space<vmem>>, vector<1x1x256xf32>
    %16 = vector.shape_cast %15 : vector<1x1x256xf32> to vector<1x256xf32>
    %cst_11 = arith.constant dense<0.000000e+00> : vector<16xf32>
    %17 = vector.multi_reduction <add>, %3, %cst_11 [1] : vector<16x256xf32> to vector<16xf32>
    %18 = vector.shape_cast %17 : vector<16xf32> to vector<16x1xf32>
    %cst_12 = arith.constant 2.560000e+02 : f32
    %19 = vector.broadcast %cst_12 : f32 to vector<16x1xf32>
    %20 = arith.divf %18, %19 : vector<16x1xf32>
    %21 = vector.broadcast %20 : vector<16x1xf32> to vector<16x256xf32>
    %22 = arith.subf %3, %21 : vector<16x256xf32>
    %23 = arith.mulf %22, %22 : vector<16x256xf32>
    %cst_13 = arith.constant dense<0.000000e+00> : vector<16xf32>
    %24 = vector.multi_reduction <add>, %23, %cst_13 [1] : vector<16x256xf32> to vector<16xf32>
    %25 = vector.shape_cast %24 : vector<16xf32> to vector<16x1xf32>
    %cst_14 = arith.constant 2.560000e+02 : f32
    %26 = vector.broadcast %cst_14 : f32 to vector<16x1xf32>
    %27 = arith.divf %25, %26 : vector<16x1xf32>
    %28 = vector.broadcast %20 : vector<16x1xf32> to vector<16x256xf32>
    %29 = arith.subf %3, %28 : vector<16x256xf32>
    %cst_15 = arith.constant 9.99999974E-6 : f32
    %30 = vector.broadcast %cst_15 : f32 to vector<16x1xf32>
    %31 = arith.addf %27, %30 : vector<16x1xf32>
    %32 = math.rsqrt %31 : vector<16x1xf32>
    %33 = vector.broadcast %32 : vector<16x1xf32> to vector<16x256xf32>
    %34 = arith.mulf %29, %33 : vector<16x256xf32>
    %35 = vector.broadcast %14 : vector<1x256xf32> to vector<16x256xf32>
    %36 = arith.mulf %34, %35 : vector<16x256xf32>
    %37 = vector.broadcast %16 : vector<1x256xf32> to vector<16x256xf32>
    %38 = arith.addf %36, %37 : vector<16x256xf32>
    %39 = arith.truncf %38 : vector<16x256xf32> to vector<16x256xbf16>
    %c0_16 = arith.constant 0 : index
    %c0_17 = arith.constant 0 : index
    %c0_18 = arith.constant 0 : index
    %40 = vector.load %arg5[%c0_16, %c0_17, %c0_18] : memref<1x256x256xbf16, #tpu.memory_space<vmem>>, vector<1x256x256xbf16>
    %41 = vector.shape_cast %40 : vector<1x256x256xbf16> to vector<256x256xbf16>
    %c0_19 = arith.constant 0 : index
    %c0_20 = arith.constant 0 : index
    %c0_21 = arith.constant 0 : index
    %42 = vector.load %arg6[%c0_19, %c0_20, %c0_21] : memref<1x256x256xbf16, #tpu.memory_space<vmem>>, vector<1x256x256xbf16>
    %43 = vector.shape_cast %42 : vector<1x256x256xbf16> to vector<256x256xbf16>
    %c0_22 = arith.constant 0 : index
    %c0_23 = arith.constant 0 : index
    %c0_24 = arith.constant 0 : index
    %44 = vector.load %arg7[%c0_22, %c0_23, %c0_24] : memref<1x256x256xbf16, #tpu.memory_space<vmem>>, vector<1x256x256xbf16>
    %45 = vector.shape_cast %44 : vector<1x256x256xbf16> to vector<256x256xbf16>
    %c0_25 = arith.constant 0 : index
    %c0_26 = arith.constant 0 : index
    %c0_27 = arith.constant 0 : index
    %46 = vector.load %arg8[%c0_25, %c0_26, %c0_27] : memref<1x256x256xbf16, #tpu.memory_space<vmem>>, vector<1x256x256xbf16>
    %47 = vector.shape_cast %46 : vector<1x256x256xbf16> to vector<256x256xbf16>
    %cst_28 = arith.constant dense<0.000000e+00> : vector<16x256xf32>
    %48 = tpu.matmul %39, %41, %cst_28 {dimension_numbers = #tpu.dot_dimension_numbers<[1], [0], [0], [1], [0, 0, 1, 1], [], []>} : vector<16x256xbf16>, vector<256x256xbf16>, vector<16x256xf32> -> vector<16x256xf32>
    %cst_29 = arith.constant dense<0.000000e+00> : vector<16x256xf32>
    %49 = tpu.matmul %39, %43, %cst_29 {dimension_numbers = #tpu.dot_dimension_numbers<[1], [0], [0], [1], [0, 0, 1, 1], [], []>} : vector<16x256xbf16>, vector<256x256xbf16>, vector<16x256xf32> -> vector<16x256xf32>
    %cst_30 = arith.constant dense<0.000000e+00> : vector<16x256xf32>
    %50 = tpu.matmul %39, %45, %cst_30 {dimension_numbers = #tpu.dot_dimension_numbers<[1], [0], [0], [1], [0, 0, 1, 1], [], []>} : vector<16x256xbf16>, vector<256x256xbf16>, vector<16x256xf32> -> vector<16x256xf32>
    %cst_31 = arith.constant 0.000000e+00 : f32
    %51 = vector.broadcast %cst_31 : f32 to vector<16x256xf32>
    %52 = vector.extract_strided_slice %48 {offsets = [0, 0], sizes = [16, 128], strides = [1, 1]} : vector<16x256xf32> to vector<16x128xf32>
    %53 = arith.truncf %52 : vector<16x128xf32> to vector<16x128xbf16>
    %54 = vector.extract_strided_slice %49 {offsets = [0, 0], sizes = [16, 128], strides = [1, 1]} : vector<16x256xf32> to vector<16x128xf32>
    %55 = arith.truncf %54 : vector<16x128xf32> to vector<16x128xbf16>
    %56 = vector.extract_strided_slice %50 {offsets = [0, 0], sizes = [16, 128], strides = [1, 1]} : vector<16x256xf32> to vector<16x128xf32>
    %57 = arith.truncf %56 : vector<16x128xf32> to vector<16x128xbf16>
    %cst_32 = arith.constant dense<0.000000e+00> : vector<16x16xf32>
    %58 = tpu.matmul %53, %55, %cst_32 {dimension_numbers = #tpu.dot_dimension_numbers<[1], [1], [0], [0], [0, 0, 1, 0], [], []>} : vector<16x128xbf16>, vector<16x128xbf16>, vector<16x16xf32> -> vector<16x16xf32>
    %cst_33 = arith.constant -1.000000e+09 : f32
    %59 = vector.broadcast %cst_33 : f32 to vector<16x16xf32>
    %60 = arith.select %12, %58, %59 : vector<16x16xi1>, vector<16x16xf32>
    %cst_34 = arith.constant dense<0xFF800000> : vector<16xf32>
    %61 = vector.multi_reduction <maximumf>, %60, %cst_34 [1] : vector<16x16xf32> to vector<16xf32>
    %62 = vector.shape_cast %61 : vector<16xf32> to vector<16x1xf32>
    %63 = vector.broadcast %62 : vector<16x1xf32> to vector<16x16xf32>
    %64 = arith.subf %60, %63 : vector<16x16xf32>
    %65 = math.exp %64 : vector<16x16xf32>
    %cst_35 = arith.constant dense<0.000000e+00> : vector<16xf32>
    %66 = vector.multi_reduction <add>, %65, %cst_35 [1] : vector<16x16xf32> to vector<16xf32>
    %67 = vector.shape_cast %66 : vector<16xf32> to vector<16x1xf32>
    %68 = tpu.reciprocal %67 {approx = true} : vector<16x1xf32> -> vector<16x1xf32>
    %69 = vector.broadcast %68 : vector<16x1xf32> to vector<16x16xf32>
    %70 = arith.mulf %65, %69 : vector<16x16xf32>
    %71 = arith.truncf %70 : vector<16x16xf32> to vector<16x16xbf16>
    %cst_36 = arith.constant dense<0.000000e+00> : vector<16x128xf32>
    %72 = tpu.matmul %71, %57, %cst_36 {dimension_numbers = #tpu.dot_dimension_numbers<[1], [0], [0], [1], [0, 0, 1, 1], [], []>} : vector<16x16xbf16>, vector<16x128xbf16>, vector<16x128xf32> -> vector<16x128xf32>
    %73 = arith.truncf %72 : vector<16x128xf32> to vector<16x128xbf16>
    %74 = vector.extract_strided_slice %47 {offsets = [0, 0], sizes = [128, 256], strides = [1, 1]} : vector<256x256xbf16> to vector<128x256xbf16>
    %cst_37 = arith.constant dense<0.000000e+00> : vector<16x256xf32>
    %75 = tpu.matmul %73, %74, %cst_37 {dimension_numbers = #tpu.dot_dimension_numbers<[1], [0], [0], [1], [0, 0, 1, 1], [], []>} : vector<16x128xbf16>, vector<128x256xbf16>, vector<16x256xf32> -> vector<16x256xf32>
    %76 = arith.addf %51, %75 : vector<16x256xf32>
    %77 = vector.extract_strided_slice %48 {offsets = [0, 128], sizes = [16, 128], strides = [1, 1]} : vector<16x256xf32> to vector<16x128xf32>
    %78 = arith.truncf %77 : vector<16x128xf32> to vector<16x128xbf16>
    %79 = vector.extract_strided_slice %49 {offsets = [0, 128], sizes = [16, 128], strides = [1, 1]} : vector<16x256xf32> to vector<16x128xf32>
    %80 = arith.truncf %79 : vector<16x128xf32> to vector<16x128xbf16>
    %81 = vector.extract_strided_slice %50 {offsets = [0, 128], sizes = [16, 128], strides = [1, 1]} : vector<16x256xf32> to vector<16x128xf32>
    %82 = arith.truncf %81 : vector<16x128xf32> to vector<16x128xbf16>
    %cst_38 = arith.constant dense<0.000000e+00> : vector<16x16xf32>
    %83 = tpu.matmul %78, %80, %cst_38 {dimension_numbers = #tpu.dot_dimension_numbers<[1], [1], [0], [0], [0, 0, 1, 0], [], []>} : vector<16x128xbf16>, vector<16x128xbf16>, vector<16x16xf32> -> vector<16x16xf32>
    %cst_39 = arith.constant -1.000000e+09 : f32
    %84 = vector.broadcast %cst_39 : f32 to vector<16x16xf32>
    %85 = arith.select %12, %83, %84 : vector<16x16xi1>, vector<16x16xf32>
    %cst_40 = arith.constant dense<0xFF800000> : vector<16xf32>
    %86 = vector.multi_reduction <maximumf>, %85, %cst_40 [1] : vector<16x16xf32> to vector<16xf32>
    %87 = vector.shape_cast %86 : vector<16xf32> to vector<16x1xf32>
    %88 = vector.broadcast %87 : vector<16x1xf32> to vector<16x16xf32>
    %89 = arith.subf %85, %88 : vector<16x16xf32>
    %90 = math.exp %89 : vector<16x16xf32>
    %cst_41 = arith.constant dense<0.000000e+00> : vector<16xf32>
    %91 = vector.multi_reduction <add>, %90, %cst_41 [1] : vector<16x16xf32> to vector<16xf32>
    %92 = vector.shape_cast %91 : vector<16xf32> to vector<16x1xf32>
    %93 = tpu.reciprocal %92 {approx = true} : vector<16x1xf32> -> vector<16x1xf32>
    %94 = vector.broadcast %93 : vector<16x1xf32> to vector<16x16xf32>
    %95 = arith.mulf %90, %94 : vector<16x16xf32>
    %96 = arith.truncf %95 : vector<16x16xf32> to vector<16x16xbf16>
    %cst_42 = arith.constant dense<0.000000e+00> : vector<16x128xf32>
    %97 = tpu.matmul %96, %82, %cst_42 {dimension_numbers = #tpu.dot_dimension_numbers<[1], [0], [0], [1], [0, 0, 1, 1], [], []>} : vector<16x16xbf16>, vector<16x128xbf16>, vector<16x128xf32> -> vector<16x128xf32>
    %98 = arith.truncf %97 : vector<16x128xf32> to vector<16x128xbf16>
    %99 = vector.extract_strided_slice %47 {offsets = [128, 0], sizes = [128, 256], strides = [1, 1]} : vector<256x256xbf16> to vector<128x256xbf16>
    %cst_43 = arith.constant dense<0.000000e+00> : vector<16x256xf32>
    %100 = tpu.matmul %98, %99, %cst_43 {dimension_numbers = #tpu.dot_dimension_numbers<[1], [0], [0], [1], [0, 0, 1, 1], [], []>} : vector<16x128xbf16>, vector<128x256xbf16>, vector<16x256xf32> -> vector<16x256xf32>
    %101 = arith.addf %76, %100 : vector<16x256xf32>
    %102 = arith.addf %3, %101 : vector<16x256xf32>
    %c0_44 = arith.constant 0 : index
    %c0_45 = arith.constant 0 : index
    %c0_46 = arith.constant 0 : index
    %103 = vector.load %arg11[%c0_44, %c0_45, %c0_46] : memref<1x1x256xf32, #tpu.memory_space<vmem>>, vector<1x1x256xf32>
    %104 = vector.shape_cast %103 : vector<1x1x256xf32> to vector<1x256xf32>
    %c0_47 = arith.constant 0 : index
    %c0_48 = arith.constant 0 : index
    %c0_49 = arith.constant 0 : index
    %105 = vector.load %arg12[%c0_47, %c0_48, %c0_49] : memref<1x1x256xf32, #tpu.memory_space<vmem>>, vector<1x1x256xf32>
    %106 = vector.shape_cast %105 : vector<1x1x256xf32> to vector<1x256xf32>
    %cst_50 = arith.constant dense<0.000000e+00> : vector<16xf32>
    %107 = vector.multi_reduction <add>, %102, %cst_50 [1] : vector<16x256xf32> to vector<16xf32>
    %108 = vector.shape_cast %107 : vector<16xf32> to vector<16x1xf32>
    %cst_51 = arith.constant 2.560000e+02 : f32
    %109 = vector.broadcast %cst_51 : f32 to vector<16x1xf32>
    %110 = arith.divf %108, %109 : vector<16x1xf32>
    %111 = vector.broadcast %110 : vector<16x1xf32> to vector<16x256xf32>
    %112 = arith.subf %102, %111 : vector<16x256xf32>
    %113 = arith.mulf %112, %112 : vector<16x256xf32>
    %cst_52 = arith.constant dense<0.000000e+00> : vector<16xf32>
    %114 = vector.multi_reduction <add>, %113, %cst_52 [1] : vector<16x256xf32> to vector<16xf32>
    %115 = vector.shape_cast %114 : vector<16xf32> to vector<16x1xf32>
    %cst_53 = arith.constant 2.560000e+02 : f32
    %116 = vector.broadcast %cst_53 : f32 to vector<16x1xf32>
    %117 = arith.divf %115, %116 : vector<16x1xf32>
    %118 = vector.broadcast %110 : vector<16x1xf32> to vector<16x256xf32>
    %119 = arith.subf %102, %118 : vector<16x256xf32>
    %cst_54 = arith.constant 9.99999974E-6 : f32
    %120 = vector.broadcast %cst_54 : f32 to vector<16x1xf32>
    %121 = arith.addf %117, %120 : vector<16x1xf32>
    %122 = math.rsqrt %121 : vector<16x1xf32>
    %123 = vector.broadcast %122 : vector<16x1xf32> to vector<16x256xf32>
    %124 = arith.mulf %119, %123 : vector<16x256xf32>
    %125 = vector.broadcast %104 : vector<1x256xf32> to vector<16x256xf32>
    %126 = arith.mulf %124, %125 : vector<16x256xf32>
    %127 = vector.broadcast %106 : vector<1x256xf32> to vector<16x256xf32>
    %128 = arith.addf %126, %127 : vector<16x256xf32>
    %129 = arith.truncf %128 : vector<16x256xf32> to vector<16x256xbf16>
    %c0_55 = arith.constant 0 : index
    %c0_56 = arith.constant 0 : index
    %c0_57 = arith.constant 0 : index
    %130 = vector.load %arg13[%c0_55, %c0_56, %c0_57] : memref<1x256x512xbf16, #tpu.memory_space<vmem>>, vector<1x256x512xbf16>
    %131 = vector.shape_cast %130 : vector<1x256x512xbf16> to vector<256x512xbf16>
    %cst_58 = arith.constant dense<0.000000e+00> : vector<16x512xf32>
    %132 = tpu.matmul %129, %131, %cst_58 {dimension_numbers = #tpu.dot_dimension_numbers<[1], [0], [0], [1], [0, 0, 1, 1], [], []>} : vector<16x256xbf16>, vector<256x512xbf16>, vector<16x512xf32> -> vector<16x512xf32>
    %cst_59 = arith.constant 5.000000e-01 : f32
    %133 = vector.broadcast %cst_59 : f32 to vector<16x512xf32>
    %134 = arith.mulf %133, %132 : vector<16x512xf32>
    %cst_60 = arith.constant 4.471500e-02 : f32
    %135 = vector.broadcast %cst_60 : f32 to vector<16x512xf32>
    %136 = arith.mulf %135, %132 : vector<16x512xf32>
    %137 = arith.mulf %136, %132 : vector<16x512xf32>
    %138 = arith.mulf %137, %132 : vector<16x512xf32>
    %139 = arith.addf %132, %138 : vector<16x512xf32>
    %cst_61 = arith.constant 0.797884583 : f32
    %140 = vector.broadcast %cst_61 : f32 to vector<16x512xf32>
    %141 = arith.mulf %140, %139 : vector<16x512xf32>
    %142 = math.tanh %141 : vector<16x512xf32>
    %cst_62 = arith.constant 1.000000e+00 : f32
    %143 = vector.broadcast %cst_62 : f32 to vector<16x512xf32>
    %144 = arith.addf %143, %142 : vector<16x512xf32>
    %145 = arith.mulf %134, %144 : vector<16x512xf32>
    %146 = arith.truncf %145 : vector<16x512xf32> to vector<16x512xbf16>
    %c0_63 = arith.constant 0 : index
    %c0_64 = arith.constant 0 : index
    %c0_65 = arith.constant 0 : index
    %147 = vector.load %arg14[%c0_63, %c0_64, %c0_65] : memref<1x512x256xbf16, #tpu.memory_space<vmem>>, vector<1x512x256xbf16>
    %148 = vector.shape_cast %147 : vector<1x512x256xbf16> to vector<512x256xbf16>
    %cst_66 = arith.constant dense<0.000000e+00> : vector<16x256xf32>
    %149 = tpu.matmul %146, %148, %cst_66 {dimension_numbers = #tpu.dot_dimension_numbers<[1], [0], [0], [1], [0, 0, 1, 1], [], []>} : vector<16x512xbf16>, vector<512x256xbf16>, vector<16x256xf32> -> vector<16x256xf32>
    %150 = arith.addf %102, %149 : vector<16x256xf32>
    %c0_67 = arith.constant 0 : index
    %c0_68 = arith.constant 0 : index
    %151 = vector.load %arg21[%c0_67, %c0_68] : memref<16x256xf32, #tpu.memory_space<vmem>>, vector<16x256xf32>
    tpu.vector_store %arg21[%c0_67, %c0_68], %150 {strides = array<i32>} : memref<16x256xf32, #tpu.memory_space<vmem>>, vector<16x256xf32>,
    %c1_i32 = arith.constant 1 : i32
    %152 = arith.cmpi eq, %arg1, %c1_i32 : i32
    %153 = arith.extui %152 : i1 to i32
    %c0_i32_69 = arith.constant 0 : i32
    %154 = arith.cmpi ne, %153, %c0_i32_69 : i32
    scf.if %154 {
      %c0_70 = arith.constant 0 : index
      %c0_71 = arith.constant 0 : index
      %155 = vector.load %arg21[%c0_70, %c0_71] : memref<16x256xf32, #tpu.memory_space<vmem>>, vector<16x256xf32>
      %c0_72 = arith.constant 0 : index
      %c0_73 = arith.constant 0 : index
      %156 = vector.load %arg15[%c0_72, %c0_73] : memref<1x256xf32, #tpu.memory_space<vmem>>, vector<1x256xf32>
      %c0_74 = arith.constant 0 : index
      %c0_75 = arith.constant 0 : index
      %157 = vector.load %arg16[%c0_74, %c0_75] : memref<1x256xf32, #tpu.memory_space<vmem>>, vector<1x256xf32>
      %cst_76 = arith.constant dense<0.000000e+00> : vector<16xf32>
      %158 = vector.multi_reduction <add>, %155, %cst_76 [1] : vector<16x256xf32> to vector<16xf32>
      %159 = vector.shape_cast %158 : vector<16xf32> to vector<16x1xf32>
      %cst_77 = arith.constant 2.560000e+02 : f32
      %160 = vector.broadcast %cst_77 : f32 to vector<16x1xf32>
      %161 = arith.divf %159, %160 : vector<16x1xf32>
      %162 = vector.broadcast %161 : vector<16x1xf32> to vector<16x256xf32>
      %163 = arith.subf %155, %162 : vector<16x256xf32>
      %164 = arith.mulf %163, %163 : vector<16x256xf32>
      %cst_78 = arith.constant dense<0.000000e+00> : vector<16xf32>
      %165 = vector.multi_reduction <add>, %164, %cst_78 [1] : vector<16x256xf32> to vector<16xf32>
      %166 = vector.shape_cast %165 : vector<16xf32> to vector<16x1xf32>
      %cst_79 = arith.constant 2.560000e+02 : f32
      %167 = vector.broadcast %cst_79 : f32 to vector<16x1xf32>
      %168 = arith.divf %166, %167 : vector<16x1xf32>
      %169 = vector.broadcast %161 : vector<16x1xf32> to vector<16x256xf32>
      %170 = arith.subf %155, %169 : vector<16x256xf32>
      %cst_80 = arith.constant 9.99999974E-6 : f32
      %171 = vector.broadcast %cst_80 : f32 to vector<16x1xf32>
      %172 = arith.addf %168, %171 : vector<16x1xf32>
      %173 = math.rsqrt %172 : vector<16x1xf32>
      %174 = vector.broadcast %173 : vector<16x1xf32> to vector<16x256xf32>
      %175 = arith.mulf %170, %174 : vector<16x256xf32>
      %176 = vector.broadcast %156 : vector<1x256xf32> to vector<16x256xf32>
      %177 = arith.mulf %175, %176 : vector<16x256xf32>
      %178 = vector.broadcast %157 : vector<1x256xf32> to vector<16x256xf32>
      %179 = arith.addf %177, %178 : vector<16x256xf32>
      %180 = arith.truncf %179 : vector<16x256xf32> to vector<16x256xbf16>
      %c0_81 = arith.constant 0 : index
      %c0_82 = arith.constant 0 : index
      %181 = vector.load %arg17[%c0_81, %c0_82] : memref<256x256xbf16, #tpu.memory_space<vmem>>, vector<256x256xbf16>
      %cst_83 = arith.constant dense<0.000000e+00> : vector<16x256xf32>
      %182 = tpu.matmul %180, %181, %cst_83 {dimension_numbers = #tpu.dot_dimension_numbers<[1], [0], [0], [1], [0, 0, 1, 1], [], []>} : vector<16x256xbf16>, vector<256x256xbf16>, vector<16x256xf32> -> vector<16x256xf32>
      %c0_84 = arith.constant 0 : index
      %c0_85 = arith.constant 0 : index
      %c0_86 = arith.constant 0 : index
      %183 = vector.load %arg18[%c0_84, %c0_85, %c0_86] : memref<1x16x256xf32, #tpu.memory_space<vmem>>, vector<1x16x256xf32>
      %184 = vector.shape_cast %183 : vector<1x16x256xf32> to vector<16x256xf32>
      %185 = vector.shape_cast %182 : vector<16x256xf32> to vector<1x16x256xf32>
      tpu.vector_store %arg18[%c0_84, %c0_85, %c0_86], %185 {strides = array<i32>} : memref<1x16x256xf32, #tpu.memory_space<vmem>>, vector<1x16x256xf32>,
      %c0_87 = arith.constant 0 : index
      %c0_88 = arith.constant 0 : index
      %c0_89 = arith.constant 0 : index
      %186 = vector.load %arg4[%c0_87, %c0_88, %c0_89] : memref<1x16x1xi32, #tpu.memory_space<vmem>>, vector<1x16x1xi32>
      %187 = vector.shape_cast %186 : vector<1x16x1xi32> to vector<16x1xi32>
      %cst_90 = arith.constant dense<0xFF800000> : vector<16xf32>
      %188 = vector.multi_reduction <maximumf>, %182, %cst_90 [1] : vector<16x256xf32> to vector<16xf32>
      %189 = vector.shape_cast %188 : vector<16xf32> to vector<16x1xf32>
      %190 = vector.broadcast %189 : vector<16x1xf32> to vector<16x256xf32>
      %191 = arith.subf %182, %190 : vector<16x256xf32>
      %192 = math.exp %191 : vector<16x256xf32>
      %cst_91 = arith.constant dense<0.000000e+00> : vector<16xf32>
      %193 = vector.multi_reduction <add>, %192, %cst_91 [1] : vector<16x256xf32> to vector<16xf32>
      %194 = vector.shape_cast %193 : vector<16xf32> to vector<16x1xf32>
      %195 = math.log %194 : vector<16x1xf32>
      %196 = arith.addf %189, %195 : vector<16x1xf32>
      %197 = tpu.iota {dimensions = array<i32: 1>} : vector<16x256xi32>
      %198 = vector.broadcast %187 : vector<16x1xi32> to vector<16x256xi32>
      %199 = arith.cmpi eq, %197, %198 : vector<16x256xi32>
      %cst_92 = arith.constant 0.000000e+00 : f32
      %200 = vector.broadcast %cst_92 : f32 to vector<16x256xf32>
      %201 = arith.select %199, %182, %200 : vector<16x256xi1>, vector<16x256xf32>
      %cst_93 = arith.constant dense<0.000000e+00> : vector<16xf32>
      %202 = vector.multi_reduction <add>, %201, %cst_93 [1] : vector<16x256xf32> to vector<16xf32>
      %203 = vector.shape_cast %202 : vector<16xf32> to vector<16x1xf32>
      %c-100_i32 = arith.constant -100 : i32
      %204 = vector.broadcast %c-100_i32 : i32 to vector<16x1xi32>
      %205 = arith.cmpi ne, %187, %204 : vector<16x1xi32>
      %206 = arith.extui %205 : vector<16x1xi1> to vector<16x1xi32>
      %207 = arith.sitofp %206 : vector<16x1xi32> to vector<16x1xf32>
      %208 = arith.subf %196, %203 : vector<16x1xf32>
      %209 = arith.mulf %208, %207 : vector<16x1xf32>
      %cst_94 = arith.constant dense<0.000000e+00> : vector<1xf32>
      %210 = vector.multi_reduction <add>, %209, %cst_94 [0] : vector<16x1xf32> to vector<1xf32>
      %211 = vector.shape_cast %210 : vector<1xf32> to vector<1x1xf32>
      %c0_95 = arith.constant 0 : index
      %c0_96 = arith.constant 0 : index
      %c0_97 = arith.constant 0 : index
      %212 = vector.load %arg19[%c0_95, %c0_96, %c0_97] : memref<1x1x1xf32, #tpu.memory_space<vmem>>, vector<1x1x1xf32>
      %213 = vector.shape_cast %212 : vector<1x1x1xf32> to vector<1x1xf32>
      %214 = vector.shape_cast %211 : vector<1x1xf32> to vector<1x1x1xf32>
      tpu.vector_store %arg19[%c0_95, %c0_96, %c0_97], %214 {strides = array<i32>} : memref<1x1x1xf32, #tpu.memory_space<vmem>>, vector<1x1x1xf32>,
      %cst_98 = arith.constant dense<0.000000e+00> : vector<1xf32>
      %215 = vector.multi_reduction <add>, %207, %cst_98 [0] : vector<16x1xf32> to vector<1xf32>
      %216 = vector.shape_cast %215 : vector<1xf32> to vector<1x1xf32>
      %c0_99 = arith.constant 0 : index
      %c0_100 = arith.constant 0 : index
      %c0_101 = arith.constant 0 : index
      %217 = vector.load %arg20[%c0_99, %c0_100, %c0_101] : memref<1x1x1xf32, #tpu.memory_space<vmem>>, vector<1x1x1xf32>
      %218 = vector.shape_cast %217 : vector<1x1x1xf32> to vector<1x1xf32>
      %219 = vector.shape_cast %216 : vector<1x1xf32> to vector<1x1x1xf32>
      tpu.vector_store %arg20[%c0_99, %c0_100, %c0_101], %219 {strides = array<i32>} : memref<1x1x1xf32, #tpu.memory_space<vmem>>, vector<1x1x1xf32>,
    } else {
    }
    return
  }
  func.func @transform_0(%arg0: i32, %arg1: i32) -> (i32, i32, i32) {
    %c0_i32 = arith.constant 0 : i32
    %c0_i32_0 = arith.constant 0 : i32
    %c0_i32_1 = arith.constant 0 : i32
    return %arg0, %c0_i32, %c0_i32_0 : i32, i32, i32
  }
  func.func @transform_1(%arg0: i32, %arg1: i32) -> (i32, i32, i32) {
    %c0_i32 = arith.constant 0 : i32
    %c0_i32_0 = arith.constant 0 : i32
    %c0_i32_1 = arith.constant 0 : i32
    return %arg0, %c0_i32, %c0_i32_0 : i32, i32, i32
  }
  func.func @transform_2(%arg0: i32, %arg1: i32) -> (i32, i32, i32) {
    %c0_i32 = arith.constant 0 : i32
    %c0_i32_0 = arith.constant 0 : i32
    %c0_i32_1 = arith.constant 0 : i32
    return %arg0, %c0_i32, %c0_i32_0 : i32, i32, i32
  }
  func.func @transform_3(%arg0: i32, %arg1: i32) -> (i32, i32, i32) {
    %c0_i32 = arith.constant 0 : i32
    %c0_i32_0 = arith.constant 0 : i32
    %c0_i32_1 = arith.constant 0 : i32
    return %arg1, %c0_i32, %c0_i32_0 : i32, i32, i32
  }
  func.func @transform_4(%arg0: i32, %arg1: i32) -> (i32, i32, i32) {
    %c0_i32 = arith.constant 0 : i32
    %c0_i32_0 = arith.constant 0 : i32
    %c0_i32_1 = arith.constant 0 : i32
    return %arg1, %c0_i32, %c0_i32_0 : i32, i32, i32
  }
  func.func @transform_5(%arg0: i32, %arg1: i32) -> (i32, i32, i32) {
    %c0_i32 = arith.constant 0 : i32
    %c0_i32_0 = arith.constant 0 : i32
    %c0_i32_1 = arith.constant 0 : i32
    return %arg1, %c0_i32, %c0_i32_0 : i32, i32, i32
  }
  func.func @transform_6(%arg0: i32, %arg1: i32) -> (i32, i32, i32) {
    %c0_i32 = arith.constant 0 : i32
    %c0_i32_0 = arith.constant 0 : i32
    %c0_i32_1 = arith.constant 0 : i32
    return %arg1, %c0_i32, %c0_i32_0 : i32, i32, i32
  }
  func.func @transform_7(%arg0: i32, %arg1: i32) -> (i32, i32, i32) {
    %c0_i32 = arith.constant 0 : i32
    %c0_i32_0 = arith.constant 0 : i32
    %c0_i32_1 = arith.constant 0 : i32
    return %arg1, %c0_i32, %c0_i32_0 : i32, i32, i32
  }
  func.func @transform_8(%arg0: i32, %arg1: i32) -> (i32, i32, i32) {
    %c0_i32 = arith.constant 0 : i32
    %c0_i32_0 = arith.constant 0 : i32
    %c0_i32_1 = arith.constant 0 : i32
    return %arg1, %c0_i32, %c0_i32_0 : i32, i32, i32
  }
  func.func @transform_9(%arg0: i32, %arg1: i32) -> (i32, i32, i32) {
    %c0_i32 = arith.constant 0 : i32
    %c0_i32_0 = arith.constant 0 : i32
    %c0_i32_1 = arith.constant 0 : i32
    return %arg1, %c0_i32, %c0_i32_0 : i32, i32, i32
  }
  func.func @transform_10(%arg0: i32, %arg1: i32) -> (i32, i32, i32) {
    %c0_i32 = arith.constant 0 : i32
    %c0_i32_0 = arith.constant 0 : i32
    %c0_i32_1 = arith.constant 0 : i32
    return %arg1, %c0_i32, %c0_i32_0 : i32, i32, i32
  }
  func.func @transform_11(%arg0: i32, %arg1: i32) -> (i32, i32, i32) {
    %c0_i32 = arith.constant 0 : i32
    %c0_i32_0 = arith.constant 0 : i32
    %c0_i32_1 = arith.constant 0 : i32
    return %arg1, %c0_i32, %c0_i32_0 : i32, i32, i32
  }
  func.func @transform_12(%arg0: i32, %arg1: i32) -> (i32, i32, i32) {
    %c0_i32 = arith.constant 0 : i32
    %c0_i32_0 = arith.constant 0 : i32
    %c0_i32_1 = arith.constant 0 : i32
    return %arg1, %c0_i32, %c0_i32_0 : i32, i32, i32
  }
  func.func @transform_13(%arg0: i32, %arg1: i32) -> (i32, i32) {
    %c0_i32 = arith.constant 0 : i32
    %c0_i32_0 = arith.constant 0 : i32
    %c0_i32_1 = arith.constant 0 : i32
    return %c0_i32, %c0_i32_0 : i32, i32
  }
  func.func @transform_14(%arg0: i32, %arg1: i32) -> (i32, i32) {
    %c0_i32 = arith.constant 0 : i32
    %c0_i32_0 = arith.constant 0 : i32
    %c0_i32_1 = arith.constant 0 : i32
    return %c0_i32, %c0_i32_0 : i32, i32
  }
  func.func @transform_15(%arg0: i32, %arg1: i32) -> (i32, i32) {
    %c0_i32 = arith.constant 0 : i32
    %c0_i32_0 = arith.constant 0 : i32
    %c0_i32_1 = arith.constant 0 : i32
    return %c0_i32, %c0_i32_0 : i32, i32
  }
  func.func @transform_16(%arg0: i32, %arg1: i32) -> (i32, i32, i32) {
    %c0_i32 = arith.constant 0 : i32
    %c0_i32_0 = arith.constant 0 : i32
    %c0_i32_1 = arith.constant 0 : i32
    return %arg0, %c0_i32, %c0_i32_0 : i32, i32, i32
  }
  func.func @transform_17(%arg0: i32, %arg1: i32) -> (i32, i32, i32) {
    %c0_i32 = arith.constant 0 : i32
    %c0_i32_0 = arith.constant 0 : i32
    %c0_i32_1 = arith.constant 0 : i32
    return %arg0, %c0_i32, %c0_i32_0 : i32, i32, i32
  }
  func.func @transform_18(%arg0: i32, %arg1: i32) -> (i32, i32, i32) {
    %c0_i32 = arith.constant 0 : i32
    %c0_i32_0 = arith.constant 0 : i32
    %c0_i32_1 = arith.constant 0 : i32
    return %arg0, %c0_i32, %c0_i32_0 : i32, i32, i32
  }
}

</mosaic_0001>

<llo_original>
// kernel: tpu_custom_call.1
$region0: #{tpu_custom_call.1}
  #allocation0 [shape = 'u32[]', space=smem, size = 0x4, offset = 0x4, fixed_abs, tag = 'smem constant byte address 0x4 - core index']
  #allocation1 [shape = 'u32[72,128]{1,0:T(1,128)}', space=vmem, size = 0x9000, scoped, tag = 'internal scratch']
  #allocation2 [shape = 'f32[16,256]{1,0:T(8,128)}', space=vmem, size = 0x4000, scoped, tag = 'scratch operand']
  %s0 = inlined_call_operand.hbm [shape: f32[2,16,256], index: 0, kind: input, shape index: {}]
  %s1 = inlined_call_operand.vmem [shape: f32[2,1,16], index: 1, kind: input, shape index: {}]
  %s2 = inlined_call_operand.vmem [shape: s32[2,16,1], index: 2, kind: input, shape index: {}]
  %s3 = inlined_call_operand.hbm [shape: bf16[2,256,256], index: 3, kind: input, shape index: {}]
  %s4 = inlined_call_operand.hbm [shape: bf16[2,256,256], index: 4, kind: input, shape index: {}]
  %s5 = inlined_call_operand.hbm [shape: bf16[2,256,256], index: 5, kind: input, shape index: {}]
  %s6 = inlined_call_operand.hbm [shape: bf16[2,256,256], index: 6, kind: input, shape index: {}]
  %s7 = inlined_call_operand.vmem [shape: f32[2,1,256], index: 7, kind: input, shape index: {}]
  %s8 = inlined_call_operand.vmem [shape: f32[2,1,256], index: 8, kind: input, shape index: {}]
  %s9 = inlined_call_operand.vmem [shape: f32[2,1,256], index: 9, kind: input, shape index: {}]
  %s10 = inlined_call_operand.vmem [shape: f32[2,1,256], index: 10, kind: input, shape index: {}]
  %s11 = inlined_call_operand.hbm [shape: bf16[2,256,512], index: 11, kind: input, shape index: {}]
  %s12 = inlined_call_operand.hbm [shape: bf16[2,512,256], index: 12, kind: input, shape index: {}]
  %s13 = inlined_call_operand.vmem [shape: f32[1,256], index: 13, kind: input, shape index: {}]
  %s14 = inlined_call_operand.vmem [shape: f32[1,256], index: 14, kind: input, shape index: {}]
  %s15 = inlined_call_operand.hbm [shape: bf16[256,256], index: 15, kind: input, shape index: {}]
  %s16 = inlined_call_operand.hbm [shape: f32[2,16,256], index: 16, kind: output, shape index: {0}]
  %s17 = inlined_call_operand.vmem [shape: f32[2,1,1], index: 17, kind: output, shape index: {1}]
  %s18 = inlined_call_operand.vmem [shape: f32[2,1,1], index: 18, kind: output, shape index: {2}]
  %19 = xla_tuple %s16, %s17, %s18
  %s20 = sld [smem:[#allocation0]]
  $region153: #{tpu_custom_call.1} parent=0
    _
  %s22 = ssub.s32 1, %s20
  %s23 = scalar_select 0, %s22, %s20
  $region1: #{tpu_custom_call.1} parent=0
    #allocation3 [shape = 'u8[32768]{0}', space=vmem, size = 0x8000, scoped, tag = 'input window, operand 0']
    #allocation4 [shape = 's32[2]{0}', space=sflag, size = 0x8, scoped, tag = 'scoped memory for tpu_custom_call.1']
    #allocation5 [shape = 's32[2]{0}', space=sflag, size = 0x8, scoped, tag = 'scoped memory for tpu_custom_call.1']
    #allocation6 [shape = 'u8[262144]{0}', space=vmem, size = 0x40000, scoped, tag = 'input window, operand 3']
    #allocation7 [shape = 's32[2]{0}', space=sflag, size = 0x8, scoped, tag = 'scoped memory for tpu_custom_call.1']
    #allocation8 [shape = 'u8[262144]{0}', space=vmem, size = 0x40000, scoped, tag = 'input window, operand 4']
    #allocation9 [shape = 'u8[262144]{0}', space=vmem, size = 0x40000, scoped, tag = 'input window, operand 5']
    #allocation10 [shape = 's32[2]{0}', space=sflag, size = 0x8, scoped, tag = 'scoped memory for tpu_custom_call.1']
    #allocation11 [shape = 'u8[262144]{0}', space=vmem, size = 0x40000, scoped, tag = 'input window, operand 6']
    #allocation12 [shape = 'u8[524288]{0}', space=vmem, size = 0x80000, scoped, tag = 'input window, operand 11']
    #allocation13 [shape = 's32[2]{0}', space=sflag, size = 0x8, scoped, tag = 'scoped memory for tpu_custom_call.1']
    #allocation14 [shape = 'u8[524288]{0}', space=vmem, size = 0x80000, scoped, tag = 'input window, operand 12']
    #allocation15 [shape = 'u8[131072]{0}', space=vmem, size = 0x20000, scoped, tag = 'input window, operand 15, single buffered']
    #allocation16 [shape = 's32[1]{0}', space=sflag, size = 0x4, scoped, tag = 'scoped memory for tpu_custom_call.1']
    #allocation17 [shape = 'u8[32768]{0}', space=vmem, size = 0x8000, scoped, tag = 'output window, operand 0']
    %24 = vsyncpa [#allocation4], 0
    %s25 = scalar_lea.sflag [#allocation4], 1
    %26 = vsyncpa %s25, 0
    %27 = vsyncpa [#allocation7], 0
    %s28 = scalar_lea.sflag [#allocation7], 1
    %29 = vsyncpa %s28, 0
    %30 = vsyncpa [#allocation10], 0
    %s31 = scalar_lea.sflag [#allocation10], 1
    %32 = vsyncpa %s31, 0
    %33 = vsyncpa [#allocation13], 0
    %s34 = scalar_lea.sflag [#allocation13], 1
    %35 = vsyncpa %s34, 0
    %36 = vsyncpa [#allocation16], 0
    %37 = vsyncpa [#allocation5], 0
    %s38 = scalar_lea.sflag [#allocation5], 1
    %39 = vsyncpa %s38, 0
    loop: start=0, step=1, limit=6
    $region2: #{tpu_custom_call.1} parent=1 // loop_pre_header
      _
    $region3: #{tpu_custom_call.1} parent=1 // loop_header
      %s41 = sphi 0, %s45
      %p42 = scmp.ge.s32.totalorder %s41, 6
      %s48 = sphi 0, %s60
      %s49 = sphi 0, %s56
      %s50 = sphi 0, %s48
      %s51 = sphi 0, %s49
      %s52 = sphi 0, %s50
      %s53 = sphi 0, %s51
      %s63 = sphi 0, %s65
      %s66 = sphi 0, %s63
      %s67 = sphi 0, %s66
      %s83 = sphi 0, %s67
      %s89 = sphi 0, %s91
      %s92 = sphi 0, %s89
      %s93 = sphi 0, %s92
      %s109 = sphi 0, %s93
      %s115 = sphi 0, %s117
      %s118 = sphi 0, %s115
      %s119 = sphi 0, %s118
      %s135 = sphi 0, %s119
      %s141 = sphi 0, %s143
      %s144 = sphi 0, %s141
      %s145 = sphi 0, %s144
      %s161 = sphi 0, %s145
      %s167 = sphi 0, %s169
      %s170 = sphi 0, %s167
      %s171 = sphi 0, %s170
      %s187 = sphi 0, %s171
      %s193 = sphi 0, %s195
      %s196 = sphi 0, %s193
      %s197 = sphi 0, %s196
      %s213 = sphi 0, %s197
      %s219 = sphi 0, %s221
      %s222 = sphi 0, %s219
      %s223 = sphi 0, %s222
      %s239 = sphi 0, %s223
      %s245 = sphi 0, %s247
      %s248 = sphi 0, %s245
      %s249 = sphi 0, %s248
      %s265 = sphi 0, %s249
      %s271 = sphi 0, %s273
      %s274 = sphi 0, %s271
      %s275 = sphi 0, %s274
      %s291 = sphi 0, %s275
      %s297 = sphi 0, %s299
      %s300 = sphi 0, %s297
      %s301 = sphi 0, %s300
      %s317 = sphi 0, %s301
      %s323 = sphi 0, %s325
      %s326 = sphi 0, %s323
      %s327 = sphi 0, %s326
      %s343 = sphi 0, %s327
      %s349 = sphi 0, %s351
      %s352 = sphi 0, %s349
      %s353 = sphi 0, %s352
      %s369 = sphi 0, %s353
      %s375 = sphi 0, %s377
      %s378 = sphi 0, %s375
      %s379 = sphi 0, %s378
      %s395 = sphi 0, %s379
      %s399 = sphi 0, %s399
      %s401 = sphi 0, %s399
      %s402 = sphi 0, %s401
      %s416 = sphi 0, %s402
      %s420 = sphi 0, %s420
      %s422 = sphi 0, %s420
      %s423 = sphi 0, %s422
      %s437 = sphi 0, %s423
      %s441 = sphi 0, %s441
      %s443 = sphi 0, %s441
      %s444 = sphi 0, %s443
      %s458 = sphi 0, %s444
      %s464 = sphi 0, %s466
      %s467 = sphi 0, %s464
      %s468 = sphi 0, %s467
      %s484 = sphi 0, %s468
      %s490 = sphi 0, %s492
      %s493 = sphi 0, %s490
      %s494 = sphi 0, %s493
      %s510 = sphi 0, %s494
      %s516 = sphi 0, %s518
      %s519 = sphi 0, %s516
      %s520 = sphi 0, %s519
      %s536 = sphi 0, %s520
    $region4: #{tpu_custom_call.1} parent=1 // loop_header_branch
      %44 = sbr.rel (%p42) target = $region8
    $region5: #{tpu_custom_call.1} parent=1 // loop_body
      %s46 = ssub.s32 %s41, 1
      %s47 = ssub.s32 %s41, 2
      %s54 = sadd.s32 1, %s49
      %p55 = scmp.ge.s32.totalorder %s54, 2
      %s56 = scalar_select %p55, 0, %s54
      %s57 = sadd.s32 1, %s48
      %s58 = scalar_select %p55, %s57, %s48
      %p59 = scmp.ge.s32.totalorder %s58, 2
      %s60 = scalar_select %p59, 0, %s58
      %s61 = ssub.s32 %s48, %s60
      %p62 = scmp.eq.s32.totalorder %s61, 0
      %s64 = sadd.s32 %s63, 1
      %s65 = scalar_select %p62, %s63, %s64
      %p68 = pneg %p62
      %p69 = scmp.eq.s32.totalorder %s41, 3
      %p70 = por %p68, %p69
      %p71 = scmp.ne.s32.totalorder %s63, %s66
      %p72 = scmp.eq.s32.totalorder %s41, 0
      %p73 = por %p71, %p72
      %p74 = scmp.ne.s32.totalorder %s63, %s66
      %p75 = scmp.eq.s32.totalorder %s46, 3
      %p76 = por %p74, %p75
      %p77 = scmp.ne.s32.totalorder %s66, %s67
      %p78 = scmp.eq.s32.totalorder %s46, 0
      %p79 = por %p77, %p78
      %p80 = scmp.ne.s32.totalorder %s66, %s67
      %p81 = scmp.eq.s32.totalorder %s47, 3
      %p82 = por %p80, %p81
      %p84 = scmp.ne.s32.totalorder %s67, %s83
      %p85 = scmp.eq.s32.totalorder %s47, 0
      %p86 = por %p84, %p85
      %s87 = ssub.s32 %s48, %s60
      %p88 = scmp.eq.s32.totalorder %s87, 0
      %s90 = sadd.s32 %s89, 1
      %s91 = scalar_select %p88, %s89, %s90
      %p94 = pneg %p88
      %p95 = scmp.eq.s32.totalorder %s41, 3
      %p96 = por %p94, %p95
      %p97 = scmp.ne.s32.totalorder %s89, %s92
      %p98 = scmp.eq.s32.totalorder %s41, 0
      %p99 = por %p97, %p98
      %p100 = scmp.ne.s32.totalorder %s89, %s92
      %p101 = scmp.eq.s32.totalorder %s46, 3
      %p102 = por %p100, %p101
      %p103 = scmp.ne.s32.totalorder %s92, %s93
      %p104 = scmp.eq.s32.totalorder %s46, 0
      %p105 = por %p103, %p104
      %p106 = scmp.ne.s32.totalorder %s92, %s93
      %p107 = scmp.eq.s32.totalorder %s47, 3
      %p108 = por %p106, %p107
      %p110 = scmp.ne.s32.totalorder %s93, %s109
      %p111 = scmp.eq.s32.totalorder %s47, 0
      %p112 = por %p110, %p111
      %s113 = ssub.s32 %s48, %s60
      %p114 = scmp.eq.s32.totalorder %s113, 0
      %s116 = sadd.s32 %s115, 1
      %s117 = scalar_select %p114, %s115, %s116
      %p120 = pneg %p114
      %p121 = scmp.eq.s32.totalorder %s41, 3
      %p122 = por %p120, %p121
      %p123 = scmp.ne.s32.totalorder %s115, %s118
      %p124 = scmp.eq.s32.totalorder %s41, 0
      %p125 = por %p123, %p124
      %p126 = scmp.ne.s32.totalorder %s115, %s118
      %p127 = scmp.eq.s32.totalorder %s46, 3
      %p128 = por %p126, %p127
      %p129 = scmp.ne.s32.totalorder %s118, %s119
      %p130 = scmp.eq.s32.totalorder %s46, 0
      %p131 = por %p129, %p130
      %p132 = scmp.ne.s32.totalorder %s118, %s119
      %p133 = scmp.eq.s32.totalorder %s47, 3
      %p134 = por %p132, %p133
      %p136 = scmp.ne.s32.totalorder %s119, %s135
      %p137 = scmp.eq.s32.totalorder %s47, 0
      %p138 = por %p136, %p137
      %s139 = ssub.s32 %s49, %s56
      %p140 = scmp.eq.s32.totalorder %s139, 0
      %s142 = sadd.s32 %s141, 1
      %s143 = scalar_select %p140, %s141, %s142
      %p146 = pneg %p140
      %p147 = scmp.eq.s32.totalorder %s41, 3
      %p148 = por %p146, %p147
      %p149 = scmp.ne.s32.totalorder %s141, %s144
      %p150 = scmp.eq.s32.totalorder %s41, 0
      %p151 = por %p149, %p150
      %p152 = scmp.ne.s32.totalorder %s141, %s144
      %p153 = scmp.eq.s32.totalorder %s46, 3
      %p154 = por %p152, %p153
      %p155 = scmp.ne.s32.totalorder %s144, %s145
      %p156 = scmp.eq.s32.totalorder %s46, 0
      %p157 = por %p155, %p156
      %p158 = scmp.ne.s32.totalorder %s144, %s145
      %p159 = scmp.eq.s32.totalorder %s47, 3
      %p160 = por %p158, %p159
      %p162 = scmp.ne.s32.totalorder %s145, %s161
      %p163 = scmp.eq.s32.totalorder %s47, 0
      %p164 = por %p162, %p163
      %s165 = ssub.s32 %s49, %s56
      %p166 = scmp.eq.s32.totalorder %s165, 0
      %s168 = sadd.s32 %s167, 1
      %s169 = scalar_select %p166, %s167, %s168
      %p172 = pneg %p166
      %p173 = scmp.eq.s32.totalorder %s41, 3
      %p174 = por %p172, %p173
      %p175 = scmp.ne.s32.totalorder %s167, %s170
      %p176 = scmp.eq.s32.totalorder %s41, 0
      %p177 = por %p175, %p176
      %p178 = scmp.ne.s32.totalorder %s167, %s170
      %p179 = scmp.eq.s32.totalorder %s46, 3
      %p180 = por %p178, %p179
      %p181 = scmp.ne.s32.totalorder %s170, %s171
      %p182 = scmp.eq.s32.totalorder %s46, 0
      %p183 = por %p181, %p182
      %p184 = scmp.ne.s32.totalorder %s170, %s171
      %p185 = scmp.eq.s32.totalorder %s47, 3
      %p186 = por %p184, %p185
      %p188 = scmp.ne.s32.totalorder %s171, %s187
      %p189 = scmp.eq.s32.totalorder %s47, 0
      %p190 = por %p188, %p189
      %s191 = ssub.s32 %s49, %s56
      %p192 = scmp.eq.s32.totalorder %s191, 0
      %s194 = sadd.s32 %s193, 1
      %s195 = scalar_select %p192, %s193, %s194
      %p198 = pneg %p192
      %p199 = scmp.eq.s32.totalorder %s41, 3
      %p200 = por %p198, %p199
      %p201 = scmp.ne.s32.totalorder %s193, %s196
      %p202 = scmp.eq.s32.totalorder %s41, 0
      %p203 = por %p201, %p202
      %p204 = scmp.ne.s32.totalorder %s193, %s196
      %p205 = scmp.eq.s32.totalorder %s46, 3
      %p206 = por %p204, %p205
      %p207 = scmp.ne.s32.totalorder %s196, %s197
      %p208 = scmp.eq.s32.totalorder %s46, 0
      %p209 = por %p207, %p208
      %p210 = scmp.ne.s32.totalorder %s196, %s197
      %p211 = scmp.eq.s32.totalorder %s47, 3
      %p212 = por %p210, %p211
      %p214 = scmp.ne.s32.totalorder %s197, %s213
      %p215 = scmp.eq.s32.totalorder %s47, 0
      %p216 = por %p214, %p215
      %s217 = ssub.s32 %s49, %s56
      %p218 = scmp.eq.s32.totalorder %s217, 0
      %s220 = sadd.s32 %s219, 1
      %s221 = scalar_select %p218, %s219, %s220
      %p224 = pneg %p218
      %p225 = scmp.eq.s32.totalorder %s41, 3
      %p226 = por %p224, %p225
      %p227 = scmp.ne.s32.totalorder %s219, %s222
      %p228 = scmp.eq.s32.totalorder %s41, 0
      %p229 = por %p227, %p228
      %p230 = scmp.ne.s32.totalorder %s219, %s222
      %p231 = scmp.eq.s32.totalorder %s46, 3
      %p232 = por %p230, %p231
      %p233 = scmp.ne.s32.totalorder %s222, %s223
      %p234 = scmp.eq.s32.totalorder %s46, 0
      %p235 = por %p233, %p234
      %p236 = scmp.ne.s32.totalorder %s222, %s223
      %p237 = scmp.eq.s32.totalorder %s47, 3
      %p238 = por %p236, %p237
      %p240 = scmp.ne.s32.totalorder %s223, %s239
      %p241 = scmp.eq.s32.totalorder %s47, 0
      %p242 = por %p240, %p241
      %s243 = ssub.s32 %s49, %s56
      %p244 = scmp.eq.s32.totalorder %s243, 0
      %s246 = sadd.s32 %s245, 1
      %s247 = scalar_select %p244, %s245, %s246
      %p250 = pneg %p244
      %p251 = scmp.eq.s32.totalorder %s41, 3
      %p252 = por %p250, %p251
      %p253 = scmp.ne.s32.totalorder %s245, %s248
      %p254 = scmp.eq.s32.totalorder %s41, 0
      %p255 = por %p253, %p254
      %p256 = scmp.ne.s32.totalorder %s245, %s248
      %p257 = scmp.eq.s32.totalorder %s46, 3
      %p258 = por %p256, %p257
      %p259 = scmp.ne.s32.totalorder %s248, %s249
      %p260 = scmp.eq.s32.totalorder %s46, 0
      %p261 = por %p259, %p260
      %p262 = scmp.ne.s32.totalorder %s248, %s249
      %p263 = scmp.eq.s32.totalorder %s47, 3
      %p264 = por %p262, %p263
      %p266 = scmp.ne.s32.totalorder %s249, %s265
      %p267 = scmp.eq.s32.totalorder %s47, 0
      %p268 = por %p266, %p267
      %s269 = ssub.s32 %s49, %s56
      %p270 = scmp.eq.s32.totalorder %s269, 0
      %s272 = sadd.s32 %s271, 1
      %s273 = scalar_select %p270, %s271, %s272
      %p276 = pneg %p270
      %p277 = scmp.eq.s32.totalorder %s41, 3
      %p278 = por %p276, %p277
      %p279 = scmp.ne.s32.totalorder %s271, %s274
      %p280 = scmp.eq.s32.totalorder %s41, 0
      %p281 = por %p279, %p280
      %p282 = scmp.ne.s32.totalorder %s271, %s274
      %p283 = scmp.eq.s32.totalorder %s46, 3
      %p284 = por %p282, %p283
      %p285 = scmp.ne.s32.totalorder %s274, %s275
      %p286 = scmp.eq.s32.totalorder %s46, 0
      %p287 = por %p285, %p286
      %p288 = scmp.ne.s32.totalorder %s274, %s275
      %p289 = scmp.eq.s32.totalorder %s47, 3
      %p290 = por %p288, %p289
      %p292 = scmp.ne.s32.totalorder %s275, %s291
      %p293 = scmp.eq.s32.totalorder %s47, 0
      %p294 = por %p292, %p293
      %s295 = ssub.s32 %s49, %s56
      %p296 = scmp.eq.s32.totalorder %s295, 0
      %s298 = sadd.s32 %s297, 1
      %s299 = scalar_select %p296, %s297, %s298
      %p302 = pneg %p296
      %p303 = scmp.eq.s32.totalorder %s41, 3
      %p304 = por %p302, %p303
      %p305 = scmp.ne.s32.totalorder %s297, %s300
      %p306 = scmp.eq.s32.totalorder %s41, 0
      %p307 = por %p305, %p306
      %p308 = scmp.ne.s32.totalorder %s297, %s300
      %p309 = scmp.eq.s32.totalorder %s46, 3
      %p310 = por %p308, %p309
      %p311 = scmp.ne.s32.totalorder %s300, %s301
      %p312 = scmp.eq.s32.totalorder %s46, 0
      %p313 = por %p311, %p312
      %p314 = scmp.ne.s32.totalorder %s300, %s301
      %p315 = scmp.eq.s32.totalorder %s47, 3
      %p316 = por %p314, %p315
      %p318 = scmp.ne.s32.totalorder %s301, %s317
      %p319 = scmp.eq.s32.totalorder %s47, 0
      %p320 = por %p318, %p319
      %s321 = ssub.s32 %s49, %s56
      %p322 = scmp.eq.s32.totalorder %s321, 0
      %s324 = sadd.s32 %s323, 1
      %s325 = scalar_select %p322, %s323, %s324
      %p328 = pneg %p322
      %p329 = scmp.eq.s32.totalorder %s41, 3
      %p330 = por %p328, %p329
      %p331 = scmp.ne.s32.totalorder %s323, %s326
      %p332 = scmp.eq.s32.totalorder %s41, 0
      %p333 = por %p331, %p332
      %p334 = scmp.ne.s32.totalorder %s323, %s326
      %p335 = scmp.eq.s32.totalorder %s46, 3
      %p336 = por %p334, %p335
      %p337 = scmp.ne.s32.totalorder %s326, %s327
      %p338 = scmp.eq.s32.totalorder %s46, 0
      %p339 = por %p337, %p338
      %p340 = scmp.ne.s32.totalorder %s326, %s327
      %p341 = scmp.eq.s32.totalorder %s47, 3
      %p342 = por %p340, %p341
      %p344 = scmp.ne.s32.totalorder %s327, %s343
      %p345 = scmp.eq.s32.totalorder %s47, 0
      %p346 = por %p344, %p345
      %s347 = ssub.s32 %s49, %s56
      %p348 = scmp.eq.s32.totalorder %s347, 0
      %s350 = sadd.s32 %s349, 1
      %s351 = scalar_select %p348, %s349, %s350
      %p354 = pneg %p348
      %p355 = scmp.eq.s32.totalorder %s41, 3
      %p356 = por %p354, %p355
      %p357 = scmp.ne.s32.totalorder %s349, %s352
      %p358 = scmp.eq.s32.totalorder %s41, 0
      %p359 = por %p357, %p358
      %p360 = scmp.ne.s32.totalorder %s349, %s352
      %p361 = scmp.eq.s32.totalorder %s46, 3
      %p362 = por %p360, %p361
      %p363 = scmp.ne.s32.totalorder %s352, %s353
      %p364 = scmp.eq.s32.totalorder %s46, 0
      %p365 = por %p363, %p364
      %p366 = scmp.ne.s32.totalorder %s352, %s353
      %p367 = scmp.eq.s32.totalorder %s47, 3
      %p368 = por %p366, %p367
      %p370 = scmp.ne.s32.totalorder %s353, %s369
      %p371 = scmp.eq.s32.totalorder %s47, 0
      %p372 = por %p370, %p371
      %s373 = ssub.s32 %s49, %s56
      %p374 = scmp.eq.s32.totalorder %s373, 0
      %s376 = sadd.s32 %s375, 1
      %s377 = scalar_select %p374, %s375, %s376
      %p380 = pneg %p374
      %p381 = scmp.eq.s32.totalorder %s41, 3
      %p382 = por %p380, %p381
      %p383 = scmp.ne.s32.totalorder %s375, %s378
      %p384 = scmp.eq.s32.totalorder %s41, 0
      %p385 = por %p383, %p384
      %p386 = scmp.ne.s32.totalorder %s375, %s378
      %p387 = scmp.eq.s32.totalorder %s46, 3
      %p388 = por %p386, %p387
      %p389 = scmp.ne.s32.totalorder %s378, %s379
      %p390 = scmp.eq.s32.totalorder %s46, 0
      %p391 = por %p389, %p390
      %p392 = scmp.ne.s32.totalorder %s378, %s379
      %p393 = scmp.eq.s32.totalorder %s47, 3
      %p394 = por %p392, %p393
      %p396 = scmp.ne.s32.totalorder %s379, %s395
      %p397 = scmp.eq.s32.totalorder %s47, 0
      %p398 = por %p396, %p397
      %s400 = sadd.s32 %s399, 1
      %p403 = scmp.eq.s32.totalorder %s41, 3
      %p404 = scmp.ne.s32.totalorder %s399, %s401
      %p405 = scmp.eq.s32.totalorder %s41, 0
      %p406 = por %p404, %p405
      %p407 = scmp.ne.s32.totalorder %s399, %s401
      %p408 = scmp.eq.s32.totalorder %s46, 3
      %p409 = por %p407, %p408
      %p410 = scmp.ne.s32.totalorder %s401, %s402
      %p411 = scmp.eq.s32.totalorder %s46, 0
      %p412 = por %p410, %p411
      %p413 = scmp.ne.s32.totalorder %s401, %s402
      %p414 = scmp.eq.s32.totalorder %s47, 3
      %p415 = por %p413, %p414
      %p417 = scmp.ne.s32.totalorder %s402, %s416
      %p418 = scmp.eq.s32.totalorder %s47, 0
      %p419 = por %p417, %p418
      %s421 = sadd.s32 %s420, 1
      %p424 = scmp.eq.s32.totalorder %s41, 3
      %p425 = scmp.ne.s32.totalorder %s420, %s422
      %p426 = scmp.eq.s32.totalorder %s41, 0
      %p427 = por %p425, %p426
      %p428 = scmp.ne.s32.totalorder %s420, %s422
      %p429 = scmp.eq.s32.totalorder %s46, 3
      %p430 = por %p428, %p429
      %p431 = scmp.ne.s32.totalorder %s422, %s423
      %p432 = scmp.eq.s32.totalorder %s46, 0
      %p433 = por %p431, %p432
      %p434 = scmp.ne.s32.totalorder %s422, %s423
      %p435 = scmp.eq.s32.totalorder %s47, 3
      %p436 = por %p434, %p435
      %p438 = scmp.ne.s32.totalorder %s423, %s437
      %p439 = scmp.eq.s32.totalorder %s47, 0
      %p440 = por %p438, %p439
      %s442 = sadd.s32 %s441, 1
      %p445 = scmp.eq.s32.totalorder %s41, 3
      %p446 = scmp.ne.s32.totalorder %s441, %s443
      %p447 = scmp.eq.s32.totalorder %s41, 0
      %p448 = por %p446, %p447
      %p449 = scmp.ne.s32.totalorder %s441, %s443
      %p450 = scmp.eq.s32.totalorder %s46, 3
      %p451 = por %p449, %p450
      %p452 = scmp.ne.s32.totalorder %s443, %s444
      %p453 = scmp.eq.s32.totalorder %s46, 0
      %p454 = por %p452, %p453
      %p455 = scmp.ne.s32.totalorder %s443, %s444
      %p456 = scmp.eq.s32.totalorder %s47, 3
      %p457 = por %p455, %p456
      %p459 = scmp.ne.s32.totalorder %s444, %s458
      %p460 = scmp.eq.s32.totalorder %s47, 0
      %p461 = por %p459, %p460
      %s462 = ssub.s32 %s48, %s60
      %p463 = scmp.eq.s32.totalorder %s462, 0
      %s465 = sadd.s32 %s464, 1
      %s466 = scalar_select %p463, %s464, %s465
      %p469 = pneg %p463
      %p470 = scmp.eq.s32.totalorder %s41, 3
      %p471 = por %p469, %p470
      %p472 = scmp.ne.s32.totalorder %s464, %s467
      %p473 = scmp.eq.s32.totalorder %s41, 0
      %p474 = por %p472, %p473
      %p475 = scmp.ne.s32.totalorder %s464, %s467
      %p476 = scmp.eq.s32.totalorder %s46, 3
      %p477 = por %p475, %p476
      %p478 = scmp.ne.s32.totalorder %s467, %s468
      %p479 = scmp.eq.s32.totalorder %s46, 0
      %p480 = por %p478, %p479
      %p481 = scmp.ne.s32.totalorder %s467, %s468
      %p482 = scmp.eq.s32.totalorder %s47, 3
      %p483 = por %p481, %p482
      %p485 = scmp.ne.s32.totalorder %s468, %s484
      %p486 = scmp.eq.s32.totalorder %s47, 0
      %p487 = por %p485, %p486
      %s488 = ssub.s32 %s48, %s60
      %p489 = scmp.eq.s32.totalorder %s488, 0
      %s491 = sadd.s32 %s490, 1
      %s492 = scalar_select %p489, %s490, %s491
      %p495 = pneg %p489
      %p496 = scmp.eq.s32.totalorder %s41, 3
      %p497 = por %p495, %p496
      %p498 = scmp.ne.s32.totalorder %s490, %s493
      %p499 = scmp.eq.s32.totalorder %s41, 0
      %p500 = por %p498, %p499
      %p501 = scmp.ne.s32.totalorder %s490, %s493
      %p502 = scmp.eq.s32.totalorder %s46, 3
      %p503 = por %p501, %p502
      %p504 = scmp.ne.s32.totalorder %s493, %s494
      %p505 = scmp.eq.s32.totalorder %s46, 0
      %p506 = por %p504, %p505
      %p507 = scmp.ne.s32.totalorder %s493, %s494
      %p508 = scmp.eq.s32.totalorder %s47, 3
      %p509 = por %p507, %p508
      %p511 = scmp.ne.s32.totalorder %s494, %s510
      %p512 = scmp.eq.s32.totalorder %s47, 0
      %p513 = por %p511, %p512
      %s514 = ssub.s32 %s48, %s60
      %p515 = scmp.eq.s32.totalorder %s514, 0
      %s517 = sadd.s32 %s516, 1
      %s518 = scalar_select %p515, %s516, %s517
      %p521 = pneg %p515
      %p522 = scmp.eq.s32.totalorder %s41, 3
      %p523 = por %p521, %p522
      %p524 = scmp.ne.s32.totalorder %s516, %s519
      %p525 = scmp.eq.s32.totalorder %s41, 0
      %p526 = por %p524, %p525
      %p527 = scmp.ne.s32.totalorder %s516, %s519
      %p528 = scmp.eq.s32.totalorder %s46, 3
      %p529 = por %p527, %p528
      %p530 = scmp.ne.s32.totalorder %s519, %s520
      %p531 = scmp.eq.s32.totalorder %s46, 0
      %p532 = por %p530, %p531
      %p533 = scmp.ne.s32.totalorder %s519, %s520
      %p534 = scmp.eq.s32.totalorder %s47, 3
      %p535 = por %p533, %p534
      %p537 = scmp.ne.s32.totalorder %s520, %s536
      %p538 = scmp.eq.s32.totalorder %s47, 0
      %p539 = por %p537, %p538
      %p540 = scmp.le.s32.totalorder 1, %s41
      %p541 = scmp.lt.s32.totalorder %s41, 5
      %p542 = pnand %p540, %p541
      %p543 = pneg %p542
      // Predicated region
      $region9: #{tpu_custom_call.1} parent=5 // pred_check
        _
      $region10: #{tpu_custom_call.1} parent=5 // pred_check_branch
        %545 = sbr.rel (%p542) target = $region12
      $region11: #{tpu_custom_call.1} parent=5 // pred_region
        %s546 = ssub.s32 %s41, 1
        // Predicated region
        $region13: #{tpu_custom_call.1} parent=11 // pred_check
          %p547 = pneg %p412
        $region14: #{tpu_custom_call.1} parent=11 // pred_check_branch
          %549 = sbr.rel (%p547) target = $region16
        $region15: #{tpu_custom_call.1} parent=11 // pred_region
          _
        $region16: #{tpu_custom_call.1} parent=11 // pred_fallthru
          _
        // Predicated region
        $region17: #{tpu_custom_call.1} parent=11 // pred_check
          %p550 = pneg %p433
        $region18: #{tpu_custom_call.1} parent=11 // pred_check_branch
          %552 = sbr.rel (%p550) target = $region20
        $region19: #{tpu_custom_call.1} parent=11 // pred_region
          _
        $region20: #{tpu_custom_call.1} parent=11 // pred_fallthru
          _
        // Predicated region
        $region21: #{tpu_custom_call.1} parent=11 // pred_check
          %p553 = pneg %p454
        $region22: #{tpu_custom_call.1} parent=11 // pred_check_branch
          %555 = sbr.rel (%p553) target = $region24
        $region23: #{tpu_custom_call.1} parent=11 // pred_region
          %557 = vsyncadd [#allocation16], 0
          %s558 = sshll.u32 %s15, 4
          %s559 = int_to_ptr.hbm [resolvable:$true] %s558
          %s560 = sshll.u32 [#allocation15], 4
          %s561 = int_to_ptr.vmem [resolvable:$true] %s560
          %566 = dma.hbm_to_vmem [thread:$0]  %s559, 4096, %s561, [#allocation16], 128, 128, 8
        $region24: #{tpu_custom_call.1} parent=11 // pred_fallthru
          _
      $region12: #{tpu_custom_call.1} parent=5 // pred_fallthru
        _
      %p567 = scmp.lt.s32.totalorder %s41, 4
      // Predicated region
      $region25: #{tpu_custom_call.1} parent=5 // pred_check
        %p568 = pneg %p567
      $region26: #{tpu_custom_call.1} parent=5 // pred_check_branch
        %570 = sbr.rel (%p568) target = $region28
      $region27: #{tpu_custom_call.1} parent=5 // pred_region
        // Predicated region
        $region29: #{tpu_custom_call.1} parent=27 // pred_check
          %p571 = pneg %p73
        $region30: #{tpu_custom_call.1} parent=27 // pred_check_branch
          %573 = sbr.rel (%p571) target = $region32
        $region31: #{tpu_custom_call.1} parent=27 // pred_region
          %s574 = sand.u32 %s63, 1
          %s575 = scalar_lea.sflag [#allocation4], %s574
          %s576 = sand.u32 %s63, 1
          %s577 = smul.addr %s576, 32
          %s578 = scalar_lea.vmem [#allocation3], %s577
          %580 = vsyncadd %s575, 0
          %s581 = smul.addr %s48, 4
          %s582 = smul.addr %s581, 8
          %s583 = scalar_lea.hbm %s0, %s582
          %s584 = sshll.u32 %s583, 4
          %s585 = int_to_ptr.hbm [resolvable:$true] %s584
          %s586 = sshll.u32 %s578, 4
          %s587 = int_to_ptr.vmem [resolvable:$true] %s586
          %592 = dma.hbm_to_vmem [thread:$0]  %s585, 512, %s587, %s575, 256, 256, 16
        $region32: #{tpu_custom_call.1} parent=27 // pred_fallthru
          _
        // Predicated region
        $region33: #{tpu_custom_call.1} parent=27 // pred_check
          %p593 = pneg %p99
        $region34: #{tpu_custom_call.1} parent=27 // pred_check_branch
          %595 = sbr.rel (%p593) target = $region36
        $region35: #{tpu_custom_call.1} parent=27 // pred_region
          %p596 = scmp.lt.s32.totalorder %s48, 1
          %s597 = scalar_select %p596, %s48, 1
          %s598 = scalar_lea.vmem %s1, %s597
        $region36: #{tpu_custom_call.1} parent=27 // pred_fallthru
          _
        // Predicated region
        $region37: #{tpu_custom_call.1} parent=27 // pred_check
          %p599 = pneg %p125
        $region38: #{tpu_custom_call.1} parent=27 // pred_check_branch
          %601 = sbr.rel (%p599) target = $region40
        $region39: #{tpu_custom_call.1} parent=27 // pred_region
          %p602 = scmp.lt.s32.totalorder %s48, 1
          %s603 = scalar_select %p602, %s48, 1
          %s604 = smul.addr %s603, 2
          %s605 = smul.addr %s604, 8
          %s606 = scalar_lea.vmem %s2, %s605
        $region40: #{tpu_custom_call.1} parent=27 // pred_fallthru
          _
        // Predicated region
        $region41: #{tpu_custom_call.1} parent=27 // pred_check
          %p607 = pneg %p151
        $region42: #{tpu_custom_call.1} parent=27 // pred_check_branch
          %609 = sbr.rel (%p607) target = $region44
        $region43: #{tpu_custom_call.1} parent=27 // pred_region
          %s610 = sand.u32 %s41, 1
          %s611 = scalar_lea.sflag [#allocation7], %s610
          %s612 = sand.u32 %s141, 1
          %s613 = smul.addr %s612, 256
          %s614 = scalar_lea.vmem [#allocation6], %s613
          %616 = vsyncadd %s611, 0
          %s617 = smul.addr %s49, 64
          %s618 = smul.addr %s617, 4
          %s619 = scalar_lea.hbm %s3, %s618
          %s620 = sshll.u32 %s619, 4
          %s621 = int_to_ptr.hbm [resolvable:$true] %s620
          %s622 = sshll.u32 %s614, 4
          %s623 = int_to_ptr.vmem [resolvable:$true] %s622
          %628 = dma.hbm_to_vmem [thread:$0]  %s621, 4096, %s623, %s611, 128, 128, 8
        $region44: #{tpu_custom_call.1} parent=27 // pred_fallthru
          _
        // Predicated region
        $region45: #{tpu_custom_call.1} parent=27 // pred_check
          %p629 = pneg %p177
        $region46: #{tpu_custom_call.1} parent=27 // pred_check_branch
          %631 = sbr.rel (%p629) target = $region48
        $region47: #{tpu_custom_call.1} parent=27 // pred_region
          %s632 = sand.u32 %s41, 1
          %s633 = scalar_lea.sflag [#allocation7], %s632
          %s634 = sand.u32 %s167, 1
          %s635 = smul.addr %s634, 256
          %s636 = scalar_lea.vmem [#allocation8], %s635
          %638 = vsyncadd %s633, 0
          %s639 = smul.addr %s49, 64
          %s640 = smul.addr %s639, 4
          %s641 = scalar_lea.hbm %s4, %s640
          %s642 = sshll.u32 %s641, 4
          %s643 = int_to_ptr.hbm [resolvable:$true] %s642
          %s644 = sshll.u32 %s636, 4
          %s645 = int_to_ptr.vmem [resolvable:$true] %s644
          %650 = dma.hbm_to_vmem [thread:$0]  %s643, 4096, %s645, %s633, 128, 128, 8
        $region48: #{tpu_custom_call.1} parent=27 // pred_fallthru
          _
        // Predicated region
        $region49: #{tpu_custom_call.1} parent=27 // pred_check
          %p651 = pneg %p203
        $region50: #{tpu_custom_call.1} parent=27 // pred_check_branch
          %653 = sbr.rel (%p651) target = $region52
        $region51: #{tpu_custom_call.1} parent=27 // pred_region
          %s654 = sand.u32 %s41, 1
          %s655 = scalar_lea.sflag [#allocation10], %s654
          %s656 = sand.u32 %s193, 1
          %s657 = smul.addr %s656, 256
          %s658 = scalar_lea.vmem [#allocation9], %s657
          %660 = vsyncadd %s655, 0
          %s661 = smul.addr %s49, 64
          %s662 = smul.addr %s661, 4
          %s663 = scalar_lea.hbm %s5, %s662
          %s664 = sshll.u32 %s663, 4
          %s665 = int_to_ptr.hbm [resolvable:$true] %s664
          %s666 = sshll.u32 %s658, 4
          %s667 = int_to_ptr.vmem [resolvable:$true] %s666
          %672 = dma.hbm_to_vmem [thread:$0]  %s665, 4096, %s667, %s655, 128, 128, 8
        $region52: #{tpu_custom_call.1} parent=27 // pred_fallthru
          _
        // Predicated region
        $region53: #{tpu_custom_call.1} parent=27 // pred_check
          %p673 = pneg %p229
        $region54: #{tpu_custom_call.1} parent=27 // pred_check_branch
          %675 = sbr.rel (%p673) target = $region56
        $region55: #{tpu_custom_call.1} parent=27 // pred_region
          %s676 = sand.u32 %s41, 1
          %s677 = scalar_lea.sflag [#allocation10], %s676
          %s678 = sand.u32 %s219, 1
          %s679 = smul.addr %s678, 256
          %s680 = scalar_lea.vmem [#allocation11], %s679
          %682 = vsyncadd %s677, 0
          %s683 = smul.addr %s49, 64
          %s684 = smul.addr %s683, 4
          %s685 = scalar_lea.hbm %s6, %s684
          %s686 = sshll.u32 %s685, 4
          %s687 = int_to_ptr.hbm [resolvable:$true] %s686
          %s688 = sshll.u32 %s680, 4
          %s689 = int_to_ptr.vmem [resolvable:$true] %s688
          %694 = dma.hbm_to_vmem [thread:$0]  %s687, 4096, %s689, %s677, 128, 128, 8
        $region56: #{tpu_custom_call.1} parent=27 // pred_fallthru
          _
        // Predicated region
        $region57: #{tpu_custom_call.1} parent=27 // pred_check
          %p695 = pneg %p255
        $region58: #{tpu_custom_call.1} parent=27 // pred_check_branch
          %697 = sbr.rel (%p695) target = $region60
        $region59: #{tpu_custom_call.1} parent=27 // pred_region
          %p698 = scmp.lt.s32.totalorder %s49, 1
          %s699 = scalar_select %p698, %s49, 1
          %s700 = smul.addr %s699, 2
          %s701 = scalar_lea.vmem %s7, %s700
        $region60: #{tpu_custom_call.1} parent=27 // pred_fallthru
          _
        // Predicated region
        $region61: #{tpu_custom_call.1} parent=27 // pred_check
          %p702 = pneg %p281
        $region62: #{tpu_custom_call.1} parent=27 // pred_check_branch
          %704 = sbr.rel (%p702) target = $region64
        $region63: #{tpu_custom_call.1} parent=27 // pred_region
          %p705 = scmp.lt.s32.totalorder %s49, 1
          %s706 = scalar_select %p705, %s49, 1
          %s707 = smul.addr %s706, 2
          %s708 = scalar_lea.vmem %s8, %s707
        $region64: #{tpu_custom_call.1} parent=27 // pred_fallthru
          _
        // Predicated region
        $region65: #{tpu_custom_call.1} parent=27 // pred_check
          %p709 = pneg %p307
        $region66: #{tpu_custom_call.1} parent=27 // pred_check_branch
          %711 = sbr.rel (%p709) target = $region68
        $region67: #{tpu_custom_call.1} parent=27 // pred_region
          %p712 = scmp.lt.s32.totalorder %s49, 1
          %s713 = scalar_select %p712, %s49, 1
          %s714 = smul.addr %s713, 2
          %s715 = scalar_lea.vmem %s9, %s714
        $region68: #{tpu_custom_call.1} parent=27 // pred_fallthru
          _
        // Predicated region
        $region69: #{tpu_custom_call.1} parent=27 // pred_check
          %p716 = pneg %p333
        $region70: #{tpu_custom_call.1} parent=27 // pred_check_branch
          %718 = sbr.rel (%p716) target = $region72
        $region71: #{tpu_custom_call.1} parent=27 // pred_region
          %p719 = scmp.lt.s32.totalorder %s49, 1
          %s720 = scalar_select %p719, %s49, 1
          %s721 = smul.addr %s720, 2
          %s722 = scalar_lea.vmem %s10, %s721
        $region72: #{tpu_custom_call.1} parent=27 // pred_fallthru
          _
        // Predicated region
        $region73: #{tpu_custom_call.1} parent=27 // pred_check
          %p723 = pneg %p359
        $region74: #{tpu_custom_call.1} parent=27 // pred_check_branch
          %725 = sbr.rel (%p723) target = $region76
        $region75: #{tpu_custom_call.1} parent=27 // pred_region
          %s726 = sand.u32 %s41, 1
          %s727 = scalar_lea.sflag [#allocation13], %s726
          %s728 = sand.u32 %s349, 1
          %s729 = smul.addr %s728, 512
          %s730 = scalar_lea.vmem [#allocation12], %s729
          %732 = vsyncadd %s727, 0
          %s733 = smul.addr %s49, 128
          %s734 = smul.addr %s733, 4
          %s735 = scalar_lea.hbm %s11, %s734
          %s736 = sshll.u32 %s735, 4
          %s737 = int_to_ptr.hbm [resolvable:$true] %s736
          %s738 = sshll.u32 %s730, 4
          %s739 = int_to_ptr.vmem [resolvable:$true] %s738
          %744 = dma.hbm_to_vmem [thread:$0]  %s737, 8192, %s739, %s727, 256, 256, 16
        $region76: #{tpu_custom_call.1} parent=27 // pred_fallthru
          _
        // Predicated region
        $region77: #{tpu_custom_call.1} parent=27 // pred_check
          %p745 = pneg %p385
        $region78: #{tpu_custom_call.1} parent=27 // pred_check_branch
          %747 = sbr.rel (%p745) target = $region80
        $region79: #{tpu_custom_call.1} parent=27 // pred_region
          %s748 = sand.u32 %s41, 1
          %s749 = scalar_lea.sflag [#allocation13], %s748
          %s750 = sand.u32 %s375, 1
          %s751 = smul.addr %s750, 512
          %s752 = scalar_lea.vmem [#allocation14], %s751
          %754 = vsyncadd %s749, 0
          %s755 = smul.addr %s49, 128
          %s756 = smul.addr %s755, 4
          %s757 = scalar_lea.hbm %s12, %s756
          %s758 = sshll.u32 %s757, 4
          %s759 = int_to_ptr.hbm [resolvable:$true] %s758
          %s760 = sshll.u32 %s752, 4
          %s761 = int_to_ptr.vmem [resolvable:$true] %s760
          %766 = dma.hbm_to_vmem [thread:$0]  %s759, 8192, %s761, %s749, 128, 128, 8
        $region80: #{tpu_custom_call.1} parent=27 // pred_fallthru
          _
      $region28: #{tpu_custom_call.1} parent=5 // pred_fallthru
        _
      %p767 = scmp.le.s32.totalorder 1, %s41
      %p768 = scmp.lt.s32.totalorder %s41, 5
      %p769 = pnand %p767, %p768
      %p770 = pneg %p769
      // Predicated region
      $region81: #{tpu_custom_call.1} parent=5 // pred_check
        _
      $region82: #{tpu_custom_call.1} parent=5 // pred_check_branch
        %772 = sbr.rel (%p769) target = $region84
      $region83: #{tpu_custom_call.1} parent=5 // pred_region
        %s773 = ssub.s32 %s41, 1
        %s774 = sand.u32 %s66, 1
        %s775 = scalar_lea.sflag [#allocation4], %s774
        %s776 = sand.u32 %s66, 1
        %s777 = smul.addr %s776, 32
        %s778 = scalar_lea.vmem [#allocation3], %s777
        // Predicated region
        $region85: #{tpu_custom_call.1} parent=83 // pred_check
          %p779 = pneg %p79
        $region86: #{tpu_custom_call.1} parent=83 // pred_check_branch
          %781 = sbr.rel (%p779) target = $region88
        $region87: #{tpu_custom_call.1} parent=83 // pred_region
          %783 = dma.done %s775, 512
        $region88: #{tpu_custom_call.1} parent=83 // pred_fallthru
          _
        %s784 = sand.u32 %s46, 1
        %s785 = scalar_lea.sflag [#allocation7], %s784
        %s786 = sand.u32 %s144, 1
        %s787 = smul.addr %s786, 256
        %s788 = scalar_lea.vmem [#allocation6], %s787
        // Predicated region
        $region89: #{tpu_custom_call.1} parent=83 // pred_check
          %p789 = pneg %p157
        $region90: #{tpu_custom_call.1} parent=83 // pred_check_branch
          %791 = sbr.rel (%p789) target = $region92
        $region91: #{tpu_custom_call.1} parent=83 // pred_region
          %793 = dma.done %s785, 4096
        $region92: #{tpu_custom_call.1} parent=83 // pred_fallthru
          _
        %s794 = sand.u32 %s46, 1
        %s795 = scalar_lea.sflag [#allocation7], %s794
        %s796 = sand.u32 %s170, 1
        %s797 = smul.addr %s796, 256
        %s798 = scalar_lea.vmem [#allocation8], %s797
        // Predicated region
        $region93: #{tpu_custom_call.1} parent=83 // pred_check
          %p799 = pneg %p183
        $region94: #{tpu_custom_call.1} parent=83 // pred_check_branch
          %801 = sbr.rel (%p799) target = $region96
        $region95: #{tpu_custom_call.1} parent=83 // pred_region
          %803 = dma.done %s795, 4096
        $region96: #{tpu_custom_call.1} parent=83 // pred_fallthru
          _
        %s804 = sand.u32 %s46, 1
        %s805 = scalar_lea.sflag [#allocation10], %s804
        %s806 = sand.u32 %s196, 1
        %s807 = smul.addr %s806, 256
        %s808 = scalar_lea.vmem [#allocation9], %s807
        // Predicated region
        $region97: #{tpu_custom_call.1} parent=83 // pred_check
          %p809 = pneg %p209
        $region98: #{tpu_custom_call.1} parent=83 // pred_check_branch
          %811 = sbr.rel (%p809) target = $region100
        $region99: #{tpu_custom_call.1} parent=83 // pred_region
          %813 = dma.done %s805, 4096
        $region100: #{tpu_custom_call.1} parent=83 // pred_fallthru
          _
        %s814 = sand.u32 %s46, 1
        %s815 = scalar_lea.sflag [#allocation10], %s814
        %s816 = sand.u32 %s222, 1
        %s817 = smul.addr %s816, 256
        %s818 = scalar_lea.vmem [#allocation11], %s817
        // Predicated region
        $region101: #{tpu_custom_call.1} parent=83 // pred_check
          %p819 = pneg %p235
        $region102: #{tpu_custom_call.1} parent=83 // pred_check_branch
          %821 = sbr.rel (%p819) target = $region104
        $region103: #{tpu_custom_call.1} parent=83 // pred_region
          %823 = dma.done %s815, 4096
        $region104: #{tpu_custom_call.1} parent=83 // pred_fallthru
          _
        %s824 = sand.u32 %s46, 1
        %s825 = scalar_lea.sflag [#allocation13], %s824
        %s826 = sand.u32 %s352, 1
        %s827 = smul.addr %s826, 512
        %s828 = scalar_lea.vmem [#allocation12], %s827
        // Predicated region
        $region105: #{tpu_custom_call.1} parent=83 // pred_check
          %p829 = pneg %p365
        $region106: #{tpu_custom_call.1} parent=83 // pred_check_branch
          %831 = sbr.rel (%p829) target = $region108
        $region107: #{tpu_custom_call.1} parent=83 // pred_region
          %833 = dma.done %s825, 8192
        $region108: #{tpu_custom_call.1} parent=83 // pred_fallthru
          _
        %s834 = sand.u32 %s46, 1
        %s835 = scalar_lea.sflag [#allocation13], %s834
        %s836 = sand.u32 %s378, 1
        %s837 = smul.addr %s836, 512
        %s838 = scalar_lea.vmem [#allocation14], %s837
        // Predicated region
        $region109: #{tpu_custom_call.1} parent=83 // pred_check
          %p839 = pneg %p391
        $region110: #{tpu_custom_call.1} parent=83 // pred_check_branch
          %841 = sbr.rel (%p839) target = $region112
        $region111: #{tpu_custom_call.1} parent=83 // pred_region
          %843 = dma.done %s835, 8192
        $region112: #{tpu_custom_call.1} parent=83 // pred_fallthru
          _
        // Predicated region
        $region113: #{tpu_custom_call.1} parent=83 // pred_check
          %p844 = pneg %p454
        $region114: #{tpu_custom_call.1} parent=83 // pred_check_branch
          %846 = sbr.rel (%p844) target = $region116
        $region115: #{tpu_custom_call.1} parent=83 // pred_region
          %848 = dma.done [#allocation16], 4096
        $region116: #{tpu_custom_call.1} parent=83 // pred_fallthru
          _
        %s849 = sand.u32 %s66, 1
        %s850 = scalar_lea.sflag [#allocation4], %s849
        %s851 = sand.u32 %s66, 1
        %s852 = smul.addr %s851, 32
        %s853 = scalar_lea.vmem [#allocation3], %s852
        %p854 = pneg %p79
        %p855 = pneg %p76
        %p856 = scmp.lt.s32.totalorder %s50, 1
        %s857 = scalar_select %p856, %s50, 1
        %s858 = scalar_lea.vmem %s1, %s857
        %p859 = pneg %p105
        %p860 = pneg %p102
        %p861 = scmp.lt.s32.totalorder %s50, 1
        %s862 = scalar_select %p861, %s50, 1
        %s863 = smul.addr %s862, 2
        %s864 = smul.addr %s863, 8
        %s865 = scalar_lea.vmem %s2, %s864
        %p866 = pneg %p131
        %p867 = pneg %p128
        %s868 = sand.u32 %s46, 1
        %s869 = scalar_lea.sflag [#allocation7], %s868
        %s870 = sand.u32 %s144, 1
        %s871 = smul.addr %s870, 256
        %s872 = scalar_lea.vmem [#allocation6], %s871
        %p873 = pneg %p157
        %p874 = pneg %p154
        %s875 = sand.u32 %s46, 1
        %s876 = scalar_lea.sflag [#allocation7], %s875
        %s877 = sand.u32 %s170, 1
        %s878 = smul.addr %s877, 256
        %s879 = scalar_lea.vmem [#allocation8], %s878
        %p880 = pneg %p183
        %p881 = pneg %p180
        %s882 = sand.u32 %s46, 1
        %s883 = scalar_lea.sflag [#allocation10], %s882
        %s884 = sand.u32 %s196, 1
        %s885 = smul.addr %s884, 256
        %s886 = scalar_lea.vmem [#allocation9], %s885
        %p887 = pneg %p209
        %p888 = pneg %p206
        %s889 = sand.u32 %s46, 1
        %s890 = scalar_lea.sflag [#allocation10], %s889
        %s891 = sand.u32 %s222, 1
        %s892 = smul.addr %s891, 256
        %s893 = scalar_lea.vmem [#allocation11], %s892
        %p894 = pneg %p235
        %p895 = pneg %p232
        %p896 = scmp.lt.s32.totalorder %s51, 1
        %s897 = scalar_select %p896, %s51, 1
        %s898 = smul.addr %s897, 2
        %s899 = scalar_lea.vmem %s7, %s898
        %p900 = pneg %p261
        %p901 = pneg %p258
        %p902 = scmp.lt.s32.totalorder %s51, 1
        %s903 = scalar_select %p902, %s51, 1
        %s904 = smul.addr %s903, 2
        %s905 = scalar_lea.vmem %s8, %s904
        %p906 = pneg %p287
        %p907 = pneg %p284
        %p908 = scmp.lt.s32.totalorder %s51, 1
        %s909 = scalar_select %p908, %s51, 1
        %s910 = smul.addr %s909, 2
        %s911 = scalar_lea.vmem %s9, %s910
        %p912 = pneg %p313
        %p913 = pneg %p310
        %p914 = scmp.lt.s32.totalorder %s51, 1
        %s915 = scalar_select %p914, %s51, 1
        %s916 = smul.addr %s915, 2
        %s917 = scalar_lea.vmem %s10, %s916
        %p918 = pneg %p339
        %p919 = pneg %p336
        %s920 = sand.u32 %s46, 1
        %s921 = scalar_lea.sflag [#allocation13], %s920
        %s922 = sand.u32 %s352, 1
        %s923 = smul.addr %s922, 512
        %s924 = scalar_lea.vmem [#allocation12], %s923
        %p925 = pneg %p365
        %p926 = pneg %p362
        %s927 = sand.u32 %s46, 1
        %s928 = scalar_lea.sflag [#allocation13], %s927
        %s929 = sand.u32 %s378, 1
        %s930 = smul.addr %s929, 512
        %s931 = scalar_lea.vmem [#allocation14], %s930
        %p932 = pneg %p391
        %p933 = pneg %p388
        %p934 = pneg %p412
        %p935 = pneg %p409
        %p936 = pneg %p433
        %p937 = pneg %p430
        %p938 = pneg %p454
        %p939 = pneg %p451
        %p940 = pneg %p480
        %p941 = pneg %p477
        %s942 = sand.u32 %s467, 1
        %s943 = scalar_lea.sflag [#allocation5], %s942
        %s944 = sand.u32 %s467, 1
        %s945 = smul.addr %s944, 32
        %s946 = scalar_lea.vmem [#allocation17], %s945
        %p947 = pneg %p506
        %p948 = pneg %p503
        %p949 = scmp.lt.s32.totalorder %s50, 1
        %s950 = scalar_select %p949, %s50, 1
        %s951 = scalar_lea.vmem %s17, %s950
        %p952 = pneg %p532
        %p953 = pneg %p529
        %p954 = scmp.lt.s32.totalorder %s50, 1
        %s955 = scalar_select %p954, %s50, 1
        %s956 = scalar_lea.vmem %s18, %s955
        %p957 = scmp.lt.s32.totalorder %s50, 1
        %s958 = scalar_select %p957, %s50, 1
        %s959 = scalar_lea.vmem %s1, %s958
        %p960 = scmp.lt.s32.totalorder %s50, 1
        %s961 = scalar_select %p960, %s50, 1
        %s962 = smul.addr %s961, 2
        %s963 = smul.addr %s962, 8
        %s964 = scalar_lea.vmem %s2, %s963
        %p965 = scmp.lt.s32.totalorder %s51, 1
        %s966 = scalar_select %p965, %s51, 1
        %s967 = smul.addr %s966, 2
        %s968 = scalar_lea.vmem %s7, %s967
        %p969 = scmp.lt.s32.totalorder %s51, 1
        %s970 = scalar_select %p969, %s51, 1
        %s971 = smul.addr %s970, 2
        %s972 = scalar_lea.vmem %s8, %s971
        %p973 = scmp.lt.s32.totalorder %s51, 1
        %s974 = scalar_select %p973, %s51, 1
        %s975 = smul.addr %s974, 2
        %s976 = scalar_lea.vmem %s9, %s975
        %p977 = scmp.lt.s32.totalorder %s51, 1
        %s978 = scalar_select %p977, %s51, 1
        %s979 = smul.addr %s978, 2
        %s980 = scalar_lea.vmem %s10, %s979
        %p981 = scmp.lt.s32.totalorder %s50, 1
        %s982 = scalar_select %p981, %s50, 1
        %s983 = scalar_lea.vmem %s17, %s982
        %p984 = scmp.lt.s32.totalorder %s50, 1
        %s985 = scalar_select %p984, %s50, 1
        %s986 = scalar_lea.vmem %s18, %s985
        %p988 = scmp.eq.s32.totalorder %s51, 0
        // Predicated region
        $region117: #{tpu_custom_call.1} parent=83 // pred_check
          %p989 = pneg %p988
        $region118: #{tpu_custom_call.1} parent=83 // pred_check_branch
          %991 = sbr.rel (%p989) target = $region120
        $region119: #{tpu_custom_call.1} parent=83 // pred_region
          %v992 = vld [vmem:[%s778] sm:$0xff]
          %v993 = vld [vmem:[%s778 + $0x8] sm:$0xff]
          %v994 = vld [vmem:[%s778 + $0x10] sm:$0xff]
          %v995 = vld [vmem:[%s778 + $0x18] sm:$0xff]
          %996 = vst [vmem:[#allocation2] sm:$0xff] %v992
          %997 = vst [vmem:[#allocation2 + $0x8] sm:$0xff] %v993
          %998 = vst [vmem:[#allocation2 + $0x10] sm:$0xff] %v994
          %999 = vst [vmem:[#allocation2 + $0x18] sm:$0xff] %v995
        $region120: #{tpu_custom_call.1} parent=83 // pred_fallthru
          _
        %v1000 = vld [vmem:[#allocation2] sm:$0xff]
        %v1001 = vld [vmem:[#allocation2 + $0x8] sm:$0xff]
        %v1002 = vld [vmem:[#allocation2 + $0x10] sm:$0xff]
        %v1003 = vld [vmem:[#allocation2 + $0x18] sm:$0xff]
        %v1004 = vlaneseq
        %v1005 = vshrl.u32 %v1004, 7
        %v1006 = vadd.s32 %v1005, 8
        %v1007 = vlaneseq
        %v1008 = vand.u32 %v1007, 127
        %vm1009 = vcmp.le.s32.totalorder %v1008, %v1005
        %vm1010 = vcmp.le.s32.totalorder %v1008, %v1006
        %v1011 = vld [vmem:[%s959] sm:$0x1]
        %vm1012 = vcmp.gt.f32.partialorder %v1011, 0.5
        %v1013 = vsel %vm1012, 1, 0
        %v1014 = vperm.slane %v1013, 0
        %vm1015 = vcmp.eq.s32.totalorder %v1014, 1
        %vm1016 = vmand %vm1009, %vm1015
        %vm1017 = vmand %vm1010, %vm1015
        %v1018 = vld [vmem:[%s968] sm:$0x3]
        %v1019 = vld [vmem:[%s972] sm:$0x3]
        %v1020 = vadd.f32 %v1000, %v1001
        %1021 = vadd.xlane.f32.xlu0 %v1020
        %v1022 = vpop.xlane.xlu0 %1021
        %v1023 = vadd.f32 %v1002, %v1003
        %1024 = vadd.xlane.f32.xlu0 %v1023
        %v1025 = vpop.xlane.xlu0 %1024
        %v1026 = vrcp.pop 256.0
        %v1027 = vmul.f32 256.0, %v1026
        %v1028 = vsub.f32 1.0, %v1027
        %v1029 = vmul.f32 %v1026, %v1028
        %v1030 = vadd.f32 %v1026, %v1029
        %vm1031 = vweird.f32 %v1026
        %v1032 = vsel %vm1031, %v1026, %v1030
        %v1033 = vmul.f32 %v1022, %v1032
        %v1034 = vmul.f32 %v1025, %v1032
        %v1035 = vsub.f32 %v1000, %v1033
        %v1036 = vsub.f32 %v1001, %v1033
        %v1037 = vsub.f32 %v1002, %v1034
        %v1038 = vsub.f32 %v1003, %v1034
        %v1039 = vmul.f32 %v1035, %v1035
        %v1040 = vmul.f32 %v1036, %v1036
        %v1041 = vmul.f32 %v1037, %v1037
        %v1042 = vmul.f32 %v1038, %v1038
        %v1043 = vadd.f32 %v1039, %v1040
        %1044 = vadd.xlane.f32.xlu0 %v1043
        %v1045 = vpop.xlane.xlu0 %1044
        %v1046 = vadd.f32 %v1041, %v1042
        %1047 = vadd.xlane.f32.xlu0 %v1046
        %v1048 = vpop.xlane.xlu0 %1047
        %v1049 = vmul.f32 %v1045, %v1032
        %v1050 = vmul.f32 %v1048, %v1032
        %v1051 = vadd.f32 %v1049, 1e-05
        %v1052 = vadd.f32 %v1050, 1e-05
        %v1053 = vrsqrt.pop %v1051
        %v1054 = vmul.f32 %v1053, %v1051
        %v1055 = vmul.f32 %v1054, %v1053
        %v1056 = vmul.f32 0.5, %v1055
        %v1057 = vsub.f32 1.5, %v1056
        %v1058 = vmul.f32 %v1053, %v1057
        %vm1059 = vweird.f32 %v1051
        %vm1060 = vweird.f32 %v1053
        %vm1061 = vmor %vm1059, %vm1060
        %v1062 = vsel %vm1061, %v1053, %v1058
        %v1063 = vrsqrt.pop %v1052
        %v1064 = vmul.f32 %v1063, %v1052
        %v1065 = vmul.f32 %v1064, %v1063
        %v1066 = vmul.f32 0.5, %v1065
        %v1067 = vsub.f32 1.5, %v1066
        %v1068 = vmul.f32 %v1063, %v1067
        %vm1069 = vweird.f32 %v1052
        %vm1070 = vweird.f32 %v1063
        %vm1071 = vmor %vm1069, %vm1070
        %v1072 = vsel %vm1071, %v1063, %v1068
        %v1073 = vmul.f32 %v1035, %v1062
        %v1074 = vmul.f32 %v1036, %v1062
        %v1075 = vmul.f32 %v1037, %v1072
        %v1076 = vmul.f32 %v1038, %v1072
        %v1078 = vperm.slane %v1018, 0
        %v1079 = vperm.slane %v1018, 1
        %v1082 = vmul.f32 %v1073, %v1078
        %v1083 = vmul.f32 %v1074, %v1079
        %v1084 = vmul.f32 %v1075, %v1078
        %v1085 = vmul.f32 %v1076, %v1079
        %v1087 = vperm.slane %v1019, 0
        %v1088 = vperm.slane %v1019, 1
        %v1091 = vadd.f32 %v1082, %v1087
        %v1092 = vadd.f32 %v1083, %v1088
        %v1093 = vadd.f32 %v1084, %v1087
        %v1094 = vadd.f32 %v1085, %v1088
        %v1095 = vpack.c.bf16 %v1093, %v1091
        %v1096 = vpack.c.bf16 %v1094, %v1092
        %v1097 = vld [vmem:[%s788] sm:$0xff]
        %v1098 = vld [vmem:[%s788 + $0x8] sm:$0xff]
        %v1099 = vld [vmem:[%s788 + $0x10] sm:$0xff]
        %v1100 = vld [vmem:[%s788 + $0x18] sm:$0xff]
        %v1101 = vld [vmem:[%s788 + $0x20] sm:$0xff]
        %v1102 = vld [vmem:[%s788 + $0x28] sm:$0xff]
        %v1103 = vld [vmem:[%s788 + $0x30] sm:$0xff]
        %v1104 = vld [vmem:[%s788 + $0x38] sm:$0xff]
        %v1105 = vld [vmem:[%s788 + $0x40] sm:$0xff]
        %v1106 = vld [vmem:[%s788 + $0x48] sm:$0xff]
        %v1107 = vld [vmem:[%s788 + $0x50] sm:$0xff]
        %v1108 = vld [vmem:[%s788 + $0x58] sm:$0xff]
        %v1109 = vld [vmem:[%s788 + $0x60] sm:$0xff]
        %v1110 = vld [vmem:[%s788 + $0x68] sm:$0xff]
        %v1111 = vld [vmem:[%s788 + $0x70] sm:$0xff]
        %v1112 = vld [vmem:[%s788 + $0x78] sm:$0xff]
        %v1113 = vld [vmem:[%s788 + $0x80] sm:$0xff]
        %v1114 = vld [vmem:[%s788 + $0x88] sm:$0xff]
        %v1115 = vld [vmem:[%s788 + $0x90] sm:$0xff]
        %v1116 = vld [vmem:[%s788 + $0x98] sm:$0xff]
        %v1117 = vld [vmem:[%s788 + $0xa0] sm:$0xff]
        %v1118 = vld [vmem:[%s788 + $0xa8] sm:$0xff]
        %v1119 = vld [vmem:[%s788 + $0xb0] sm:$0xff]
        %v1120 = vld [vmem:[%s788 + $0xb8] sm:$0xff]
        %v1121 = vld [vmem:[%s788 + $0xc0] sm:$0xff]
        %v1122 = vld [vmem:[%s788 + $0xc8] sm:$0xff]
        %v1123 = vld [vmem:[%s788 + $0xd0] sm:$0xff]
        %v1124 = vld [vmem:[%s788 + $0xd8] sm:$0xff]
        %v1125 = vld [vmem:[%s788 + $0xe0] sm:$0xff]
        %v1126 = vld [vmem:[%s788 + $0xe8] sm:$0xff]
        %v1127 = vld [vmem:[%s788 + $0xf0] sm:$0xff]
        %v1128 = vld [vmem:[%s788 + $0xf8] sm:$0xff]
        %v1129 = vld [vmem:[%s798] sm:$0xff]
        %v1130 = vld [vmem:[%s798 + $0x8] sm:$0xff]
        %v1131 = vld [vmem:[%s798 + $0x10] sm:$0xff]
        %v1132 = vld [vmem:[%s798 + $0x18] sm:$0xff]
        %v1133 = vld [vmem:[%s798 + $0x20] sm:$0xff]
        %v1134 = vld [vmem:[%s798 + $0x28] sm:$0xff]
        %v1135 = vld [vmem:[%s798 + $0x30] sm:$0xff]
        %v1136 = vld [vmem:[%s798 + $0x38] sm:$0xff]
        %v1137 = vld [vmem:[%s798 + $0x40] sm:$0xff]
        %v1138 = vld [vmem:[%s798 + $0x48] sm:$0xff]
        %v1139 = vld [vmem:[%s798 + $0x50] sm:$0xff]
        %v1140 = vld [vmem:[%s798 + $0x58] sm:$0xff]
        %v1141 = vld [vmem:[%s798 + $0x60] sm:$0xff]
        %v1142 = vld [vmem:[%s798 + $0x68] sm:$0xff]
        %v1143 = vld [vmem:[%s798 + $0x70] sm:$0xff]
        %v1144 = vld [vmem:[%s798 + $0x78] sm:$0xff]
        %v1145 = vld [vmem:[%s798 + $0x80] sm:$0xff]
        %v1146 = vld [vmem:[%s798 + $0x88] sm:$0xff]
        %v1147 = vld [vmem:[%s798 + $0x90] sm:$0xff]
        %v1148 = vld [vmem:[%s798 + $0x98] sm:$0xff]
        %v1149 = vld [vmem:[%s798 + $0xa0] sm:$0xff]
        %v1150 = vld [vmem:[%s798 + $0xa8] sm:$0xff]
        %v1151 = vld [vmem:[%s798 + $0xb0] sm:$0xff]
        %v1152 = vld [vmem:[%s798 + $0xb8] sm:$0xff]
        %v1153 = vld [vmem:[%s798 + $0xc0] sm:$0xff]
        %v1154 = vld [vmem:[%s798 + $0xc8] sm:$0xff]
        %v1155 = vld [vmem:[%s798 + $0xd0] sm:$0xff]
        %v1156 = vld [vmem:[%s798 + $0xd8] sm:$0xff]
        %v1157 = vld [vmem:[%s798 + $0xe0] sm:$0xff]
        %v1158 = vld [vmem:[%s798 + $0xe8] sm:$0xff]
        %v1159 = vld [vmem:[%s798 + $0xf0] sm:$0xff]
        %v1160 = vld [vmem:[%s798 + $0xf8] sm:$0xff]
        %v1161 = vld [vmem:[%s808] sm:$0xff]
        %v1162 = vld [vmem:[%s808 + $0x8] sm:$0xff]
        %v1163 = vld [vmem:[%s808 + $0x10] sm:$0xff]
        %v1164 = vld [vmem:[%s808 + $0x18] sm:$0xff]
        %v1165 = vld [vmem:[%s808 + $0x20] sm:$0xff]
        %v1166 = vld [vmem:[%s808 + $0x28] sm:$0xff]
        %v1167 = vld [vmem:[%s808 + $0x30] sm:$0xff]
        %v1168 = vld [vmem:[%s808 + $0x38] sm:$0xff]
        %v1169 = vld [vmem:[%s808 + $0x40] sm:$0xff]
        %v1170 = vld [vmem:[%s808 + $0x48] sm:$0xff]
        %v1171 = vld [vmem:[%s808 + $0x50] sm:$0xff]
        %v1172 = vld [vmem:[%s808 + $0x58] sm:$0xff]
        %v1173 = vld [vmem:[%s808 + $0x60] sm:$0xff]
        %v1174 = vld [vmem:[%s808 + $0x68] sm:$0xff]
        %v1175 = vld [vmem:[%s808 + $0x70] sm:$0xff]
        %v1176 = vld [vmem:[%s808 + $0x78] sm:$0xff]
        %v1177 = vld [vmem:[%s808 + $0x80] sm:$0xff]
        %v1178 = vld [vmem:[%s808 + $0x88] sm:$0xff]
        %v1179 = vld [vmem:[%s808 + $0x90] sm:$0xff]
        %v1180 = vld [vmem:[%s808 + $0x98] sm:$0xff]
        %v1181 = vld [vmem:[%s808 + $0xa0] sm:$0xff]
        %v1182 = vld [vmem:[%s808 + $0xa8] sm:$0xff]
        %v1183 = vld [vmem:[%s808 + $0xb0] sm:$0xff]
        %v1184 = vld [vmem:[%s808 + $0xb8] sm:$0xff]
        %v1185 = vld [vmem:[%s808 + $0xc0] sm:$0xff]
        %v1186 = vld [vmem:[%s808 + $0xc8] sm:$0xff]
        %v1187 = vld [vmem:[%s808 + $0xd0] sm:$0xff]
        %v1188 = vld [vmem:[%s808 + $0xd8] sm:$0xff]
        %v1189 = vld [vmem:[%s808 + $0xe0] sm:$0xff]
        %v1190 = vld [vmem:[%s808 + $0xe8] sm:$0xff]
        %v1191 = vld [vmem:[%s808 + $0xf0] sm:$0xff]
        %v1192 = vld [vmem:[%s808 + $0xf8] sm:$0xff]
        %v1193 = vld [vmem:[%s818] sm:$0xff]
        %v1194 = vld [vmem:[%s818 + $0x8] sm:$0xff]
        %v1195 = vld [vmem:[%s818 + $0x10] sm:$0xff]
        %v1196 = vld [vmem:[%s818 + $0x18] sm:$0xff]
        %v1197 = vld [vmem:[%s818 + $0x20] sm:$0xff]
        %v1198 = vld [vmem:[%s818 + $0x28] sm:$0xff]
        %v1199 = vld [vmem:[%s818 + $0x30] sm:$0xff]
        %v1200 = vld [vmem:[%s818 + $0x38] sm:$0xff]
        %v1201 = vld [vmem:[%s818 + $0x40] sm:$0xff]
        %v1202 = vld [vmem:[%s818 + $0x48] sm:$0xff]
        %v1203 = vld [vmem:[%s818 + $0x50] sm:$0xff]
        %v1204 = vld [vmem:[%s818 + $0x58] sm:$0xff]
        %v1205 = vld [vmem:[%s818 + $0x60] sm:$0xff]
        %v1206 = vld [vmem:[%s818 + $0x68] sm:$0xff]
        %v1207 = vld [vmem:[%s818 + $0x70] sm:$0xff]
        %v1208 = vld [vmem:[%s818 + $0x78] sm:$0xff]
        %v1209 = vld [vmem:[%s818 + $0x80] sm:$0xff]
        %v1210 = vld [vmem:[%s818 + $0x88] sm:$0xff]
        %v1211 = vld [vmem:[%s818 + $0x90] sm:$0xff]
        %v1212 = vld [vmem:[%s818 + $0x98] sm:$0xff]
        %v1213 = vld [vmem:[%s818 + $0xa0] sm:$0xff]
        %v1214 = vld [vmem:[%s818 + $0xa8] sm:$0xff]
        %v1215 = vld [vmem:[%s818 + $0xb0] sm:$0xff]
        %v1216 = vld [vmem:[%s818 + $0xb8] sm:$0xff]
        %v1217 = vld [vmem:[%s818 + $0xc0] sm:$0xff]
        %v1218 = vld [vmem:[%s818 + $0xc8] sm:$0xff]
        %v1219 = vld [vmem:[%s818 + $0xd0] sm:$0xff]
        %v1220 = vld [vmem:[%s818 + $0xd8] sm:$0xff]
        %v1221 = vld [vmem:[%s818 + $0xe0] sm:$0xff]
        %v1222 = vld [vmem:[%s818 + $0xe8] sm:$0xff]
        %v1223 = vld [vmem:[%s818 + $0xf0] sm:$0xff]
        %v1224 = vld [vmem:[%s818 + $0xf8] sm:$0xff]
        %v1257 = vunpack.c.l.b16 %v1097
        %v1258 = vunpack.c.h.b16 %v1097
        %v1259 = vunpack.c.l.b16 %v1098
        %v1260 = vunpack.c.h.b16 %v1098
        %v1261 = vunpack.c.l.b16 %v1099
        %v1262 = vunpack.c.h.b16 %v1099
        %v1263 = vunpack.c.l.b16 %v1100
        %v1264 = vunpack.c.h.b16 %v1100
        %v1265 = vunpack.c.l.b16 %v1101
        %v1266 = vunpack.c.h.b16 %v1101
        %v1267 = vunpack.c.l.b16 %v1102
        %v1268 = vunpack.c.h.b16 %v1102
        %v1269 = vunpack.c.l.b16 %v1103
        %v1270 = vunpack.c.h.b16 %v1103
        %v1271 = vunpack.c.l.b16 %v1104
        %v1272 = vunpack.c.h.b16 %v1104
        %v1273 = vunpack.c.l.b16 %v1105
        %v1274 = vunpack.c.h.b16 %v1105
        %v1275 = vunpack.c.l.b16 %v1106
        %v1276 = vunpack.c.h.b16 %v1106
        %v1277 = vunpack.c.l.b16 %v1107
        %v1278 = vunpack.c.h.b16 %v1107
        %v1279 = vunpack.c.l.b16 %v1108
        %v1280 = vunpack.c.h.b16 %v1108
        %v1281 = vunpack.c.l.b16 %v1109
        %v1282 = vunpack.c.h.b16 %v1109
        %v1283 = vunpack.c.l.b16 %v1110
        %v1284 = vunpack.c.h.b16 %v1110
        %v1285 = vunpack.c.l.b16 %v1111
        %v1286 = vunpack.c.h.b16 %v1111
        %v1287 = vunpack.c.l.b16 %v1112
        %v1288 = vunpack.c.h.b16 %v1112
        %v1289 = vunpack.c.l.b16 %v1113
        %v1290 = vunpack.c.h.b16 %v1113
        %v1291 = vunpack.c.l.b16 %v1114
        %v1292 = vunpack.c.h.b16 %v1114
        %v1293 = vunpack.c.l.b16 %v1115
        %v1294 = vunpack.c.h.b16 %v1115
        %v1295 = vunpack.c.l.b16 %v1116
        %v1296 = vunpack.c.h.b16 %v1116
        %v1297 = vunpack.c.l.b16 %v1117
        %v1298 = vunpack.c.h.b16 %v1117
        %v1299 = vunpack.c.l.b16 %v1118
        %v1300 = vunpack.c.h.b16 %v1118
        %v1301 = vunpack.c.l.b16 %v1119
        %v1302 = vunpack.c.h.b16 %v1119
        %v1303 = vunpack.c.l.b16 %v1120
        %v1304 = vunpack.c.h.b16 %v1120
        %v1305 = vunpack.c.l.b16 %v1121
        %v1306 = vunpack.c.h.b16 %v1121
        %v1307 = vunpack.c.l.b16 %v1122
        %v1308 = vunpack.c.h.b16 %v1122
        %v1309 = vunpack.c.l.b16 %v1123
        %v1310 = vunpack.c.h.b16 %v1123
        %v1311 = vunpack.c.l.b16 %v1124
        %v1312 = vunpack.c.h.b16 %v1124
        %v1313 = vunpack.c.l.b16 %v1125
        %v1314 = vunpack.c.h.b16 %v1125
        %v1315 = vunpack.c.l.b16 %v1126
        %v1316 = vunpack.c.h.b16 %v1126
        %v1317 = vunpack.c.l.b16 %v1127
        %v1318 = vunpack.c.h.b16 %v1127
        %v1319 = vunpack.c.l.b16 %v1128
        %v1320 = vunpack.c.h.b16 %v1128
        %v1321 = vpack.c.b16 %v1259, %v1257
        %v1322 = vpack.c.b16 %v1260, %v1258
        %v1323 = vpack.c.b16 %v1263, %v1261
        %v1324 = vpack.c.b16 %v1264, %v1262
        %v1325 = vpack.c.b16 %v1267, %v1265
        %v1326 = vpack.c.b16 %v1268, %v1266
        %v1327 = vpack.c.b16 %v1271, %v1269
        %v1328 = vpack.c.b16 %v1272, %v1270
        %v1329 = vpack.c.b16 %v1275, %v1273
        %v1330 = vpack.c.b16 %v1276, %v1274
        %v1331 = vpack.c.b16 %v1279, %v1277
        %v1332 = vpack.c.b16 %v1280, %v1278
        %v1333 = vpack.c.b16 %v1283, %v1281
        %v1334 = vpack.c.b16 %v1284, %v1282
        %v1335 = vpack.c.b16 %v1287, %v1285
        %v1336 = vpack.c.b16 %v1288, %v1286
        %v1337 = vpack.c.b16 %v1291, %v1289
        %v1338 = vpack.c.b16 %v1292, %v1290
        %v1339 = vpack.c.b16 %v1295, %v1293
        %v1340 = vpack.c.b16 %v1296, %v1294
        %v1341 = vpack.c.b16 %v1299, %v1297
        %v1342 = vpack.c.b16 %v1300, %v1298
        %v1343 = vpack.c.b16 %v1303, %v1301
        %v1344 = vpack.c.b16 %v1304, %v1302
        %v1345 = vpack.c.b16 %v1307, %v1305
        %v1346 = vpack.c.b16 %v1308, %v1306
        %v1347 = vpack.c.b16 %v1311, %v1309
        %v1348 = vpack.c.b16 %v1312, %v1310
        %v1349 = vpack.c.b16 %v1315, %v1313
        %v1350 = vpack.c.b16 %v1316, %v1314
        %v1351 = vpack.c.b16 %v1319, %v1317
        %v1352 = vpack.c.b16 %v1320, %v1318
        %1385 = vmatpush.bf16.msra.mxu0 %v1335
        %1386 = vmatpush.bf16.msra.mxu0 %v1333
        %1387 = vmatpush.bf16.msra.mxu0 %v1331
        %1388 = vmatpush.bf16.msra.mxu0 %v1329
        %1389 = vmatpush.bf16.msra.mxu0 %v1327
        %1390 = vmatpush.bf16.msra.mxu0 %v1325
        %1391 = vmatpush.bf16.msra.mxu0 %v1323
        %1392 = vmatpush.bf16.msra.mxu0 %v1321
        %1393 = vmatmul.bf16.gmra.mxu0 %v1095
        %v1394 = vpop.f32.mrf.mxu0
        %v1395 = vadd.f32 0.0, %v1394
        %v1396 = vpop.f32.mrf.mxu0
        %v1397 = vadd.f32 0.0, %v1396
        %1398 = vdwg.mxu0
        %1399 = vmatpush.bf16.msra.mxu0 %v1351
        %1400 = vmatpush.bf16.msra.mxu0 %v1349
        %1401 = vmatpush.bf16.msra.mxu0 %v1347
        %1402 = vmatpush.bf16.msra.mxu0 %v1345
        %1403 = vmatpush.bf16.msra.mxu0 %v1343
        %1404 = vmatpush.bf16.msra.mxu0 %v1341
        %1405 = vmatpush.bf16.msra.mxu0 %v1339
        %1406 = vmatpush.bf16.msra.mxu0 %v1337
        %1407 = vmatmul.bf16.gmra.mxu0 %v1096
        %v1408 = vpop.f32.mrf.mxu0
        %v1409 = vadd.f32 %v1395, %v1408
        %v1410 = vpop.f32.mrf.mxu0
        %v1411 = vadd.f32 %v1397, %v1410
        %1412 = vdwg.mxu0
        %1413 = vmatpush.bf16.msra.mxu0 %v1336
        %1414 = vmatpush.bf16.msra.mxu0 %v1334
        %1415 = vmatpush.bf16.msra.mxu0 %v1332
        %1416 = vmatpush.bf16.msra.mxu0 %v1330
        %1417 = vmatpush.bf16.msra.mxu0 %v1328
        %1418 = vmatpush.bf16.msra.mxu0 %v1326
        %1419 = vmatpush.bf16.msra.mxu0 %v1324
        %1420 = vmatpush.bf16.msra.mxu0 %v1322
        %1421 = vmatmul.bf16.gmra.mxu0 %v1095
        %v1422 = vpop.f32.mrf.mxu0
        %v1423 = vadd.f32 0.0, %v1422
        %v1424 = vpop.f32.mrf.mxu0
        %v1425 = vadd.f32 0.0, %v1424
        %1426 = vdwg.mxu0
        %1427 = vmatpush.bf16.msra.mxu0 %v1352
        %1428 = vmatpush.bf16.msra.mxu0 %v1350
        %1429 = vmatpush.bf16.msra.mxu0 %v1348
        %1430 = vmatpush.bf16.msra.mxu0 %v1346
        %1431 = vmatpush.bf16.msra.mxu0 %v1344
        %1432 = vmatpush.bf16.msra.mxu0 %v1342
        %1433 = vmatpush.bf16.msra.mxu0 %v1340
        %1434 = vmatpush.bf16.msra.mxu0 %v1338
        %1435 = vmatmul.bf16.gmra.mxu0 %v1096
        %v1436 = vpop.f32.mrf.mxu0
        %v1437 = vadd.f32 %v1423, %v1436
        %v1438 = vpop.f32.mrf.mxu0
        %v1439 = vadd.f32 %v1425, %v1438
        %1440 = vdwg.mxu0
        %v1473 = vunpack.c.l.b16 %v1129
        %v1474 = vunpack.c.h.b16 %v1129
        %v1475 = vunpack.c.l.b16 %v1130
        %v1476 = vunpack.c.h.b16 %v1130
        %v1477 = vunpack.c.l.b16 %v1131
        %v1478 = vunpack.c.h.b16 %v1131
        %v1479 = vunpack.c.l.b16 %v1132
        %v1480 = vunpack.c.h.b16 %v1132
        %v1481 = vunpack.c.l.b16 %v1133
        %v1482 = vunpack.c.h.b16 %v1133
        %v1483 = vunpack.c.l.b16 %v1134
        %v1484 = vunpack.c.h.b16 %v1134
        %v1485 = vunpack.c.l.b16 %v1135
        %v1486 = vunpack.c.h.b16 %v1135
        %v1487 = vunpack.c.l.b16 %v1136
        %v1488 = vunpack.c.h.b16 %v1136
        %v1489 = vunpack.c.l.b16 %v1137
        %v1490 = vunpack.c.h.b16 %v1137
        %v1491 = vunpack.c.l.b16 %v1138
        %v1492 = vunpack.c.h.b16 %v1138
        %v1493 = vunpack.c.l.b16 %v1139
        %v1494 = vunpack.c.h.b16 %v1139
        %v1495 = vunpack.c.l.b16 %v1140
        %v1496 = vunpack.c.h.b16 %v1140
        %v1497 = vunpack.c.l.b16 %v1141
        %v1498 = vunpack.c.h.b16 %v1141
        %v1499 = vunpack.c.l.b16 %v1142
        %v1500 = vunpack.c.h.b16 %v1142
        %v1501 = vunpack.c.l.b16 %v1143
        %v1502 = vunpack.c.h.b16 %v1143
        %v1503 = vunpack.c.l.b16 %v1144
        %v1504 = vunpack.c.h.b16 %v1144
        %v1505 = vunpack.c.l.b16 %v1145
        %v1506 = vunpack.c.h.b16 %v1145
        %v1507 = vunpack.c.l.b16 %v1146
        %v1508 = vunpack.c.h.b16 %v1146
        %v1509 = vunpack.c.l.b16 %v1147
        %v1510 = vunpack.c.h.b16 %v1147
        %v1511 = vunpack.c.l.b16 %v1148
        %v1512 = vunpack.c.h.b16 %v1148
        %v1513 = vunpack.c.l.b16 %v1149
        %v1514 = vunpack.c.h.b16 %v1149
        %v1515 = vunpack.c.l.b16 %v1150
        %v1516 = vunpack.c.h.b16 %v1150
        %v1517 = vunpack.c.l.b16 %v1151
        %v1518 = vunpack.c.h.b16 %v1151
        %v1519 = vunpack.c.l.b16 %v1152
        %v1520 = vunpack.c.h.b16 %v1152
        %v1521 = vunpack.c.l.b16 %v1153
        %v1522 = vunpack.c.h.b16 %v1153
        %v1523 = vunpack.c.l.b16 %v1154
        %v1524 = vunpack.c.h.b16 %v1154
        %v1525 = vunpack.c.l.b16 %v1155
        %v1526 = vunpack.c.h.b16 %v1155
        %v1527 = vunpack.c.l.b16 %v1156
        %v1528 = vunpack.c.h.b16 %v1156
        %v1529 = vunpack.c.l.b16 %v1157
        %v1530 = vunpack.c.h.b16 %v1157
        %v1531 = vunpack.c.l.b16 %v1158
        %v1532 = vunpack.c.h.b16 %v1158
        %v1533 = vunpack.c.l.b16 %v1159
        %v1534 = vunpack.c.h.b16 %v1159
        %v1535 = vunpack.c.l.b16 %v1160
        %v1536 = vunpack.c.h.b16 %v1160
        %v1537 = vpack.c.b16 %v1475, %v1473
        %v1538 = vpack.c.b16 %v1476, %v1474
        %v1539 = vpack.c.b16 %v1479, %v1477
        %v1540 = vpack.c.b16 %v1480, %v1478
        %v1541 = vpack.c.b16 %v1483, %v1481
        %v1542 = vpack.c.b16 %v1484, %v1482
        %v1543 = vpack.c.b16 %v1487, %v1485
        %v1544 = vpack.c.b16 %v1488, %v1486
        %v1545 = vpack.c.b16 %v1491, %v1489
        %v1546 = vpack.c.b16 %v1492, %v1490
        %v1547 = vpack.c.b16 %v1495, %v1493
        %v1548 = vpack.c.b16 %v1496, %v1494
        %v1549 = vpack.c.b16 %v1499, %v1497
        %v1550 = vpack.c.b16 %v1500, %v1498
        %v1551 = vpack.c.b16 %v1503, %v1501
        %v1552 = vpack.c.b16 %v1504, %v1502
        %v1553 = vpack.c.b16 %v1507, %v1505
        %v1554 = vpack.c.b16 %v1508, %v1506
        %v1555 = vpack.c.b16 %v1511, %v1509
        %v1556 = vpack.c.b16 %v1512, %v1510
        %v1557 = vpack.c.b16 %v1515, %v1513
        %v1558 = vpack.c.b16 %v1516, %v1514
        %v1559 = vpack.c.b16 %v1519, %v1517
        %v1560 = vpack.c.b16 %v1520, %v1518
        %v1561 = vpack.c.b16 %v1523, %v1521
        %v1562 = vpack.c.b16 %v1524, %v1522
        %v1563 = vpack.c.b16 %v1527, %v1525
        %v1564 = vpack.c.b16 %v1528, %v1526
        %v1565 = vpack.c.b16 %v1531, %v1529
        %v1566 = vpack.c.b16 %v1532, %v1530
        %v1567 = vpack.c.b16 %v1535, %v1533
        %v1568 = vpack.c.b16 %v1536, %v1534
        %1601 = vmatpush.bf16.msra.mxu0 %v1551
        %1602 = vmatpush.bf16.msra.mxu0 %v1549
        %1603 = vmatpush.bf16.msra.mxu0 %v1547
        %1604 = vmatpush.bf16.msra.mxu0 %v1545
        %1605 = vmatpush.bf16.msra.mxu0 %v1543
        %1606 = vmatpush.bf16.msra.mxu0 %v1541
        %1607 = vmatpush.bf16.msra.mxu0 %v1539
        %1608 = vmatpush.bf16.msra.mxu0 %v1537
        %1609 = vmatmul.bf16.gmra.mxu0 %v1095
        %v1610 = vpop.f32.mrf.mxu0
        %v1611 = vadd.f32 0.0, %v1610
        %v1612 = vpop.f32.mrf.mxu0
        %v1613 = vadd.f32 0.0, %v1612
        %1614 = vdwg.mxu0
        %1615 = vmatpush.bf16.msra.mxu0 %v1567
        %1616 = vmatpush.bf16.msra.mxu0 %v1565
        %1617 = vmatpush.bf16.msra.mxu0 %v1563
        %1618 = vmatpush.bf16.msra.mxu0 %v1561
        %1619 = vmatpush.bf16.msra.mxu0 %v1559
        %1620 = vmatpush.bf16.msra.mxu0 %v1557
        %1621 = vmatpush.bf16.msra.mxu0 %v1555
        %1622 = vmatpush.bf16.msra.mxu0 %v1553
        %1623 = vmatmul.bf16.gmra.mxu0 %v1096
        %v1624 = vpop.f32.mrf.mxu0
        %v1625 = vadd.f32 %v1611, %v1624
        %v1626 = vpop.f32.mrf.mxu0
        %v1627 = vadd.f32 %v1613, %v1626
        %1628 = vdwg.mxu0
        %1629 = vmatpush.bf16.msra.mxu0 %v1552
        %1630 = vmatpush.bf16.msra.mxu0 %v1550
        %1631 = vmatpush.bf16.msra.mxu0 %v1548
        %1632 = vmatpush.bf16.msra.mxu0 %v1546
        %1633 = vmatpush.bf16.msra.mxu0 %v1544
        %1634 = vmatpush.bf16.msra.mxu0 %v1542
        %1635 = vmatpush.bf16.msra.mxu0 %v1540
        %1636 = vmatpush.bf16.msra.mxu0 %v1538
        %1637 = vmatmul.bf16.gmra.mxu0 %v1095
        %v1638 = vpop.f32.mrf.mxu0
        %v1639 = vadd.f32 0.0, %v1638
        %v1640 = vpop.f32.mrf.mxu0
        %v1641 = vadd.f32 0.0, %v1640
        %1642 = vdwg.mxu0
        %1643 = vmatpush.bf16.msra.mxu0 %v1568
        %1644 = vmatpush.bf16.msra.mxu0 %v1566
        %1645 = vmatpush.bf16.msra.mxu0 %v1564
        %1646 = vmatpush.bf16.msra.mxu0 %v1562
        %1647 = vmatpush.bf16.msra.mxu0 %v1560
        %1648 = vmatpush.bf16.msra.mxu0 %v1558
        %1649 = vmatpush.bf16.msra.mxu0 %v1556
        %1650 = vmatpush.bf16.msra.mxu0 %v1554
        %1651 = vmatmul.bf16.gmra.mxu0 %v1096
        %v1652 = vpop.f32.mrf.mxu0
        %v1653 = vadd.f32 %v1639, %v1652
        %v1654 = vpop.f32.mrf.mxu0
        %v1655 = vadd.f32 %v1641, %v1654
        %1656 = vdwg.mxu0
        %v1689 = vunpack.c.l.b16 %v1161
        %v1690 = vunpack.c.h.b16 %v1161
        %v1691 = vunpack.c.l.b16 %v1162
        %v1692 = vunpack.c.h.b16 %v1162
        %v1693 = vunpack.c.l.b16 %v1163
        %v1694 = vunpack.c.h.b16 %v1163
        %v1695 = vunpack.c.l.b16 %v1164
        %v1696 = vunpack.c.h.b16 %v1164
        %v1697 = vunpack.c.l.b16 %v1165
        %v1698 = vunpack.c.h.b16 %v1165
        %v1699 = vunpack.c.l.b16 %v1166
        %v1700 = vunpack.c.h.b16 %v1166
        %v1701 = vunpack.c.l.b16 %v1167
        %v1702 = vunpack.c.h.b16 %v1167
        %v1703 = vunpack.c.l.b16 %v1168
        %v1704 = vunpack.c.h.b16 %v1168
        %v1705 = vunpack.c.l.b16 %v1169
        %v1706 = vunpack.c.h.b16 %v1169
        %v1707 = vunpack.c.l.b16 %v1170
        %v1708 = vunpack.c.h.b16 %v1170
        %v1709 = vunpack.c.l.b16 %v1171
        %v1710 = vunpack.c.h.b16 %v1171
        %v1711 = vunpack.c.l.b16 %v1172
        %v1712 = vunpack.c.h.b16 %v1172
        %v1713 = vunpack.c.l.b16 %v1173
        %v1714 = vunpack.c.h.b16 %v1173
        %v1715 = vunpack.c.l.b16 %v1174
        %v1716 = vunpack.c.h.b16 %v1174
        %v1717 = vunpack.c.l.b16 %v1175
        %v1718 = vunpack.c.h.b16 %v1175
        %v1719 = vunpack.c.l.b16 %v1176
        %v1720 = vunpack.c.h.b16 %v1176
        %v1721 = vunpack.c.l.b16 %v1177
        %v1722 = vunpack.c.h.b16 %v1177
        %v1723 = vunpack.c.l.b16 %v1178
        %v1724 = vunpack.c.h.b16 %v1178
        %v1725 = vunpack.c.l.b16 %v1179
        %v1726 = vunpack.c.h.b16 %v1179
        %v1727 = vunpack.c.l.b16 %v1180
        %v1728 = vunpack.c.h.b16 %v1180
        %v1729 = vunpack.c.l.b16 %v1181
        %v1730 = vunpack.c.h.b16 %v1181
        %v1731 = vunpack.c.l.b16 %v1182
        %v1732 = vunpack.c.h.b16 %v1182
        %v1733 = vunpack.c.l.b16 %v1183
        %v1734 = vunpack.c.h.b16 %v1183
        %v1735 = vunpack.c.l.b16 %v1184
        %v1736 = vunpack.c.h.b16 %v1184
        %v1737 = vunpack.c.l.b16 %v1185
        %v1738 = vunpack.c.h.b16 %v1185
        %v1739 = vunpack.c.l.b16 %v1186
        %v1740 = vunpack.c.h.b16 %v1186
        %v1741 = vunpack.c.l.b16 %v1187
        %v1742 = vunpack.c.h.b16 %v1187
        %v1743 = vunpack.c.l.b16 %v1188
        %v1744 = vunpack.c.h.b16 %v1188
        %v1745 = vunpack.c.l.b16 %v1189
        %v1746 = vunpack.c.h.b16 %v1189
        %v1747 = vunpack.c.l.b16 %v1190
        %v1748 = vunpack.c.h.b16 %v1190
        %v1749 = vunpack.c.l.b16 %v1191
        %v1750 = vunpack.c.h.b16 %v1191
        %v1751 = vunpack.c.l.b16 %v1192
        %v1752 = vunpack.c.h.b16 %v1192
        %v1753 = vpack.c.b16 %v1691, %v1689
        %v1754 = vpack.c.b16 %v1692, %v1690
        %v1755 = vpack.c.b16 %v1695, %v1693
        %v1756 = vpack.c.b16 %v1696, %v1694
        %v1757 = vpack.c.b16 %v1699, %v1697
        %v1758 = vpack.c.b16 %v1700, %v1698
        %v1759 = vpack.c.b16 %v1703, %v1701
        %v1760 = vpack.c.b16 %v1704, %v1702
        %v1761 = vpack.c.b16 %v1707, %v1705
        %v1762 = vpack.c.b16 %v1708, %v1706
        %v1763 = vpack.c.b16 %v1711, %v1709
        %v1764 = vpack.c.b16 %v1712, %v1710
        %v1765 = vpack.c.b16 %v1715, %v1713
        %v1766 = vpack.c.b16 %v1716, %v1714
        %v1767 = vpack.c.b16 %v1719, %v1717
        %v1768 = vpack.c.b16 %v1720, %v1718
        %v1769 = vpack.c.b16 %v1723, %v1721
        %v1770 = vpack.c.b16 %v1724, %v1722
        %v1771 = vpack.c.b16 %v1727, %v1725
        %v1772 = vpack.c.b16 %v1728, %v1726
        %v1773 = vpack.c.b16 %v1731, %v1729
        %v1774 = vpack.c.b16 %v1732, %v1730
        %v1775 = vpack.c.b16 %v1735, %v1733
        %v1776 = vpack.c.b16 %v1736, %v1734
        %v1777 = vpack.c.b16 %v1739, %v1737
        %v1778 = vpack.c.b16 %v1740, %v1738
        %v1779 = vpack.c.b16 %v1743, %v1741
        %v1780 = vpack.c.b16 %v1744, %v1742
        %v1781 = vpack.c.b16 %v1747, %v1745
        %v1782 = vpack.c.b16 %v1748, %v1746
        %v1783 = vpack.c.b16 %v1751, %v1749
        %v1784 = vpack.c.b16 %v1752, %v1750
        %1817 = vmatpush.bf16.msra.mxu0 %v1767
        %1818 = vmatpush.bf16.msra.mxu0 %v1765
        %1819 = vmatpush.bf16.msra.mxu0 %v1763
        %1820 = vmatpush.bf16.msra.mxu0 %v1761
        %1821 = vmatpush.bf16.msra.mxu0 %v1759
        %1822 = vmatpush.bf16.msra.mxu0 %v1757
        %1823 = vmatpush.bf16.msra.mxu0 %v1755
        %1824 = vmatpush.bf16.msra.mxu0 %v1753
        %1825 = vmatmul.bf16.gmra.mxu0 %v1095
        %v1826 = vpop.f32.mrf.mxu0
        %v1827 = vadd.f32 0.0, %v1826
        %v1828 = vpop.f32.mrf.mxu0
        %v1829 = vadd.f32 0.0, %v1828
        %1830 = vdwg.mxu0
        %1831 = vmatpush.bf16.msra.mxu0 %v1783
        %1832 = vmatpush.bf16.msra.mxu0 %v1781
        %1833 = vmatpush.bf16.msra.mxu0 %v1779
        %1834 = vmatpush.bf16.msra.mxu0 %v1777
        %1835 = vmatpush.bf16.msra.mxu0 %v1775
        %1836 = vmatpush.bf16.msra.mxu0 %v1773
        %1837 = vmatpush.bf16.msra.mxu0 %v1771
        %1838 = vmatpush.bf16.msra.mxu0 %v1769
        %1839 = vmatmul.bf16.gmra.mxu0 %v1096
        %v1840 = vpop.f32.mrf.mxu0
        %v1841 = vadd.f32 %v1827, %v1840
        %v1842 = vpop.f32.mrf.mxu0
        %v1843 = vadd.f32 %v1829, %v1842
        %1844 = vdwg.mxu0
        %1845 = vmatpush.bf16.msra.mxu0 %v1768
        %1846 = vmatpush.bf16.msra.mxu0 %v1766
        %1847 = vmatpush.bf16.msra.mxu0 %v1764
        %1848 = vmatpush.bf16.msra.mxu0 %v1762
        %1849 = vmatpush.bf16.msra.mxu0 %v1760
        %1850 = vmatpush.bf16.msra.mxu0 %v1758
        %1851 = vmatpush.bf16.msra.mxu0 %v1756
        %1852 = vmatpush.bf16.msra.mxu0 %v1754
        %1853 = vmatmul.bf16.gmra.mxu0 %v1095
        %v1854 = vpop.f32.mrf.mxu0
        %v1855 = vadd.f32 0.0, %v1854
        %v1856 = vpop.f32.mrf.mxu0
        %v1857 = vadd.f32 0.0, %v1856
        %1858 = vdwg.mxu0
        %1859 = vmatpush.bf16.msra.mxu0 %v1784
        %1860 = vmatpush.bf16.msra.mxu0 %v1782
        %1861 = vmatpush.bf16.msra.mxu0 %v1780
        %1862 = vmatpush.bf16.msra.mxu0 %v1778
        %1863 = vmatpush.bf16.msra.mxu0 %v1776
        %1864 = vmatpush.bf16.msra.mxu0 %v1774
        %1865 = vmatpush.bf16.msra.mxu0 %v1772
        %1866 = vmatpush.bf16.msra.mxu0 %v1770
        %1867 = vmatmul.bf16.gmra.mxu0 %v1096
        %v1868 = vpop.f32.mrf.mxu0
        %v1869 = vadd.f32 %v1855, %v1868
        %v1870 = vpop.f32.mrf.mxu0
        %v1871 = vadd.f32 %v1857, %v1870
        %1872 = vdwg.mxu0
        %v1873 = vpack.c.bf16 %v1411, %v1409
        %v1874 = vpack.c.bf16 %v1627, %v1625
        %v1875 = vpack.c.bf16 %v1843, %v1841
        %1876 = vmatpush.bf16.xpose.msra.mxu0 0
        %1877 = vmatpush.bf16.xpose.msra.mxu0 0
        %1878 = vmatpush.bf16.xpose.msra.mxu0 0
        %1879 = vmatpush.bf16.xpose.msra.mxu0 0
        %1880 = vmatpush.bf16.xpose.msra.mxu0 0
        %1881 = vmatpush.bf16.xpose.msra.mxu0 0
        %1882 = vmatpush.bf16.xpose.msra.mxu0 0
        %1883 = vmatpush.bf16.xpose.msra.mxu0 %v1874
        %1884 = vmatmul.bf16.gmra.mxu0 %v1873
        %v1885 = vpop.f32.mrf.mxu0
        %v1886 = vadd.f32 0.0, %v1885
        %v1887 = vpop.f32.mrf.mxu0
        %v1888 = vadd.f32 0.0, %v1887
        %1889 = vdwg.mxu0
        %v1890 = vsel %vm1016, %v1886, -1e+09
        %v1891 = vsel %vm1017, %v1888, -1e+09
        %vm1892 = vcmask 130048
        %v1893 = vsel %vm1892, %v1890, -inf
        %1894 = vmax.xlane.f32.xlu0 %v1893
        %v1895 = vpop.xlane.xlu0 %1894
        %v1896 = vsel %vm1892, %v1891, -inf
        %1897 = vmax.xlane.f32.xlu0 %v1896
        %v1898 = vpop.xlane.xlu0 %1897
        %v1899 = vsub.f32 %v1890, %v1895
        %v1900 = vsub.f32 %v1891, %v1898
        %v1901 = vmul.f32 %v1899, 1.442695
        %v1902 = vpow.pop %v1901
        %v1903 = vmul.f32 %v1900, 1.442695
        %v1904 = vpow.pop %v1903
        %v1905 = vsel %vm1892, %v1902, 0.0
        %1906 = vadd.xlane.f32.xlu0 %v1905
        %v1907 = vpop.xlane.xlu0 %1906
        %v1908 = vsel %vm1892, %v1904, 0.0
        %1909 = vadd.xlane.f32.xlu0 %v1908
        %v1910 = vpop.xlane.xlu0 %1909
        %v1911 = vrcp.pop %v1907
        %v1912 = vrcp.pop %v1910
        %v1913 = vmul.f32 %v1902, %v1911
        %v1914 = vmul.f32 %v1904, %v1912
        %v1915 = vpack.c.bf16 %v1914, %v1913
        %v1917 = vsel %vm1892, %v1915, 0
        %1919 = vmatpush.bf16.msra.mxu0 0
        %1920 = vmatpush.bf16.msra.mxu0 0
        %1921 = vmatpush.bf16.msra.mxu0 0
        %1922 = vmatpush.bf16.msra.mxu0 0
        %1923 = vmatpush.bf16.msra.mxu0 0
        %1924 = vmatpush.bf16.msra.mxu0 0
        %1925 = vmatpush.bf16.msra.mxu0 0
        %1926 = vmatpush.bf16.msra.mxu0 %v1875
        %1927 = vmatmul.bf16.gmra.mxu0 %v1917
        %v1928 = vpop.f32.mrf.mxu0
        %v1929 = vadd.f32 0.0, %v1928
        %v1930 = vpop.f32.mrf.mxu0
        %v1931 = vadd.f32 0.0, %v1930
        %1932 = vdwg.mxu0
        %v1933 = vpack.c.bf16 %v1931, %v1929
        %v1934 = vpack.c.bf16 %v1439, %v1437
        %v1935 = vpack.c.bf16 %v1655, %v1653
        %v1936 = vpack.c.bf16 %v1871, %v1869
        %1937 = vmatpush.bf16.xpose.msra.mxu0 0
        %1938 = vmatpush.bf16.xpose.msra.mxu0 0
        %1939 = vmatpush.bf16.xpose.msra.mxu0 0
        %1940 = vmatpush.bf16.xpose.msra.mxu0 0
        %1941 = vmatpush.bf16.xpose.msra.mxu0 0
        %1942 = vmatpush.bf16.xpose.msra.mxu0 0
        %1943 = vmatpush.bf16.xpose.msra.mxu0 0
        %1944 = vmatpush.bf16.xpose.msra.mxu0 %v1935
        %1945 = vmatmul.bf16.gmra.mxu0 %v1934
        %v1946 = vpop.f32.mrf.mxu0
        %v1947 = vadd.f32 0.0, %v1946
        %v1948 = vpop.f32.mrf.mxu0
        %v1949 = vadd.f32 0.0, %v1948
        %1950 = vdwg.mxu0
        %v1951 = vsel %vm1016, %v1947, -1e+09
        %v1952 = vsel %vm1017, %v1949, -1e+09
        %v1953 = vsel %vm1892, %v1951, -inf
        %1954 = vmax.xlane.f32.xlu0 %v1953
        %v1955 = vpop.xlane.xlu0 %1954
        %v1956 = vsel %vm1892, %v1952, -inf
        %1957 = vmax.xlane.f32.xlu0 %v1956
        %v1958 = vpop.xlane.xlu0 %1957
        %v1959 = vsub.f32 %v1951, %v1955
        %v1960 = vsub.f32 %v1952, %v1958
        %v1961 = vmul.f32 %v1959, 1.442695
        %v1962 = vpow.pop %v1961
        %v1963 = vmul.f32 %v1960, 1.442695
        %v1964 = vpow.pop %v1963
        %v1965 = vsel %vm1892, %v1962, 0.0
        %1966 = vadd.xlane.f32.xlu0 %v1965
        %v1967 = vpop.xlane.xlu0 %1966
        %v1968 = vsel %vm1892, %v1964, 0.0
        %1969 = vadd.xlane.f32.xlu0 %v1968
        %v1970 = vpop.xlane.xlu0 %1969
        %v1971 = vrcp.pop %v1967
        %v1972 = vrcp.pop %v1970
        %v1973 = vmul.f32 %v1962, %v1971
        %v1974 = vmul.f32 %v1964, %v1972
        %v1975 = vpack.c.bf16 %v1974, %v1973
        %v1977 = vsel %vm1892, %v1975, 0
        %1979 = vmatpush.bf16.msra.mxu0 0
        %1980 = vmatpush.bf16.msra.mxu0 0
        %1981 = vmatpush.bf16.msra.mxu0 0
        %1982 = vmatpush.bf16.msra.mxu0 0
        %1983 = vmatpush.bf16.msra.mxu0 0
        %1984 = vmatpush.bf16.msra.mxu0 0
        %1985 = vmatpush.bf16.msra.mxu0 0
        %1986 = vmatpush.bf16.msra.mxu0 %v1936
        %1987 = vmatmul.bf16.gmra.mxu0 %v1977
        %v1988 = vpop.f32.mrf.mxu0
        %v1989 = vadd.f32 0.0, %v1988
        %v1990 = vpop.f32.mrf.mxu0
        %v1991 = vadd.f32 0.0, %v1990
        %1992 = vdwg.mxu0
        %v1993 = vpack.c.bf16 %v1991, %v1989
        %v2010 = vunpack.c.l.b16 %v1209
        %v2011 = vunpack.c.h.b16 %v1209
        %v2012 = vunpack.c.l.b16 %v1210
        %v2013 = vunpack.c.h.b16 %v1210
        %v2014 = vunpack.c.l.b16 %v1211
        %v2015 = vunpack.c.h.b16 %v1211
        %v2016 = vunpack.c.l.b16 %v1212
        %v2017 = vunpack.c.h.b16 %v1212
        %v2018 = vunpack.c.l.b16 %v1213
        %v2019 = vunpack.c.h.b16 %v1213
        %v2020 = vunpack.c.l.b16 %v1214
        %v2021 = vunpack.c.h.b16 %v1214
        %v2022 = vunpack.c.l.b16 %v1215
        %v2023 = vunpack.c.h.b16 %v1215
        %v2024 = vunpack.c.l.b16 %v1216
        %v2025 = vunpack.c.h.b16 %v1216
        %v2026 = vunpack.c.l.b16 %v1217
        %v2027 = vunpack.c.h.b16 %v1217
        %v2028 = vunpack.c.l.b16 %v1218
        %v2029 = vunpack.c.h.b16 %v1218
        %v2030 = vunpack.c.l.b16 %v1219
        %v2031 = vunpack.c.h.b16 %v1219
        %v2032 = vunpack.c.l.b16 %v1220
        %v2033 = vunpack.c.h.b16 %v1220
        %v2034 = vunpack.c.l.b16 %v1221
        %v2035 = vunpack.c.h.b16 %v1221
        %v2036 = vunpack.c.l.b16 %v1222
        %v2037 = vunpack.c.h.b16 %v1222
        %v2038 = vunpack.c.l.b16 %v1223
        %v2039 = vunpack.c.h.b16 %v1223
        %v2040 = vunpack.c.l.b16 %v1224
        %v2041 = vunpack.c.h.b16 %v1224
        %v2042 = vpack.c.b16 %v2012, %v2010
        %v2043 = vpack.c.b16 %v2013, %v2011
        %v2044 = vpack.c.b16 %v2016, %v2014
        %v2045 = vpack.c.b16 %v2017, %v2015
        %v2046 = vpack.c.b16 %v2020, %v2018
        %v2047 = vpack.c.b16 %v2021, %v2019
        %v2048 = vpack.c.b16 %v2024, %v2022
        %v2049 = vpack.c.b16 %v2025, %v2023
        %v2050 = vpack.c.b16 %v2028, %v2026
        %v2051 = vpack.c.b16 %v2029, %v2027
        %v2052 = vpack.c.b16 %v2032, %v2030
        %v2053 = vpack.c.b16 %v2033, %v2031
        %v2054 = vpack.c.b16 %v2036, %v2034
        %v2055 = vpack.c.b16 %v2037, %v2035
        %v2056 = vpack.c.b16 %v2040, %v2038
        %v2057 = vpack.c.b16 %v2041, %v2039
        %2074 = vmatpush.bf16.msra.mxu0 %v2056
        %2075 = vmatpush.bf16.msra.mxu0 %v2054
        %2076 = vmatpush.bf16.msra.mxu0 %v2052
        %2077 = vmatpush.bf16.msra.mxu0 %v2050
        %2078 = vmatpush.bf16.msra.mxu0 %v2048
        %2079 = vmatpush.bf16.msra.mxu0 %v2046
        %2080 = vmatpush.bf16.msra.mxu0 %v2044
        %2081 = vmatpush.bf16.msra.mxu0 %v2042
        %2082 = vmatmul.bf16.gmra.mxu0 %v1993
        %v2083 = vpop.f32.mrf.mxu0
        %v2084 = vadd.f32 0.0, %v2083
        %v2085 = vpop.f32.mrf.mxu0
        %v2086 = vadd.f32 0.0, %v2085
        %2087 = vdwg.mxu0
        %2088 = vmatpush.bf16.msra.mxu0 %v2057
        %2089 = vmatpush.bf16.msra.mxu0 %v2055
        %2090 = vmatpush.bf16.msra.mxu0 %v2053
        %2091 = vmatpush.bf16.msra.mxu0 %v2051
        %2092 = vmatpush.bf16.msra.mxu0 %v2049
        %2093 = vmatpush.bf16.msra.mxu0 %v2047
        %2094 = vmatpush.bf16.msra.mxu0 %v2045
        %2095 = vmatpush.bf16.msra.mxu0 %v2043
        %2096 = vmatmul.bf16.gmra.mxu0 %v1993
        %v2097 = vpop.f32.mrf.mxu0
        %v2098 = vadd.f32 0.0, %v2097
        %v2099 = vpop.f32.mrf.mxu0
        %v2100 = vadd.f32 0.0, %v2099
        %2101 = vdwg.mxu0
        %v2118 = vunpack.c.l.b16 %v1193
        %v2119 = vunpack.c.h.b16 %v1193
        %v2120 = vunpack.c.l.b16 %v1194
        %v2121 = vunpack.c.h.b16 %v1194
        %v2122 = vunpack.c.l.b16 %v1195
        %v2123 = vunpack.c.h.b16 %v1195
        %v2124 = vunpack.c.l.b16 %v1196
        %v2125 = vunpack.c.h.b16 %v1196
        %v2126 = vunpack.c.l.b16 %v1197
        %v2127 = vunpack.c.h.b16 %v1197
        %v2128 = vunpack.c.l.b16 %v1198
        %v2129 = vunpack.c.h.b16 %v1198
        %v2130 = vunpack.c.l.b16 %v1199
        %v2131 = vunpack.c.h.b16 %v1199
        %v2132 = vunpack.c.l.b16 %v1200
        %v2133 = vunpack.c.h.b16 %v1200
        %v2134 = vunpack.c.l.b16 %v1201
        %v2135 = vunpack.c.h.b16 %v1201
        %v2136 = vunpack.c.l.b16 %v1202
        %v2137 = vunpack.c.h.b16 %v1202
        %v2138 = vunpack.c.l.b16 %v1203
        %v2139 = vunpack.c.h.b16 %v1203
        %v2140 = vunpack.c.l.b16 %v1204
        %v2141 = vunpack.c.h.b16 %v1204
        %v2142 = vunpack.c.l.b16 %v1205
        %v2143 = vunpack.c.h.b16 %v1205
        %v2144 = vunpack.c.l.b16 %v1206
        %v2145 = vunpack.c.h.b16 %v1206
        %v2146 = vunpack.c.l.b16 %v1207
        %v2147 = vunpack.c.h.b16 %v1207
        %v2148 = vunpack.c.l.b16 %v1208
        %v2149 = vunpack.c.h.b16 %v1208
        %v2150 = vpack.c.b16 %v2120, %v2118
        %v2151 = vpack.c.b16 %v2121, %v2119
        %v2152 = vpack.c.b16 %v2124, %v2122
        %v2153 = vpack.c.b16 %v2125, %v2123
        %v2154 = vpack.c.b16 %v2128, %v2126
        %v2155 = vpack.c.b16 %v2129, %v2127
        %v2156 = vpack.c.b16 %v2132, %v2130
        %v2157 = vpack.c.b16 %v2133, %v2131
        %v2158 = vpack.c.b16 %v2136, %v2134
        %v2159 = vpack.c.b16 %v2137, %v2135
        %v2160 = vpack.c.b16 %v2140, %v2138
        %v2161 = vpack.c.b16 %v2141, %v2139
        %v2162 = vpack.c.b16 %v2144, %v2142
        %v2163 = vpack.c.b16 %v2145, %v2143
        %v2164 = vpack.c.b16 %v2148, %v2146
        %v2165 = vpack.c.b16 %v2149, %v2147
        %2182 = vmatpush.bf16.msra.mxu0 %v2164
        %2183 = vmatpush.bf16.msra.mxu0 %v2162
        %2184 = vmatpush.bf16.msra.mxu0 %v2160
        %2185 = vmatpush.bf16.msra.mxu0 %v2158
        %2186 = vmatpush.bf16.msra.mxu0 %v2156
        %2187 = vmatpush.bf16.msra.mxu0 %v2154
        %2188 = vmatpush.bf16.msra.mxu0 %v2152
        %2189 = vmatpush.bf16.msra.mxu0 %v2150
        %2190 = vmatmul.bf16.gmra.mxu0 %v1933
        %v2191 = vpop.f32.mrf.mxu0
        %v2192 = vadd.f32 %v2084, %v2191
        %v2193 = vpop.f32.mrf.mxu0
        %v2194 = vadd.f32 %v2086, %v2193
        %2195 = vdwg.mxu0
        %2196 = vmatpush.bf16.msra.mxu0 %v2165
        %2197 = vmatpush.bf16.msra.mxu0 %v2163
        %2198 = vmatpush.bf16.msra.mxu0 %v2161
        %2199 = vmatpush.bf16.msra.mxu0 %v2159
        %2200 = vmatpush.bf16.msra.mxu0 %v2157
        %2201 = vmatpush.bf16.msra.mxu0 %v2155
        %2202 = vmatpush.bf16.msra.mxu0 %v2153
        %2203 = vmatpush.bf16.msra.mxu0 %v2151
        %2204 = vmatmul.bf16.gmra.mxu0 %v1933
        %v2205 = vpop.f32.mrf.mxu0
        %v2206 = vadd.f32 %v2098, %v2205
        %v2207 = vpop.f32.mrf.mxu0
        %v2208 = vadd.f32 %v2100, %v2207
        %2209 = vdwg.mxu0
        %v2210 = vadd.f32 %v1000, %v2192
        %v2211 = vadd.f32 %v1001, %v2206
        %v2212 = vadd.f32 %v1002, %v2194
        %v2213 = vadd.f32 %v1003, %v2208
        %v2214 = vld [vmem:[%s976] sm:$0x3]
        %v2215 = vld [vmem:[%s980] sm:$0x3]
        %v2216 = vadd.f32 %v2210, %v2211
        %2217 = vadd.xlane.f32.xlu0 %v2216
        %v2218 = vpop.xlane.xlu0 %2217
        %v2219 = vadd.f32 %v2212, %v2213
        %2220 = vadd.xlane.f32.xlu0 %v2219
        %v2221 = vpop.xlane.xlu0 %2220
        %v2222 = vmul.f32 %v2218, %v1032
        %v2223 = vmul.f32 %v2221, %v1032
        %v2224 = vsub.f32 %v2210, %v2222
        %v2225 = vsub.f32 %v2211, %v2222
        %v2226 = vsub.f32 %v2212, %v2223
        %v2227 = vsub.f32 %v2213, %v2223
        %v2228 = vmul.f32 %v2224, %v2224
        %v2229 = vmul.f32 %v2225, %v2225
        %v2230 = vmul.f32 %v2226, %v2226
        %v2231 = vmul.f32 %v2227, %v2227
        %v2232 = vadd.f32 %v2228, %v2229
        %2233 = vadd.xlane.f32.xlu0 %v2232
        %v2234 = vpop.xlane.xlu0 %2233
        %v2235 = vadd.f32 %v2230, %v2231
        %2236 = vadd.xlane.f32.xlu0 %v2235
        %v2237 = vpop.xlane.xlu0 %2236
        %v2238 = vmul.f32 %v2234, %v1032
        %v2239 = vmul.f32 %v2237, %v1032
        %v2240 = vadd.f32 %v2238, 1e-05
        %v2241 = vadd.f32 %v2239, 1e-05
        %v2242 = vrsqrt.pop %v2240
        %v2243 = vmul.f32 %v2242, %v2240
        %v2244 = vmul.f32 %v2243, %v2242
        %v2245 = vmul.f32 0.5, %v2244
        %v2246 = vsub.f32 1.5, %v2245
        %v2247 = vmul.f32 %v2242, %v2246
        %vm2248 = vweird.f32 %v2240
        %vm2249 = vweird.f32 %v2242
        %vm2250 = vmor %vm2248, %vm2249
        %v2251 = vsel %vm2250, %v2242, %v2247
        %v2252 = vrsqrt.pop %v2241
        %v2253 = vmul.f32 %v2252, %v2241
        %v2254 = vmul.f32 %v2253, %v2252
        %v2255 = vmul.f32 0.5, %v2254
        %v2256 = vsub.f32 1.5, %v2255
        %v2257 = vmul.f32 %v2252, %v2256
        %vm2258 = vweird.f32 %v2241
        %vm2259 = vweird.f32 %v2252
        %vm2260 = vmor %vm2258, %vm2259
        %v2261 = vsel %vm2260, %v2252, %v2257
        %v2262 = vmul.f32 %v2224, %v2251
        %v2263 = vmul.f32 %v2225, %v2251
        %v2264 = vmul.f32 %v2226, %v2261
        %v2265 = vmul.f32 %v2227, %v2261
        %v2267 = vperm.slane %v2214, 0
        %v2268 = vperm.slane %v2214, 1
        %v2271 = vmul.f32 %v2262, %v2267
        %v2272 = vmul.f32 %v2263, %v2268
        %v2273 = vmul.f32 %v2264, %v2267
        %v2274 = vmul.f32 %v2265, %v2268
        %v2276 = vperm.slane %v2215, 0
        %v2277 = vperm.slane %v2215, 1
        %v2280 = vadd.f32 %v2271, %v2276
        %v2281 = vadd.f32 %v2272, %v2277
        %v2282 = vadd.f32 %v2273, %v2276
        %v2283 = vadd.f32 %v2274, %v2277
        %v2284 = vpack.c.bf16 %v2282, %v2280
        %v2285 = vpack.c.bf16 %v2283, %v2281
        %v2286 = vld [vmem:[%s828] sm:$0xff]
        %v2287 = vld [vmem:[%s828 + $0x8] sm:$0xff]
        %v2288 = vld [vmem:[%s828 + $0x10] sm:$0xff]
        %v2289 = vld [vmem:[%s828 + $0x18] sm:$0xff]
        %v2290 = vld [vmem:[%s828 + $0x20] sm:$0xff]
        %v2291 = vld [vmem:[%s828 + $0x28] sm:$0xff]
        %v2292 = vld [vmem:[%s828 + $0x30] sm:$0xff]
        %v2293 = vld [vmem:[%s828 + $0x38] sm:$0xff]
        %v2294 = vld [vmem:[%s828 + $0x40] sm:$0xff]
        %v2295 = vld [vmem:[%s828 + $0x48] sm:$0xff]
        %v2296 = vld [vmem:[%s828 + $0x50] sm:$0xff]
        %v2297 = vld [vmem:[%s828 + $0x58] sm:$0xff]
        %v2298 = vld [vmem:[%s828 + $0x60] sm:$0xff]
        %v2299 = vld [vmem:[%s828 + $0x68] sm:$0xff]
        %v2300 = vld [vmem:[%s828 + $0x70] sm:$0xff]
        %v2301 = vld [vmem:[%s828 + $0x78] sm:$0xff]
        %v2302 = vld [vmem:[%s828 + $0x80] sm:$0xff]
        %v2303 = vld [vmem:[%s828 + $0x88] sm:$0xff]
        %v2304 = vld [vmem:[%s828 + $0x90] sm:$0xff]
        %v2305 = vld [vmem:[%s828 + $0x98] sm:$0xff]
        %v2306 = vld [vmem:[%s828 + $0xa0] sm:$0xff]
        %v2307 = vld [vmem:[%s828 + $0xa8] sm:$0xff]
        %v2308 = vld [vmem:[%s828 + $0xb0] sm:$0xff]
        %v2309 = vld [vmem:[%s828 + $0xb8] sm:$0xff]
        %v2310 = vld [vmem:[%s828 + $0xc0] sm:$0xff]
        %v2311 = vld [vmem:[%s828 + $0xc8] sm:$0xff]
        %v2312 = vld [vmem:[%s828 + $0xd0] sm:$0xff]
        %v2313 = vld [vmem:[%s828 + $0xd8] sm:$0xff]
        %v2314 = vld [vmem:[%s828 + $0xe0] sm:$0xff]
        %v2315 = vld [vmem:[%s828 + $0xe8] sm:$0xff]
        %v2316 = vld [vmem:[%s828 + $0xf0] sm:$0xff]
        %v2317 = vld [vmem:[%s828 + $0xf8] sm:$0xff]
        %v2318 = vld [vmem:[%s828 + $0x100] sm:$0xff]
        %v2319 = vld [vmem:[%s828 + $0x108] sm:$0xff]
        %v2320 = vld [vmem:[%s828 + $0x110] sm:$0xff]
        %v2321 = vld [vmem:[%s828 + $0x118] sm:$0xff]
        %v2322 = vld [vmem:[%s828 + $0x120] sm:$0xff]
        %v2323 = vld [vmem:[%s828 + $0x128] sm:$0xff]
        %v2324 = vld [vmem:[%s828 + $0x130] sm:$0xff]
        %v2325 = vld [vmem:[%s828 + $0x138] sm:$0xff]
        %v2326 = vld [vmem:[%s828 + $0x140] sm:$0xff]
        %v2327 = vld [vmem:[%s828 + $0x148] sm:$0xff]
        %v2328 = vld [vmem:[%s828 + $0x150] sm:$0xff]
        %v2329 = vld [vmem:[%s828 + $0x158] sm:$0xff]
        %v2330 = vld [vmem:[%s828 + $0x160] sm:$0xff]
        %v2331 = vld [vmem:[%s828 + $0x168] sm:$0xff]
        %v2332 = vld [vmem:[%s828 + $0x170] sm:$0xff]
        %v2333 = vld [vmem:[%s828 + $0x178] sm:$0xff]
        %v2334 = vld [vmem:[%s828 + $0x180] sm:$0xff]
        %v2335 = vld [vmem:[%s828 + $0x188] sm:$0xff]
        %v2336 = vld [vmem:[%s828 + $0x190] sm:$0xff]
        %v2337 = vld [vmem:[%s828 + $0x198] sm:$0xff]
        %v2338 = vld [vmem:[%s828 + $0x1a0] sm:$0xff]
        %v2339 = vld [vmem:[%s828 + $0x1a8] sm:$0xff]
        %v2340 = vld [vmem:[%s828 + $0x1b0] sm:$0xff]
        %v2341 = vld [vmem:[%s828 + $0x1b8] sm:$0xff]
        %v2342 = vld [vmem:[%s828 + $0x1c0] sm:$0xff]
        %v2343 = vld [vmem:[%s828 + $0x1c8] sm:$0xff]
        %v2344 = vld [vmem:[%s828 + $0x1d0] sm:$0xff]
        %v2345 = vld [vmem:[%s828 + $0x1d8] sm:$0xff]
        %v2346 = vld [vmem:[%s828 + $0x1e0] sm:$0xff]
        %v2347 = vld [vmem:[%s828 + $0x1e8] sm:$0xff]
        %v2348 = vld [vmem:[%s828 + $0x1f0] sm:$0xff]
        %v2349 = vld [vmem:[%s828 + $0x1f8] sm:$0xff]
        %v2414 = vunpack.c.l.b16 %v2286
        %v2415 = vunpack.c.h.b16 %v2286
        %v2416 = vunpack.c.l.b16 %v2287
        %v2417 = vunpack.c.h.b16 %v2287
        %v2418 = vunpack.c.l.b16 %v2288
        %v2419 = vunpack.c.h.b16 %v2288
        %v2420 = vunpack.c.l.b16 %v2289
        %v2421 = vunpack.c.h.b16 %v2289
        %v2422 = vunpack.c.l.b16 %v2290
        %v2423 = vunpack.c.h.b16 %v2290
        %v2424 = vunpack.c.l.b16 %v2291
        %v2425 = vunpack.c.h.b16 %v2291
        %v2426 = vunpack.c.l.b16 %v2292
        %v2427 = vunpack.c.h.b16 %v2292
        %v2428 = vunpack.c.l.b16 %v2293
        %v2429 = vunpack.c.h.b16 %v2293
        %v2430 = vunpack.c.l.b16 %v2294
        %v2431 = vunpack.c.h.b16 %v2294
        %v2432 = vunpack.c.l.b16 %v2295
        %v2433 = vunpack.c.h.b16 %v2295
        %v2434 = vunpack.c.l.b16 %v2296
        %v2435 = vunpack.c.h.b16 %v2296
        %v2436 = vunpack.c.l.b16 %v2297
        %v2437 = vunpack.c.h.b16 %v2297
        %v2438 = vunpack.c.l.b16 %v2298
        %v2439 = vunpack.c.h.b16 %v2298
        %v2440 = vunpack.c.l.b16 %v2299
        %v2441 = vunpack.c.h.b16 %v2299
        %v2442 = vunpack.c.l.b16 %v2300
        %v2443 = vunpack.c.h.b16 %v2300
        %v2444 = vunpack.c.l.b16 %v2301
        %v2445 = vunpack.c.h.b16 %v2301
        %v2446 = vunpack.c.l.b16 %v2302
        %v2447 = vunpack.c.h.b16 %v2302
        %v2448 = vunpack.c.l.b16 %v2303
        %v2449 = vunpack.c.h.b16 %v2303
        %v2450 = vunpack.c.l.b16 %v2304
        %v2451 = vunpack.c.h.b16 %v2304
        %v2452 = vunpack.c.l.b16 %v2305
        %v2453 = vunpack.c.h.b16 %v2305
        %v2454 = vunpack.c.l.b16 %v2306
        %v2455 = vunpack.c.h.b16 %v2306
        %v2456 = vunpack.c.l.b16 %v2307
        %v2457 = vunpack.c.h.b16 %v2307
        %v2458 = vunpack.c.l.b16 %v2308
        %v2459 = vunpack.c.h.b16 %v2308
        %v2460 = vunpack.c.l.b16 %v2309
        %v2461 = vunpack.c.h.b16 %v2309
        %v2462 = vunpack.c.l.b16 %v2310
        %v2463 = vunpack.c.h.b16 %v2310
        %v2464 = vunpack.c.l.b16 %v2311
        %v2465 = vunpack.c.h.b16 %v2311
        %v2466 = vunpack.c.l.b16 %v2312
        %v2467 = vunpack.c.h.b16 %v2312
        %v2468 = vunpack.c.l.b16 %v2313
        %v2469 = vunpack.c.h.b16 %v2313
        %v2470 = vunpack.c.l.b16 %v2314
        %v2471 = vunpack.c.h.b16 %v2314
        %v2472 = vunpack.c.l.b16 %v2315
        %v2473 = vunpack.c.h.b16 %v2315
        %v2474 = vunpack.c.l.b16 %v2316
        %v2475 = vunpack.c.h.b16 %v2316
        %v2476 = vunpack.c.l.b16 %v2317
        %v2477 = vunpack.c.h.b16 %v2317
        %v2478 = vunpack.c.l.b16 %v2318
        %v2479 = vunpack.c.h.b16 %v2318
        %v2480 = vunpack.c.l.b16 %v2319
        %v2481 = vunpack.c.h.b16 %v2319
        %v2482 = vunpack.c.l.b16 %v2320
        %v2483 = vunpack.c.h.b16 %v2320
        %v2484 = vunpack.c.l.b16 %v2321
        %v2485 = vunpack.c.h.b16 %v2321
        %v2486 = vunpack.c.l.b16 %v2322
        %v2487 = vunpack.c.h.b16 %v2322
        %v2488 = vunpack.c.l.b16 %v2323
        %v2489 = vunpack.c.h.b16 %v2323
        %v2490 = vunpack.c.l.b16 %v2324
        %v2491 = vunpack.c.h.b16 %v2324
        %v2492 = vunpack.c.l.b16 %v2325
        %v2493 = vunpack.c.h.b16 %v2325
        %v2494 = vunpack.c.l.b16 %v2326
        %v2495 = vunpack.c.h.b16 %v2326
        %v2496 = vunpack.c.l.b16 %v2327
        %v2497 = vunpack.c.h.b16 %v2327
        %v2498 = vunpack.c.l.b16 %v2328
        %v2499 = vunpack.c.h.b16 %v2328
        %v2500 = vunpack.c.l.b16 %v2329
        %v2501 = vunpack.c.h.b16 %v2329
        %v2502 = vunpack.c.l.b16 %v2330
        %v2503 = vunpack.c.h.b16 %v2330
        %v2504 = vunpack.c.l.b16 %v2331
        %v2505 = vunpack.c.h.b16 %v2331
        %v2506 = vunpack.c.l.b16 %v2332
        %v2507 = vunpack.c.h.b16 %v2332
        %v2508 = vunpack.c.l.b16 %v2333
        %v2509 = vunpack.c.h.b16 %v2333
        %v2510 = vunpack.c.l.b16 %v2334
        %v2511 = vunpack.c.h.b16 %v2334
        %v2512 = vunpack.c.l.b16 %v2335
        %v2513 = vunpack.c.h.b16 %v2335
        %v2514 = vunpack.c.l.b16 %v2336
        %v2515 = vunpack.c.h.b16 %v2336
        %v2516 = vunpack.c.l.b16 %v2337
        %v2517 = vunpack.c.h.b16 %v2337
        %v2518 = vunpack.c.l.b16 %v2338
        %v2519 = vunpack.c.h.b16 %v2338
        %v2520 = vunpack.c.l.b16 %v2339
        %v2521 = vunpack.c.h.b16 %v2339
        %v2522 = vunpack.c.l.b16 %v2340
        %v2523 = vunpack.c.h.b16 %v2340
        %v2524 = vunpack.c.l.b16 %v2341
        %v2525 = vunpack.c.h.b16 %v2341
        %v2526 = vunpack.c.l.b16 %v2342
        %v2527 = vunpack.c.h.b16 %v2342
        %v2528 = vunpack.c.l.b16 %v2343
        %v2529 = vunpack.c.h.b16 %v2343
        %v2530 = vunpack.c.l.b16 %v2344
        %v2531 = vunpack.c.h.b16 %v2344
        %v2532 = vunpack.c.l.b16 %v2345
        %v2533 = vunpack.c.h.b16 %v2345
        %v2534 = vunpack.c.l.b16 %v2346
        %v2535 = vunpack.c.h.b16 %v2346
        %v2536 = vunpack.c.l.b16 %v2347
        %v2537 = vunpack.c.h.b16 %v2347
        %v2538 = vunpack.c.l.b16 %v2348
        %v2539 = vunpack.c.h.b16 %v2348
        %v2540 = vunpack.c.l.b16 %v2349
        %v2541 = vunpack.c.h.b16 %v2349
        %v2542 = vpack.c.b16 %v2418, %v2414
        %v2543 = vpack.c.b16 %v2419, %v2415
        %v2544 = vpack.c.b16 %v2420, %v2416
        %v2545 = vpack.c.b16 %v2421, %v2417
        %v2546 = vpack.c.b16 %v2426, %v2422
        %v2547 = vpack.c.b16 %v2427, %v2423
        %v2548 = vpack.c.b16 %v2428, %v2424
        %v2549 = vpack.c.b16 %v2429, %v2425
        %v2550 = vpack.c.b16 %v2434, %v2430
        %v2551 = vpack.c.b16 %v2435, %v2431
        %v2552 = vpack.c.b16 %v2436, %v2432
        %v2553 = vpack.c.b16 %v2437, %v2433
        %v2554 = vpack.c.b16 %v2442, %v2438
        %v2555 = vpack.c.b16 %v2443, %v2439
        %v2556 = vpack.c.b16 %v2444, %v2440
        %v2557 = vpack.c.b16 %v2445, %v2441
        %v2558 = vpack.c.b16 %v2450, %v2446
        %v2559 = vpack.c.b16 %v2451, %v2447
        %v2560 = vpack.c.b16 %v2452, %v2448
        %v2561 = vpack.c.b16 %v2453, %v2449
        %v2562 = vpack.c.b16 %v2458, %v2454
        %v2563 = vpack.c.b16 %v2459, %v2455
        %v2564 = vpack.c.b16 %v2460, %v2456
        %v2565 = vpack.c.b16 %v2461, %v2457
        %v2566 = vpack.c.b16 %v2466, %v2462
        %v2567 = vpack.c.b16 %v2467, %v2463
        %v2568 = vpack.c.b16 %v2468, %v2464
        %v2569 = vpack.c.b16 %v2469, %v2465
        %v2570 = vpack.c.b16 %v2474, %v2470
        %v2571 = vpack.c.b16 %v2475, %v2471
        %v2572 = vpack.c.b16 %v2476, %v2472
        %v2573 = vpack.c.b16 %v2477, %v2473
        %v2574 = vpack.c.b16 %v2482, %v2478
        %v2575 = vpack.c.b16 %v2483, %v2479
        %v2576 = vpack.c.b16 %v2484, %v2480
        %v2577 = vpack.c.b16 %v2485, %v2481
        %v2578 = vpack.c.b16 %v2490, %v2486
        %v2579 = vpack.c.b16 %v2491, %v2487
        %v2580 = vpack.c.b16 %v2492, %v2488
        %v2581 = vpack.c.b16 %v2493, %v2489
        %v2582 = vpack.c.b16 %v2498, %v2494
        %v2583 = vpack.c.b16 %v2499, %v2495
        %v2584 = vpack.c.b16 %v2500, %v2496
        %v2585 = vpack.c.b16 %v2501, %v2497
        %v2586 = vpack.c.b16 %v2506, %v2502
        %v2587 = vpack.c.b16 %v2507, %v2503
        %v2588 = vpack.c.b16 %v2508, %v2504
        %v2589 = vpack.c.b16 %v2509, %v2505
        %v2590 = vpack.c.b16 %v2514, %v2510
        %v2591 = vpack.c.b16 %v2515, %v2511
        %v2592 = vpack.c.b16 %v2516, %v2512
        %v2593 = vpack.c.b16 %v2517, %v2513
        %v2594 = vpack.c.b16 %v2522, %v2518
        %v2595 = vpack.c.b16 %v2523, %v2519
        %v2596 = vpack.c.b16 %v2524, %v2520
        %v2597 = vpack.c.b16 %v2525, %v2521
        %v2598 = vpack.c.b16 %v2530, %v2526
        %v2599 = vpack.c.b16 %v2531, %v2527
        %v2600 = vpack.c.b16 %v2532, %v2528
        %v2601 = vpack.c.b16 %v2533, %v2529
        %v2602 = vpack.c.b16 %v2538, %v2534
        %v2603 = vpack.c.b16 %v2539, %v2535
        %v2604 = vpack.c.b16 %v2540, %v2536
        %v2605 = vpack.c.b16 %v2541, %v2537
        %2670 = vmatpush.bf16.msra.mxu0 %v2570
        %2671 = vmatpush.bf16.msra.mxu0 %v2566
        %2672 = vmatpush.bf16.msra.mxu0 %v2562
        %2673 = vmatpush.bf16.msra.mxu0 %v2558
        %2674 = vmatpush.bf16.msra.mxu0 %v2554
        %2675 = vmatpush.bf16.msra.mxu0 %v2550
        %2676 = vmatpush.bf16.msra.mxu0 %v2546
        %2677 = vmatpush.bf16.msra.mxu0 %v2542
        %2678 = vmatmul.bf16.gmra.mxu0 %v2284
        %v2679 = vpop.f32.mrf.mxu0
        %v2680 = vadd.f32 0.0, %v2679
        %v2681 = vpop.f32.mrf.mxu0
        %v2682 = vadd.f32 0.0, %v2681
        %2683 = vdwg.mxu0
        %2684 = vmatpush.bf16.msra.mxu0 %v2602
        %2685 = vmatpush.bf16.msra.mxu0 %v2598
        %2686 = vmatpush.bf16.msra.mxu0 %v2594
        %2687 = vmatpush.bf16.msra.mxu0 %v2590
        %2688 = vmatpush.bf16.msra.mxu0 %v2586
        %2689 = vmatpush.bf16.msra.mxu0 %v2582
        %2690 = vmatpush.bf16.msra.mxu0 %v2578
        %2691 = vmatpush.bf16.msra.mxu0 %v2574
        %2692 = vmatmul.bf16.gmra.mxu0 %v2285
        %v2693 = vpop.f32.mrf.mxu0
        %v2694 = vadd.f32 %v2680, %v2693
        %v2695 = vpop.f32.mrf.mxu0
        %v2696 = vadd.f32 %v2682, %v2695
        %2697 = vdwg.mxu0
        %2698 = vmatpush.bf16.msra.mxu0 %v2571
        %2699 = vmatpush.bf16.msra.mxu0 %v2567
        %2700 = vmatpush.bf16.msra.mxu0 %v2563
        %2701 = vmatpush.bf16.msra.mxu0 %v2559
        %2702 = vmatpush.bf16.msra.mxu0 %v2555
        %2703 = vmatpush.bf16.msra.mxu0 %v2551
        %2704 = vmatpush.bf16.msra.mxu0 %v2547
        %2705 = vmatpush.bf16.msra.mxu0 %v2543
        %2706 = vmatmul.bf16.gmra.mxu0 %v2284
        %v2707 = vpop.f32.mrf.mxu0
        %v2708 = vadd.f32 0.0, %v2707
        %v2709 = vpop.f32.mrf.mxu0
        %v2710 = vadd.f32 0.0, %v2709
        %2711 = vdwg.mxu0
        %2712 = vmatpush.bf16.msra.mxu0 %v2603
        %2713 = vmatpush.bf16.msra.mxu0 %v2599
        %2714 = vmatpush.bf16.msra.mxu0 %v2595
        %2715 = vmatpush.bf16.msra.mxu0 %v2591
        %2716 = vmatpush.bf16.msra.mxu0 %v2587
        %2717 = vmatpush.bf16.msra.mxu0 %v2583
        %2718 = vmatpush.bf16.msra.mxu0 %v2579
        %2719 = vmatpush.bf16.msra.mxu0 %v2575
        %2720 = vmatmul.bf16.gmra.mxu0 %v2285
        %v2721 = vpop.f32.mrf.mxu0
        %v2722 = vadd.f32 %v2708, %v2721
        %v2723 = vpop.f32.mrf.mxu0
        %v2724 = vadd.f32 %v2710, %v2723
        %2725 = vdwg.mxu0
        %2726 = vmatpush.bf16.msra.mxu0 %v2572
        %2727 = vmatpush.bf16.msra.mxu0 %v2568
        %2728 = vmatpush.bf16.msra.mxu0 %v2564
        %2729 = vmatpush.bf16.msra.mxu0 %v2560
        %2730 = vmatpush.bf16.msra.mxu0 %v2556
        %2731 = vmatpush.bf16.msra.mxu0 %v2552
        %2732 = vmatpush.bf16.msra.mxu0 %v2548
        %2733 = vmatpush.bf16.msra.mxu0 %v2544
        %2734 = vmatmul.bf16.gmra.mxu0 %v2284
        %v2735 = vpop.f32.mrf.mxu0
        %v2736 = vadd.f32 0.0, %v2735
        %v2737 = vpop.f32.mrf.mxu0
        %v2738 = vadd.f32 0.0, %v2737
        %2739 = vdwg.mxu0
        %2740 = vmatpush.bf16.msra.mxu0 %v2604
        %2741 = vmatpush.bf16.msra.mxu0 %v2600
        %2742 = vmatpush.bf16.msra.mxu0 %v2596
        %2743 = vmatpush.bf16.msra.mxu0 %v2592
        %2744 = vmatpush.bf16.msra.mxu0 %v2588
        %2745 = vmatpush.bf16.msra.mxu0 %v2584
        %2746 = vmatpush.bf16.msra.mxu0 %v2580
        %2747 = vmatpush.bf16.msra.mxu0 %v2576
        %2748 = vmatmul.bf16.gmra.mxu0 %v2285
        %v2749 = vpop.f32.mrf.mxu0
        %v2750 = vadd.f32 %v2736, %v2749
        %v2751 = vpop.f32.mrf.mxu0
        %v2752 = vadd.f32 %v2738, %v2751
        %2753 = vdwg.mxu0
        %2754 = vmatpush.bf16.msra.mxu0 %v2573
        %2755 = vmatpush.bf16.msra.mxu0 %v2569
        %2756 = vmatpush.bf16.msra.mxu0 %v2565
        %2757 = vmatpush.bf16.msra.mxu0 %v2561
        %2758 = vmatpush.bf16.msra.mxu0 %v2557
        %2759 = vmatpush.bf16.msra.mxu0 %v2553
        %2760 = vmatpush.bf16.msra.mxu0 %v2549
        %2761 = vmatpush.bf16.msra.mxu0 %v2545
        %2762 = vmatmul.bf16.gmra.mxu0 %v2284
        %v2763 = vpop.f32.mrf.mxu0
        %v2764 = vadd.f32 0.0, %v2763
        %v2765 = vpop.f32.mrf.mxu0
        %v2766 = vadd.f32 0.0, %v2765
        %2767 = vdwg.mxu0
        %2768 = vmatpush.bf16.msra.mxu0 %v2605
        %2769 = vmatpush.bf16.msra.mxu0 %v2601
        %2770 = vmatpush.bf16.msra.mxu0 %v2597
        %2771 = vmatpush.bf16.msra.mxu0 %v2593
        %2772 = vmatpush.bf16.msra.mxu0 %v2589
        %2773 = vmatpush.bf16.msra.mxu0 %v2585
        %2774 = vmatpush.bf16.msra.mxu0 %v2581
        %2775 = vmatpush.bf16.msra.mxu0 %v2577
        %2776 = vmatmul.bf16.gmra.mxu0 %v2285
        %v2777 = vpop.f32.mrf.mxu0
        %v2778 = vadd.f32 %v2764, %v2777
        %v2779 = vpop.f32.mrf.mxu0
        %v2780 = vadd.f32 %v2766, %v2779
        %2781 = vdwg.mxu0
        %v2782 = vmul.f32 %v2694, 0.5
        %v2783 = vmul.f32 %v2722, 0.5
        %v2784 = vmul.f32 %v2750, 0.5
        %v2785 = vmul.f32 %v2778, 0.5
        %v2786 = vmul.f32 %v2696, 0.5
        %v2787 = vmul.f32 %v2724, 0.5
        %v2788 = vmul.f32 %v2752, 0.5
        %v2789 = vmul.f32 %v2780, 0.5
        %v2790 = vmul.f32 %v2694, 0.044715
        %v2791 = vmul.f32 %v2722, 0.044715
        %v2792 = vmul.f32 %v2750, 0.044715
        %v2793 = vmul.f32 %v2778, 0.044715
        %v2794 = vmul.f32 %v2696, 0.044715
        %v2795 = vmul.f32 %v2724, 0.044715
        %v2796 = vmul.f32 %v2752, 0.044715
        %v2797 = vmul.f32 %v2780, 0.044715
        %v2798 = vmul.f32 %v2790, %v2694
        %v2799 = vmul.f32 %v2791, %v2722
        %v2800 = vmul.f32 %v2792, %v2750
        %v2801 = vmul.f32 %v2793, %v2778
        %v2802 = vmul.f32 %v2794, %v2696
        %v2803 = vmul.f32 %v2795, %v2724
        %v2804 = vmul.f32 %v2796, %v2752
        %v2805 = vmul.f32 %v2797, %v2780
        %v2806 = vmul.f32 %v2798, %v2694
        %v2807 = vmul.f32 %v2799, %v2722
        %v2808 = vmul.f32 %v2800, %v2750
        %v2809 = vmul.f32 %v2801, %v2778
        %v2810 = vmul.f32 %v2802, %v2696
        %v2811 = vmul.f32 %v2803, %v2724
        %v2812 = vmul.f32 %v2804, %v2752
        %v2813 = vmul.f32 %v2805, %v2780
        %v2814 = vadd.f32 %v2694, %v2806
        %v2815 = vadd.f32 %v2722, %v2807
        %v2816 = vadd.f32 %v2750, %v2808
        %v2817 = vadd.f32 %v2778, %v2809
        %v2818 = vadd.f32 %v2696, %v2810
        %v2819 = vadd.f32 %v2724, %v2811
        %v2820 = vadd.f32 %v2752, %v2812
        %v2821 = vadd.f32 %v2780, %v2813
        %v2822 = vmul.f32 %v2814, 0.7978846
        %v2823 = vmul.f32 %v2815, 0.7978846
        %v2824 = vmul.f32 %v2816, 0.7978846
        %v2825 = vmul.f32 %v2817, 0.7978846
        %v2826 = vmul.f32 %v2818, 0.7978846
        %v2827 = vmul.f32 %v2819, 0.7978846
        %v2828 = vmul.f32 %v2820, 0.7978846
        %v2829 = vmul.f32 %v2821, 0.7978846
        %v2830 = vtanh.pop %v2822
        %v2831 = vtanh.pop %v2823
        %v2832 = vtanh.pop %v2824
        %v2833 = vtanh.pop %v2825
        %v2834 = vtanh.pop %v2826
        %v2835 = vtanh.pop %v2827
        %v2836 = vtanh.pop %v2828
        %v2837 = vtanh.pop %v2829
        %v2838 = vadd.f32 %v2830, 1.0
        %v2839 = vadd.f32 %v2831, 1.0
        %v2840 = vadd.f32 %v2832, 1.0
        %v2841 = vadd.f32 %v2833, 1.0
        %v2842 = vadd.f32 %v2834, 1.0
        %v2843 = vadd.f32 %v2835, 1.0
        %v2844 = vadd.f32 %v2836, 1.0
        %v2845 = vadd.f32 %v2837, 1.0
        %v2846 = vmul.f32 %v2782, %v2838
        %v2847 = vmul.f32 %v2783, %v2839
        %v2848 = vmul.f32 %v2784, %v2840
        %v2849 = vmul.f32 %v2785, %v2841
        %v2850 = vmul.f32 %v2786, %v2842
        %v2851 = vmul.f32 %v2787, %v2843
        %v2852 = vmul.f32 %v2788, %v2844
        %v2853 = vmul.f32 %v2789, %v2845
        %v2854 = vpack.c.bf16 %v2850, %v2846
        %v2855 = vpack.c.bf16 %v2851, %v2847
        %v2856 = vpack.c.bf16 %v2852, %v2848
        %v2857 = vpack.c.bf16 %v2853, %v2849
        %v2858 = vld [vmem:[%s838] sm:$0xff]
        %v2859 = vld [vmem:[%s838 + $0x8] sm:$0xff]
        %v2860 = vld [vmem:[%s838 + $0x10] sm:$0xff]
        %v2861 = vld [vmem:[%s838 + $0x18] sm:$0xff]
        %v2862 = vld [vmem:[%s838 + $0x20] sm:$0xff]
        %v2863 = vld [vmem:[%s838 + $0x28] sm:$0xff]
        %v2864 = vld [vmem:[%s838 + $0x30] sm:$0xff]
        %v2865 = vld [vmem:[%s838 + $0x38] sm:$0xff]
        %v2866 = vld [vmem:[%s838 + $0x40] sm:$0xff]
        %v2867 = vld [vmem:[%s838 + $0x48] sm:$0xff]
        %v2868 = vld [vmem:[%s838 + $0x50] sm:$0xff]
        %v2869 = vld [vmem:[%s838 + $0x58] sm:$0xff]
        %v2870 = vld [vmem:[%s838 + $0x60] sm:$0xff]
        %v2871 = vld [vmem:[%s838 + $0x68] sm:$0xff]
        %v2872 = vld [vmem:[%s838 + $0x70] sm:$0xff]
        %v2873 = vld [vmem:[%s838 + $0x78] sm:$0xff]
        %v2874 = vld [vmem:[%s838 + $0x80] sm:$0xff]
        %v2875 = vld [vmem:[%s838 + $0x88] sm:$0xff]
        %v2876 = vld [vmem:[%s838 + $0x90] sm:$0xff]
        %v2877 = vld [vmem:[%s838 + $0x98] sm:$0xff]
        %v2878 = vld [vmem:[%s838 + $0xa0] sm:$0xff]
        %v2879 = vld [vmem:[%s838 + $0xa8] sm:$0xff]
        %v2880 = vld [vmem:[%s838 + $0xb0] sm:$0xff]
        %v2881 = vld [vmem:[%s838 + $0xb8] sm:$0xff]
        %v2882 = vld [vmem:[%s838 + $0xc0] sm:$0xff]
        %v2883 = vld [vmem:[%s838 + $0xc8] sm:$0xff]
        %v2884 = vld [vmem:[%s838 + $0xd0] sm:$0xff]
        %v2885 = vld [vmem:[%s838 + $0xd8] sm:$0xff]
        %v2886 = vld [vmem:[%s838 + $0xe0] sm:$0xff]
        %v2887 = vld [vmem:[%s838 + $0xe8] sm:$0xff]
        %v2888 = vld [vmem:[%s838 + $0xf0] sm:$0xff]
        %v2889 = vld [vmem:[%s838 + $0xf8] sm:$0xff]
        %v2890 = vld [vmem:[%s838 + $0x100] sm:$0xff]
        %v2891 = vld [vmem:[%s838 + $0x108] sm:$0xff]
        %v2892 = vld [vmem:[%s838 + $0x110] sm:$0xff]
        %v2893 = vld [vmem:[%s838 + $0x118] sm:$0xff]
        %v2894 = vld [vmem:[%s838 + $0x120] sm:$0xff]
        %v2895 = vld [vmem:[%s838 + $0x128] sm:$0xff]
        %v2896 = vld [vmem:[%s838 + $0x130] sm:$0xff]
        %v2897 = vld [vmem:[%s838 + $0x138] sm:$0xff]
        %v2898 = vld [vmem:[%s838 + $0x140] sm:$0xff]
        %v2899 = vld [vmem:[%s838 + $0x148] sm:$0xff]
        %v2900 = vld [vmem:[%s838 + $0x150] sm:$0xff]
        %v2901 = vld [vmem:[%s838 + $0x158] sm:$0xff]
        %v2902 = vld [vmem:[%s838 + $0x160] sm:$0xff]
        %v2903 = vld [vmem:[%s838 + $0x168] sm:$0xff]
        %v2904 = vld [vmem:[%s838 + $0x170] sm:$0xff]
        %v2905 = vld [vmem:[%s838 + $0x178] sm:$0xff]
        %v2906 = vld [vmem:[%s838 + $0x180] sm:$0xff]
        %v2907 = vld [vmem:[%s838 + $0x188] sm:$0xff]
        %v2908 = vld [vmem:[%s838 + $0x190] sm:$0xff]
        %v2909 = vld [vmem:[%s838 + $0x198] sm:$0xff]
        %v2910 = vld [vmem:[%s838 + $0x1a0] sm:$0xff]
        %v2911 = vld [vmem:[%s838 + $0x1a8] sm:$0xff]
        %v2912 = vld [vmem:[%s838 + $0x1b0] sm:$0xff]
        %v2913 = vld [vmem:[%s838 + $0x1b8] sm:$0xff]
        %v2914 = vld [vmem:[%s838 + $0x1c0] sm:$0xff]
        %v2915 = vld [vmem:[%s838 + $0x1c8] sm:$0xff]
        %v2916 = vld [vmem:[%s838 + $0x1d0] sm:$0xff]
        %v2917 = vld [vmem:[%s838 + $0x1d8] sm:$0xff]
        %v2918 = vld [vmem:[%s838 + $0x1e0] sm:$0xff]
        %v2919 = vld [vmem:[%s838 + $0x1e8] sm:$0xff]
        %v2920 = vld [vmem:[%s838 + $0x1f0] sm:$0xff]
        %v2921 = vld [vmem:[%s838 + $0x1f8] sm:$0xff]
        %v2986 = vunpack.c.l.b16 %v2858
        %v2987 = vunpack.c.h.b16 %v2858
        %v2988 = vunpack.c.l.b16 %v2859
        %v2989 = vunpack.c.h.b16 %v2859
        %v2990 = vunpack.c.l.b16 %v2860
        %v2991 = vunpack.c.h.b16 %v2860
        %v2992 = vunpack.c.l.b16 %v2861
        %v2993 = vunpack.c.h.b16 %v2861
        %v2994 = vunpack.c.l.b16 %v2862
        %v2995 = vunpack.c.h.b16 %v2862
        %v2996 = vunpack.c.l.b16 %v2863
        %v2997 = vunpack.c.h.b16 %v2863
        %v2998 = vunpack.c.l.b16 %v2864
        %v2999 = vunpack.c.h.b16 %v2864
        %v3000 = vunpack.c.l.b16 %v2865
        %v3001 = vunpack.c.h.b16 %v2865
        %v3002 = vunpack.c.l.b16 %v2866
        %v3003 = vunpack.c.h.b16 %v2866
        %v3004 = vunpack.c.l.b16 %v2867
        %v3005 = vunpack.c.h.b16 %v2867
        %v3006 = vunpack.c.l.b16 %v2868
        %v3007 = vunpack.c.h.b16 %v2868
        %v3008 = vunpack.c.l.b16 %v2869
        %v3009 = vunpack.c.h.b16 %v2869
        %v3010 = vunpack.c.l.b16 %v2870
        %v3011 = vunpack.c.h.b16 %v2870
        %v3012 = vunpack.c.l.b16 %v2871
        %v3013 = vunpack.c.h.b16 %v2871
        %v3014 = vunpack.c.l.b16 %v2872
        %v3015 = vunpack.c.h.b16 %v2872
        %v3016 = vunpack.c.l.b16 %v2873
        %v3017 = vunpack.c.h.b16 %v2873
        %v3018 = vunpack.c.l.b16 %v2874
        %v3019 = vunpack.c.h.b16 %v2874
        %v3020 = vunpack.c.l.b16 %v2875
        %v3021 = vunpack.c.h.b16 %v2875
        %v3022 = vunpack.c.l.b16 %v2876
        %v3023 = vunpack.c.h.b16 %v2876
        %v3024 = vunpack.c.l.b16 %v2877
        %v3025 = vunpack.c.h.b16 %v2877
        %v3026 = vunpack.c.l.b16 %v2878
        %v3027 = vunpack.c.h.b16 %v2878
        %v3028 = vunpack.c.l.b16 %v2879
        %v3029 = vunpack.c.h.b16 %v2879
        %v3030 = vunpack.c.l.b16 %v2880
        %v3031 = vunpack.c.h.b16 %v2880
        %v3032 = vunpack.c.l.b16 %v2881
        %v3033 = vunpack.c.h.b16 %v2881
        %v3034 = vunpack.c.l.b16 %v2882
        %v3035 = vunpack.c.h.b16 %v2882
        %v3036 = vunpack.c.l.b16 %v2883
        %v3037 = vunpack.c.h.b16 %v2883
        %v3038 = vunpack.c.l.b16 %v2884
        %v3039 = vunpack.c.h.b16 %v2884
        %v3040 = vunpack.c.l.b16 %v2885
        %v3041 = vunpack.c.h.b16 %v2885
        %v3042 = vunpack.c.l.b16 %v2886
        %v3043 = vunpack.c.h.b16 %v2886
        %v3044 = vunpack.c.l.b16 %v2887
        %v3045 = vunpack.c.h.b16 %v2887
        %v3046 = vunpack.c.l.b16 %v2888
        %v3047 = vunpack.c.h.b16 %v2888
        %v3048 = vunpack.c.l.b16 %v2889
        %v3049 = vunpack.c.h.b16 %v2889
        %v3050 = vunpack.c.l.b16 %v2890
        %v3051 = vunpack.c.h.b16 %v2890
        %v3052 = vunpack.c.l.b16 %v2891
        %v3053 = vunpack.c.h.b16 %v2891
        %v3054 = vunpack.c.l.b16 %v2892
        %v3055 = vunpack.c.h.b16 %v2892
        %v3056 = vunpack.c.l.b16 %v2893
        %v3057 = vunpack.c.h.b16 %v2893
        %v3058 = vunpack.c.l.b16 %v2894
        %v3059 = vunpack.c.h.b16 %v2894
        %v3060 = vunpack.c.l.b16 %v2895
        %v3061 = vunpack.c.h.b16 %v2895
        %v3062 = vunpack.c.l.b16 %v2896
        %v3063 = vunpack.c.h.b16 %v2896
        %v3064 = vunpack.c.l.b16 %v2897
        %v3065 = vunpack.c.h.b16 %v2897
        %v3066 = vunpack.c.l.b16 %v2898
        %v3067 = vunpack.c.h.b16 %v2898
        %v3068 = vunpack.c.l.b16 %v2899
        %v3069 = vunpack.c.h.b16 %v2899
        %v3070 = vunpack.c.l.b16 %v2900
        %v3071 = vunpack.c.h.b16 %v2900
        %v3072 = vunpack.c.l.b16 %v2901
        %v3073 = vunpack.c.h.b16 %v2901
        %v3074 = vunpack.c.l.b16 %v2902
        %v3075 = vunpack.c.h.b16 %v2902
        %v3076 = vunpack.c.l.b16 %v2903
        %v3077 = vunpack.c.h.b16 %v2903
        %v3078 = vunpack.c.l.b16 %v2904
        %v3079 = vunpack.c.h.b16 %v2904
        %v3080 = vunpack.c.l.b16 %v2905
        %v3081 = vunpack.c.h.b16 %v2905
        %v3082 = vunpack.c.l.b16 %v2906
        %v3083 = vunpack.c.h.b16 %v2906
        %v3084 = vunpack.c.l.b16 %v2907
        %v3085 = vunpack.c.h.b16 %v2907
        %v3086 = vunpack.c.l.b16 %v2908
        %v3087 = vunpack.c.h.b16 %v2908
        %v3088 = vunpack.c.l.b16 %v2909
        %v3089 = vunpack.c.h.b16 %v2909
        %v3090 = vunpack.c.l.b16 %v2910
        %v3091 = vunpack.c.h.b16 %v2910
        %v3092 = vunpack.c.l.b16 %v2911
        %v3093 = vunpack.c.h.b16 %v2911
        %v3094 = vunpack.c.l.b16 %v2912
        %v3095 = vunpack.c.h.b16 %v2912
        %v3096 = vunpack.c.l.b16 %v2913
        %v3097 = vunpack.c.h.b16 %v2913
        %v3098 = vunpack.c.l.b16 %v2914
        %v3099 = vunpack.c.h.b16 %v2914
        %v3100 = vunpack.c.l.b16 %v2915
        %v3101 = vunpack.c.h.b16 %v2915
        %v3102 = vunpack.c.l.b16 %v2916
        %v3103 = vunpack.c.h.b16 %v2916
        %v3104 = vunpack.c.l.b16 %v2917
        %v3105 = vunpack.c.h.b16 %v2917
        %v3106 = vunpack.c.l.b16 %v2918
        %v3107 = vunpack.c.h.b16 %v2918
        %v3108 = vunpack.c.l.b16 %v2919
        %v3109 = vunpack.c.h.b16 %v2919
        %v3110 = vunpack.c.l.b16 %v2920
        %v3111 = vunpack.c.h.b16 %v2920
        %v3112 = vunpack.c.l.b16 %v2921
        %v3113 = vunpack.c.h.b16 %v2921
        %v3114 = vpack.c.b16 %v2988, %v2986
        %v3115 = vpack.c.b16 %v2989, %v2987
        %v3116 = vpack.c.b16 %v2992, %v2990
        %v3117 = vpack.c.b16 %v2993, %v2991
        %v3118 = vpack.c.b16 %v2996, %v2994
        %v3119 = vpack.c.b16 %v2997, %v2995
        %v3120 = vpack.c.b16 %v3000, %v2998
        %v3121 = vpack.c.b16 %v3001, %v2999
        %v3122 = vpack.c.b16 %v3004, %v3002
        %v3123 = vpack.c.b16 %v3005, %v3003
        %v3124 = vpack.c.b16 %v3008, %v3006
        %v3125 = vpack.c.b16 %v3009, %v3007
        %v3126 = vpack.c.b16 %v3012, %v3010
        %v3127 = vpack.c.b16 %v3013, %v3011
        %v3128 = vpack.c.b16 %v3016, %v3014
        %v3129 = vpack.c.b16 %v3017, %v3015
        %v3130 = vpack.c.b16 %v3020, %v3018
        %v3131 = vpack.c.b16 %v3021, %v3019
        %v3132 = vpack.c.b16 %v3024, %v3022
        %v3133 = vpack.c.b16 %v3025, %v3023
        %v3134 = vpack.c.b16 %v3028, %v3026
        %v3135 = vpack.c.b16 %v3029, %v3027
        %v3136 = vpack.c.b16 %v3032, %v3030
        %v3137 = vpack.c.b16 %v3033, %v3031
        %v3138 = vpack.c.b16 %v3036, %v3034
        %v3139 = vpack.c.b16 %v3037, %v3035
        %v3140 = vpack.c.b16 %v3040, %v3038
        %v3141 = vpack.c.b16 %v3041, %v3039
        %v3142 = vpack.c.b16 %v3044, %v3042
        %v3143 = vpack.c.b16 %v3045, %v3043
        %v3144 = vpack.c.b16 %v3048, %v3046
        %v3145 = vpack.c.b16 %v3049, %v3047
        %v3146 = vpack.c.b16 %v3052, %v3050
        %v3147 = vpack.c.b16 %v3053, %v3051
        %v3148 = vpack.c.b16 %v3056, %v3054
        %v3149 = vpack.c.b16 %v3057, %v3055
        %v3150 = vpack.c.b16 %v3060, %v3058
        %v3151 = vpack.c.b16 %v3061, %v3059
        %v3152 = vpack.c.b16 %v3064, %v3062
        %v3153 = vpack.c.b16 %v3065, %v3063
        %v3154 = vpack.c.b16 %v3068, %v3066
        %v3155 = vpack.c.b16 %v3069, %v3067
        %v3156 = vpack.c.b16 %v3072, %v3070
        %v3157 = vpack.c.b16 %v3073, %v3071
        %v3158 = vpack.c.b16 %v3076, %v3074
        %v3159 = vpack.c.b16 %v3077, %v3075
        %v3160 = vpack.c.b16 %v3080, %v3078
        %v3161 = vpack.c.b16 %v3081, %v3079
        %v3162 = vpack.c.b16 %v3084, %v3082
        %v3163 = vpack.c.b16 %v3085, %v3083
        %v3164 = vpack.c.b16 %v3088, %v3086
        %v3165 = vpack.c.b16 %v3089, %v3087
        %v3166 = vpack.c.b16 %v3092, %v3090
        %v3167 = vpack.c.b16 %v3093, %v3091
        %v3168 = vpack.c.b16 %v3096, %v3094
        %v3169 = vpack.c.b16 %v3097, %v3095
        %v3170 = vpack.c.b16 %v3100, %v3098
        %v3171 = vpack.c.b16 %v3101, %v3099
        %v3172 = vpack.c.b16 %v3104, %v3102
        %v3173 = vpack.c.b16 %v3105, %v3103
        %v3174 = vpack.c.b16 %v3108, %v3106
        %v3175 = vpack.c.b16 %v3109, %v3107
        %v3176 = vpack.c.b16 %v3112, %v3110
        %v3177 = vpack.c.b16 %v3113, %v3111
        %3242 = vmatpush.bf16.msra.mxu0 %v3128
        %3243 = vmatpush.bf16.msra.mxu0 %v3126
        %3244 = vmatpush.bf16.msra.mxu0 %v3124
        %3245 = vmatpush.bf16.msra.mxu0 %v3122
        %3246 = vmatpush.bf16.msra.mxu0 %v3120
        %3247 = vmatpush.bf16.msra.mxu0 %v3118
        %3248 = vmatpush.bf16.msra.mxu0 %v3116
        %3249 = vmatpush.bf16.msra.mxu0 %v3114
        %3250 = vmatmul.bf16.gmra.mxu0 %v2854
        %v3251 = vpop.f32.mrf.mxu0
        %v3252 = vadd.f32 0.0, %v3251
        %v3253 = vpop.f32.mrf.mxu0
        %v3254 = vadd.f32 0.0, %v3253
        %3255 = vdwg.mxu0
        %3256 = vmatpush.bf16.msra.mxu0 %v3144
        %3257 = vmatpush.bf16.msra.mxu0 %v3142
        %3258 = vmatpush.bf16.msra.mxu0 %v3140
        %3259 = vmatpush.bf16.msra.mxu0 %v3138
        %3260 = vmatpush.bf16.msra.mxu0 %v3136
        %3261 = vmatpush.bf16.msra.mxu0 %v3134
        %3262 = vmatpush.bf16.msra.mxu0 %v3132
        %3263 = vmatpush.bf16.msra.mxu0 %v3130
        %3264 = vmatmul.bf16.gmra.mxu0 %v2855
        %v3265 = vpop.f32.mrf.mxu0
        %v3266 = vadd.f32 %v3252, %v3265
        %v3267 = vpop.f32.mrf.mxu0
        %v3268 = vadd.f32 %v3254, %v3267
        %3269 = vdwg.mxu0
        %3270 = vmatpush.bf16.msra.mxu0 %v3160
        %3271 = vmatpush.bf16.msra.mxu0 %v3158
        %3272 = vmatpush.bf16.msra.mxu0 %v3156
        %3273 = vmatpush.bf16.msra.mxu0 %v3154
        %3274 = vmatpush.bf16.msra.mxu0 %v3152
        %3275 = vmatpush.bf16.msra.mxu0 %v3150
        %3276 = vmatpush.bf16.msra.mxu0 %v3148
        %3277 = vmatpush.bf16.msra.mxu0 %v3146
        %3278 = vmatmul.bf16.gmra.mxu0 %v2856
        %v3279 = vpop.f32.mrf.mxu0
        %v3280 = vadd.f32 %v3266, %v3279
        %v3281 = vpop.f32.mrf.mxu0
        %v3282 = vadd.f32 %v3268, %v3281
        %3283 = vdwg.mxu0
        %3284 = vmatpush.bf16.msra.mxu0 %v3176
        %3285 = vmatpush.bf16.msra.mxu0 %v3174
        %3286 = vmatpush.bf16.msra.mxu0 %v3172
        %3287 = vmatpush.bf16.msra.mxu0 %v3170
        %3288 = vmatpush.bf16.msra.mxu0 %v3168
        %3289 = vmatpush.bf16.msra.mxu0 %v3166
        %3290 = vmatpush.bf16.msra.mxu0 %v3164
        %3291 = vmatpush.bf16.msra.mxu0 %v3162
        %3292 = vmatmul.bf16.gmra.mxu0 %v2857
        %v3293 = vpop.f32.mrf.mxu0
        %v3294 = vadd.f32 %v3280, %v3293
        %v3295 = vpop.f32.mrf.mxu0
        %v3296 = vadd.f32 %v3282, %v3295
        %3297 = vdwg.mxu0
        %3298 = vmatpush.bf16.msra.mxu0 %v3129
        %3299 = vmatpush.bf16.msra.mxu0 %v3127
        %3300 = vmatpush.bf16.msra.mxu0 %v3125
        %3301 = vmatpush.bf16.msra.mxu0 %v3123
        %3302 = vmatpush.bf16.msra.mxu0 %v3121
        %3303 = vmatpush.bf16.msra.mxu0 %v3119
        %3304 = vmatpush.bf16.msra.mxu0 %v3117
        %3305 = vmatpush.bf16.msra.mxu0 %v3115
        %3306 = vmatmul.bf16.gmra.mxu0 %v2854
        %v3307 = vpop.f32.mrf.mxu0
        %v3308 = vadd.f32 0.0, %v3307
        %v3309 = vpop.f32.mrf.mxu0
        %v3310 = vadd.f32 0.0, %v3309
        %3311 = vdwg.mxu0
        %3312 = vmatpush.bf16.msra.mxu0 %v3145
        %3313 = vmatpush.bf16.msra.mxu0 %v3143
        %3314 = vmatpush.bf16.msra.mxu0 %v3141
        %3315 = vmatpush.bf16.msra.mxu0 %v3139
        %3316 = vmatpush.bf16.msra.mxu0 %v3137
        %3317 = vmatpush.bf16.msra.mxu0 %v3135
        %3318 = vmatpush.bf16.msra.mxu0 %v3133
        %3319 = vmatpush.bf16.msra.mxu0 %v3131
        %3320 = vmatmul.bf16.gmra.mxu0 %v2855
        %v3321 = vpop.f32.mrf.mxu0
        %v3322 = vadd.f32 %v3308, %v3321
        %v3323 = vpop.f32.mrf.mxu0
        %v3324 = vadd.f32 %v3310, %v3323
        %3325 = vdwg.mxu0
        %3326 = vmatpush.bf16.msra.mxu0 %v3161
        %3327 = vmatpush.bf16.msra.mxu0 %v3159
        %3328 = vmatpush.bf16.msra.mxu0 %v3157
        %3329 = vmatpush.bf16.msra.mxu0 %v3155
        %3330 = vmatpush.bf16.msra.mxu0 %v3153
        %3331 = vmatpush.bf16.msra.mxu0 %v3151
        %3332 = vmatpush.bf16.msra.mxu0 %v3149
        %3333 = vmatpush.bf16.msra.mxu0 %v3147
        %3334 = vmatmul.bf16.gmra.mxu0 %v2856
        %v3335 = vpop.f32.mrf.mxu0
        %v3336 = vadd.f32 %v3322, %v3335
        %v3337 = vpop.f32.mrf.mxu0
        %v3338 = vadd.f32 %v3324, %v3337
        %3339 = vdwg.mxu0
        %3340 = vmatpush.bf16.msra.mxu0 %v3177
        %3341 = vmatpush.bf16.msra.mxu0 %v3175
        %3342 = vmatpush.bf16.msra.mxu0 %v3173
        %3343 = vmatpush.bf16.msra.mxu0 %v3171
        %3344 = vmatpush.bf16.msra.mxu0 %v3169
        %3345 = vmatpush.bf16.msra.mxu0 %v3167
        %3346 = vmatpush.bf16.msra.mxu0 %v3165
        %3347 = vmatpush.bf16.msra.mxu0 %v3163
        %3348 = vmatmul.bf16.gmra.mxu0 %v2857
        %v3349 = vpop.f32.mrf.mxu0
        %v3350 = vadd.f32 %v3336, %v3349
        %v3351 = vpop.f32.mrf.mxu0
        %v3352 = vadd.f32 %v3338, %v3351
        %3353 = vdwg.mxu0
        %v3354 = vadd.f32 %v2210, %v3294
        %v3355 = vadd.f32 %v2211, %v3350
        %v3356 = vadd.f32 %v2212, %v3296
        %v3357 = vadd.f32 %v2213, %v3352
        %3358 = vst [vmem:[#allocation2] sm:$0xff] %v3354
        %3359 = vst [vmem:[#allocation2 + $0x8] sm:$0xff] %v3355
        %3360 = vst [vmem:[#allocation2 + $0x10] sm:$0xff] %v3356
        %3361 = vst [vmem:[#allocation2 + $0x18] sm:$0xff] %v3357
        %p3362 = scmp.eq.s32.totalorder %s51, 1
        // Predicated region
        $region121: #{tpu_custom_call.1} parent=83 // pred_check
          %p3363 = pneg %p3362
        $region122: #{tpu_custom_call.1} parent=83 // pred_check_branch
          %3365 = sbr.rel (%p3363) target = $region124
        $region123: #{tpu_custom_call.1} parent=83 // pred_region
          %v3366 = vld [vmem:[#allocation2] sm:$0xff]
          %v3367 = vld [vmem:[#allocation2 + $0x8] sm:$0xff]
          %v3368 = vld [vmem:[#allocation2 + $0x10] sm:$0xff]
          %v3369 = vld [vmem:[#allocation2 + $0x18] sm:$0xff]
          %v3370 = vld [vmem:[%s13] sm:$0x3]
          %v3371 = vld [vmem:[%s14] sm:$0x3]
          %v3372 = vadd.f32 %v3366, %v3367
          %3373 = vadd.xlane.f32.xlu0 %v3372
          %v3374 = vpop.xlane.xlu0 %3373
          %v3375 = vadd.f32 %v3368, %v3369
          %3376 = vadd.xlane.f32.xlu0 %v3375
          %v3377 = vpop.xlane.xlu0 %3376
          %v3378 = vmul.f32 %v3374, %v1032
          %v3379 = vmul.f32 %v3377, %v1032
          %v3380 = vsub.f32 %v3366, %v3378
          %v3381 = vsub.f32 %v3367, %v3378
          %v3382 = vsub.f32 %v3368, %v3379
          %v3383 = vsub.f32 %v3369, %v3379
          %v3384 = vmul.f32 %v3380, %v3380
          %v3385 = vmul.f32 %v3381, %v3381
          %v3386 = vmul.f32 %v3382, %v3382
          %v3387 = vmul.f32 %v3383, %v3383
          %v3388 = vadd.f32 %v3384, %v3385
          %3389 = vadd.xlane.f32.xlu0 %v3388
          %v3390 = vpop.xlane.xlu0 %3389
          %v3391 = vadd.f32 %v3386, %v3387
          %3392 = vadd.xlane.f32.xlu0 %v3391
          %v3393 = vpop.xlane.xlu0 %3392
          %v3394 = vmul.f32 %v3390, %v1032
          %v3395 = vmul.f32 %v3393, %v1032
          %v3396 = vadd.f32 %v3394, 1e-05
          %v3397 = vadd.f32 %v3395, 1e-05
          %v3398 = vrsqrt.pop %v3396
          %v3399 = vmul.f32 %v3398, %v3396
          %v3400 = vmul.f32 %v3399, %v3398
          %v3401 = vmul.f32 0.5, %v3400
          %v3402 = vsub.f32 1.5, %v3401
          %v3403 = vmul.f32 %v3398, %v3402
          %vm3404 = vweird.f32 %v3396
          %vm3405 = vweird.f32 %v3398
          %vm3406 = vmor %vm3404, %vm3405
          %v3407 = vsel %vm3406, %v3398, %v3403
          %v3408 = vrsqrt.pop %v3397
          %v3409 = vmul.f32 %v3408, %v3397
          %v3410 = vmul.f32 %v3409, %v3408
          %v3411 = vmul.f32 0.5, %v3410
          %v3412 = vsub.f32 1.5, %v3411
          %v3413 = vmul.f32 %v3408, %v3412
          %vm3414 = vweird.f32 %v3397
          %vm3415 = vweird.f32 %v3408
          %vm3416 = vmor %vm3414, %vm3415
          %v3417 = vsel %vm3416, %v3408, %v3413
          %v3418 = vmul.f32 %v3380, %v3407
          %v3419 = vmul.f32 %v3381, %v3407
          %v3420 = vmul.f32 %v3382, %v3417
          %v3421 = vmul.f32 %v3383, %v3417
          %v3423 = vperm.slane %v3370, 0
          %v3424 = vperm.slane %v3370, 1
          %v3427 = vmul.f32 %v3418, %v3423
          %v3428 = vmul.f32 %v3419, %v3424
          %v3429 = vmul.f32 %v3420, %v3423
          %v3430 = vmul.f32 %v3421, %v3424
          %v3432 = vperm.slane %v3371, 0
          %v3433 = vperm.slane %v3371, 1
          %v3436 = vadd.f32 %v3427, %v3432
          %v3437 = vadd.f32 %v3428, %v3433
          %v3438 = vadd.f32 %v3429, %v3432
          %v3439 = vadd.f32 %v3430, %v3433
          %v3440 = vpack.c.bf16 %v3438, %v3436
          %v3441 = vpack.c.bf16 %v3439, %v3437
          %v3442 = vld [vmem:[#allocation15] sm:$0xff]
          %v3443 = vld [vmem:[#allocation15 + $0x8] sm:$0xff]
          %v3444 = vld [vmem:[#allocation15 + $0x10] sm:$0xff]
          %v3445 = vld [vmem:[#allocation15 + $0x18] sm:$0xff]
          %v3446 = vld [vmem:[#allocation15 + $0x20] sm:$0xff]
          %v3447 = vld [vmem:[#allocation15 + $0x28] sm:$0xff]
          %v3448 = vld [vmem:[#allocation15 + $0x30] sm:$0xff]
          %v3449 = vld [vmem:[#allocation15 + $0x38] sm:$0xff]
          %v3450 = vld [vmem:[#allocation15 + $0x40] sm:$0xff]
          %v3451 = vld [vmem:[#allocation15 + $0x48] sm:$0xff]
          %v3452 = vld [vmem:[#allocation15 + $0x50] sm:$0xff]
          %v3453 = vld [vmem:[#allocation15 + $0x58] sm:$0xff]
          %v3454 = vld [vmem:[#allocation15 + $0x60] sm:$0xff]
          %v3455 = vld [vmem:[#allocation15 + $0x68] sm:$0xff]
          %v3456 = vld [vmem:[#allocation15 + $0x70] sm:$0xff]
          %v3457 = vld [vmem:[#allocation15 + $0x78] sm:$0xff]
          %v3458 = vld [vmem:[#allocation15 + $0x80] sm:$0xff]
          %v3459 = vld [vmem:[#allocation15 + $0x88] sm:$0xff]
          %v3460 = vld [vmem:[#allocation15 + $0x90] sm:$0xff]
          %v3461 = vld [vmem:[#allocation15 + $0x98] sm:$0xff]
          %v3462 = vld [vmem:[#allocation15 + $0xa0] sm:$0xff]
          %v3463 = vld [vmem:[#allocation15 + $0xa8] sm:$0xff]
          %v3464 = vld [vmem:[#allocation15 + $0xb0] sm:$0xff]
          %v3465 = vld [vmem:[#allocation15 + $0xb8] sm:$0xff]
          %v3466 = vld [vmem:[#allocation15 + $0xc0] sm:$0xff]
          %v3467 = vld [vmem:[#allocation15 + $0xc8] sm:$0xff]
          %v3468 = vld [vmem:[#allocation15 + $0xd0] sm:$0xff]
          %v3469 = vld [vmem:[#allocation15 + $0xd8] sm:$0xff]
          %v3470 = vld [vmem:[#allocation15 + $0xe0] sm:$0xff]
          %v3471 = vld [vmem:[#allocation15 + $0xe8] sm:$0xff]
          %v3472 = vld [vmem:[#allocation15 + $0xf0] sm:$0xff]
          %v3473 = vld [vmem:[#allocation15 + $0xf8] sm:$0xff]
          %v3506 = vunpack.c.l.b16 %v3442
          %v3507 = vunpack.c.h.b16 %v3442
          %v3508 = vunpack.c.l.b16 %v3443
          %v3509 = vunpack.c.h.b16 %v3443
          %v3510 = vunpack.c.l.b16 %v3444
          %v3511 = vunpack.c.h.b16 %v3444
          %v3512 = vunpack.c.l.b16 %v3445
          %v3513 = vunpack.c.h.b16 %v3445
          %v3514 = vunpack.c.l.b16 %v3446
          %v3515 = vunpack.c.h.b16 %v3446
          %v3516 = vunpack.c.l.b16 %v3447
          %v3517 = vunpack.c.h.b16 %v3447
          %v3518 = vunpack.c.l.b16 %v3448
          %v3519 = vunpack.c.h.b16 %v3448
          %v3520 = vunpack.c.l.b16 %v3449
          %v3521 = vunpack.c.h.b16 %v3449
          %v3522 = vunpack.c.l.b16 %v3450
          %v3523 = vunpack.c.h.b16 %v3450
          %v3524 = vunpack.c.l.b16 %v3451
          %v3525 = vunpack.c.h.b16 %v3451
          %v3526 = vunpack.c.l.b16 %v3452
          %v3527 = vunpack.c.h.b16 %v3452
          %v3528 = vunpack.c.l.b16 %v3453
          %v3529 = vunpack.c.h.b16 %v3453
          %v3530 = vunpack.c.l.b16 %v3454
          %v3531 = vunpack.c.h.b16 %v3454
          %v3532 = vunpack.c.l.b16 %v3455
          %v3533 = vunpack.c.h.b16 %v3455
          %v3534 = vunpack.c.l.b16 %v3456
          %v3535 = vunpack.c.h.b16 %v3456
          %v3536 = vunpack.c.l.b16 %v3457
          %v3537 = vunpack.c.h.b16 %v3457
          %v3538 = vunpack.c.l.b16 %v3458
          %v3539 = vunpack.c.h.b16 %v3458
          %v3540 = vunpack.c.l.b16 %v3459
          %v3541 = vunpack.c.h.b16 %v3459
          %v3542 = vunpack.c.l.b16 %v3460
          %v3543 = vunpack.c.h.b16 %v3460
          %v3544 = vunpack.c.l.b16 %v3461
          %v3545 = vunpack.c.h.b16 %v3461
          %v3546 = vunpack.c.l.b16 %v3462
          %v3547 = vunpack.c.h.b16 %v3462
          %v3548 = vunpack.c.l.b16 %v3463
          %v3549 = vunpack.c.h.b16 %v3463
          %v3550 = vunpack.c.l.b16 %v3464
          %v3551 = vunpack.c.h.b16 %v3464
          %v3552 = vunpack.c.l.b16 %v3465
          %v3553 = vunpack.c.h.b16 %v3465
          %v3554 = vunpack.c.l.b16 %v3466
          %v3555 = vunpack.c.h.b16 %v3466
          %v3556 = vunpack.c.l.b16 %v3467
          %v3557 = vunpack.c.h.b16 %v3467
          %v3558 = vunpack.c.l.b16 %v3468
          %v3559 = vunpack.c.h.b16 %v3468
          %v3560 = vunpack.c.l.b16 %v3469
          %v3561 = vunpack.c.h.b16 %v3469
          %v3562 = vunpack.c.l.b16 %v3470
          %v3563 = vunpack.c.h.b16 %v3470
          %v3564 = vunpack.c.l.b16 %v3471
          %v3565 = vunpack.c.h.b16 %v3471
          %v3566 = vunpack.c.l.b16 %v3472
          %v3567 = vunpack.c.h.b16 %v3472
          %v3568 = vunpack.c.l.b16 %v3473
          %v3569 = vunpack.c.h.b16 %v3473
          %v3570 = vpack.c.b16 %v3508, %v3506
          %v3571 = vpack.c.b16 %v3509, %v3507
          %v3572 = vpack.c.b16 %v3512, %v3510
          %v3573 = vpack.c.b16 %v3513, %v3511
          %v3574 = vpack.c.b16 %v3516, %v3514
          %v3575 = vpack.c.b16 %v3517, %v3515
          %v3576 = vpack.c.b16 %v3520, %v3518
          %v3577 = vpack.c.b16 %v3521, %v3519
          %v3578 = vpack.c.b16 %v3524, %v3522
          %v3579 = vpack.c.b16 %v3525, %v3523
          %v3580 = vpack.c.b16 %v3528, %v3526
          %v3581 = vpack.c.b16 %v3529, %v3527
          %v3582 = vpack.c.b16 %v3532, %v3530
          %v3583 = vpack.c.b16 %v3533, %v3531
          %v3584 = vpack.c.b16 %v3536, %v3534
          %v3585 = vpack.c.b16 %v3537, %v3535
          %v3586 = vpack.c.b16 %v3540, %v3538
          %v3587 = vpack.c.b16 %v3541, %v3539
          %v3588 = vpack.c.b16 %v3544, %v3542
          %v3589 = vpack.c.b16 %v3545, %v3543
          %v3590 = vpack.c.b16 %v3548, %v3546
          %v3591 = vpack.c.b16 %v3549, %v3547
          %v3592 = vpack.c.b16 %v3552, %v3550
          %v3593 = vpack.c.b16 %v3553, %v3551
          %v3594 = vpack.c.b16 %v3556, %v3554
          %v3595 = vpack.c.b16 %v3557, %v3555
          %v3596 = vpack.c.b16 %v3560, %v3558
          %v3597 = vpack.c.b16 %v3561, %v3559
          %v3598 = vpack.c.b16 %v3564, %v3562
          %v3599 = vpack.c.b16 %v3565, %v3563
          %v3600 = vpack.c.b16 %v3568, %v3566
          %v3601 = vpack.c.b16 %v3569, %v3567
          %3634 = vmatpush.bf16.msra.mxu0 %v3584
          %3635 = vmatpush.bf16.msra.mxu0 %v3582
          %3636 = vmatpush.bf16.msra.mxu0 %v3580
          %3637 = vmatpush.bf16.msra.mxu0 %v3578
          %3638 = vmatpush.bf16.msra.mxu0 %v3576
          %3639 = vmatpush.bf16.msra.mxu0 %v3574
          %3640 = vmatpush.bf16.msra.mxu0 %v3572
          %3641 = vmatpush.bf16.msra.mxu0 %v3570
          %3642 = vmatmul.bf16.gmra.mxu0 %v3440
          %v3643 = vpop.f32.mrf.mxu0
          %v3644 = vadd.f32 0.0, %v3643
          %v3645 = vpop.f32.mrf.mxu0
          %v3646 = vadd.f32 0.0, %v3645
          %3647 = vdwg.mxu0
          %3648 = vmatpush.bf16.msra.mxu0 %v3600
          %3649 = vmatpush.bf16.msra.mxu0 %v3598
          %3650 = vmatpush.bf16.msra.mxu0 %v3596
          %3651 = vmatpush.bf16.msra.mxu0 %v3594
          %3652 = vmatpush.bf16.msra.mxu0 %v3592
          %3653 = vmatpush.bf16.msra.mxu0 %v3590
          %3654 = vmatpush.bf16.msra.mxu0 %v3588
          %3655 = vmatpush.bf16.msra.mxu0 %v3586
          %3656 = vmatmul.bf16.gmra.mxu0 %v3441
          %v3657 = vpop.f32.mrf.mxu0
          %v3658 = vadd.f32 %v3644, %v3657
          %v3659 = vpop.f32.mrf.mxu0
          %v3660 = vadd.f32 %v3646, %v3659
          %3661 = vdwg.mxu0
          %3662 = vmatpush.bf16.msra.mxu0 %v3585
          %3663 = vmatpush.bf16.msra.mxu0 %v3583
          %3664 = vmatpush.bf16.msra.mxu0 %v3581
          %3665 = vmatpush.bf16.msra.mxu0 %v3579
          %3666 = vmatpush.bf16.msra.mxu0 %v3577
          %3667 = vmatpush.bf16.msra.mxu0 %v3575
          %3668 = vmatpush.bf16.msra.mxu0 %v3573
          %3669 = vmatpush.bf16.msra.mxu0 %v3571
          %3670 = vmatmul.bf16.gmra.mxu0 %v3440
          %v3671 = vpop.f32.mrf.mxu0
          %v3672 = vadd.f32 0.0, %v3671
          %v3673 = vpop.f32.mrf.mxu0
          %v3674 = vadd.f32 0.0, %v3673
          %3675 = vdwg.mxu0
          %3676 = vmatpush.bf16.msra.mxu0 %v3601
          %3677 = vmatpush.bf16.msra.mxu0 %v3599
          %3678 = vmatpush.bf16.msra.mxu0 %v3597
          %3679 = vmatpush.bf16.msra.mxu0 %v3595
          %3680 = vmatpush.bf16.msra.mxu0 %v3593
          %3681 = vmatpush.bf16.msra.mxu0 %v3591
          %3682 = vmatpush.bf16.msra.mxu0 %v3589
          %3683 = vmatpush.bf16.msra.mxu0 %v3587
          %3684 = vmatmul.bf16.gmra.mxu0 %v3441
          %v3685 = vpop.f32.mrf.mxu0
          %v3686 = vadd.f32 %v3672, %v3685
          %v3687 = vpop.f32.mrf.mxu0
          %v3688 = vadd.f32 %v3674, %v3687
          %3689 = vdwg.mxu0
          %3690 = vst [vmem:[%s946] sm:$0xff] %v3658
          %3691 = vst [vmem:[%s946 + $0x8] sm:$0xff] %v3686
          %3692 = vst [vmem:[%s946 + $0x10] sm:$0xff] %v3660
          %3693 = vst [vmem:[%s946 + $0x18] sm:$0xff] %v3688
          %v3694 = vld [vmem:[%s964] sm:$0xff]
          %v3695 = vld [vmem:[%s964 + $0x8] sm:$0xff]
          %v3696 = vmax.f32 %v3658, %v3686
          %3697 = vmax.xlane.f32.xlu0 %v3696
          %v3698 = vpop.xlane.xlu0 %3697
          %v3699 = vmax.f32 %v3660, %v3688
          %3700 = vmax.xlane.f32.xlu0 %v3699
          %v3701 = vpop.xlane.xlu0 %3700
          %v3702 = vsub.f32 %v3658, %v3698
          %v3703 = vsub.f32 %v3686, %v3698
          %v3704 = vsub.f32 %v3660, %v3701
          %v3705 = vsub.f32 %v3688, %v3701
          %v3706 = vmul.f32 %v3702, 1.442695
          %v3707 = vpow.pop %v3706
          %v3708 = vmul.f32 %v3703, 1.442695
          %v3709 = vpow.pop %v3708
          %v3710 = vmul.f32 %v3704, 1.442695
          %v3711 = vpow.pop %v3710
          %v3712 = vmul.f32 %v3705, 1.442695
          %v3713 = vpow.pop %v3712
          %v3714 = vadd.f32 %v3707, %v3709
          %3715 = vadd.xlane.f32.xlu0 %v3714
          %v3716 = vpop.xlane.xlu0 %3715
          %v3717 = vadd.f32 %v3711, %v3713
          %3718 = vadd.xlane.f32.xlu0 %v3717
          %v3719 = vpop.xlane.xlu0 %3718
          %v3720 = vlog2.pop %v3716
          %v3721 = vmul.f32 %v3720, 0.6931472
          %v3722 = vlog2.pop %v3719
          %v3723 = vmul.f32 %v3722, 0.6931472
          %v3724 = vadd.f32 %v3698, %v3721
          %v3725 = vadd.f32 %v3701, %v3723
          %v3726 = vadd.s32 %v1008, 128
          %3727 = vset.pattern.permute.xlu0 0
          %3728 = vperm.xlu0 %3727, %v3694
          %v3729 = vpop.permute.xlu0 %3728
          %3730 = vset.pattern.permute.xlu0 0
          %3731 = vperm.xlu0 %3730, %v3695
          %v3732 = vpop.permute.xlu0 %3731
          %vm3733 = vcmp.eq.s32.totalorder %v1008, %v3729
          %vm3734 = vcmp.eq.s32.totalorder %v3726, %v3729
          %vm3735 = vcmp.eq.s32.totalorder %v1008, %v3732
          %vm3736 = vcmp.eq.s32.totalorder %v3726, %v3732
          %v3737 = vsel %vm3733, %v3658, 0.0
          %v3738 = vsel %vm3734, %v3686, 0.0
          %v3739 = vsel %vm3735, %v3660, 0.0
          %v3740 = vsel %vm3736, %v3688, 0.0
          %v3741 = vadd.f32 %v3737, %v3738
          %3742 = vadd.xlane.f32.xlu0 %v3741
          %v3743 = vpop.xlane.xlu0 %3742
          %v3744 = vadd.f32 %v3739, %v3740
          %3745 = vadd.xlane.f32.xlu0 %v3744
          %v3746 = vpop.xlane.xlu0 %3745
          %vm3747 = vcmp.ne.s32.totalorder %v3694, 4294967196
          %vm3748 = vcmp.ne.s32.totalorder %v3695, 4294967196
          %v3749 = vsel %vm3747, 1, 0
          %v3750 = vsel %vm3748, 1, 0
          %v3751 = vcvt.s32.f32 %v3749
          %v3752 = vcvt.s32.f32 %v3750
          %v3753 = vsub.f32 %v3724, %v3743
          %v3754 = vsub.f32 %v3725, %v3746
          %v3755 = vmul.f32 %v3753, %v3751
          %v3756 = vmul.f32 %v3754, %v3752
          %vm3757 = vcmask 7168
          %v3758 = vsel %vm3757, %v3755, 0.0
          %v3759 = vsel %vm3757, %v3756, 0.0
          %v3760 = vadd.f32 %v3758, %v3759
          %v3761 = vrot.slane %v3760, 4
          %v3762 = vadd.f32 %v3760, %v3761
          %v3763 = vrot.slane %v3762, 2
          %v3764 = vadd.f32 %v3762, %v3763
          %v3765 = vrot.slane %v3764, 1
          %v3766 = vadd.f32 %v3764, %v3765
          %vm3767 = vcmask 0
          %3768 = vst.msk [vmem:[%s983] sm:$0x1] %vm3767, %v3766
          %v3769 = vsel %vm3757, %v3751, 0.0
          %v3770 = vsel %vm3757, %v3752, 0.0
          %v3771 = vadd.f32 %v3769, %v3770
          %v3772 = vrot.slane %v3771, 4
          %v3773 = vadd.f32 %v3771, %v3772
          %v3774 = vrot.slane %v3773, 2
          %v3775 = vadd.f32 %v3773, %v3774
          %v3776 = vrot.slane %v3775, 1
          %v3777 = vadd.f32 %v3775, %v3776
          %3778 = vst.msk [vmem:[%s986] sm:$0x1] %vm3767, %v3777
        $region124: #{tpu_custom_call.1} parent=83 // pred_fallthru
          _
        %s3779 = sand.u32 %s467, 1
        %s3780 = scalar_lea.sflag [#allocation5], %s3779
        %s3781 = sand.u32 %s467, 1
        %s3782 = smul.addr %s3781, 32
        %s3783 = scalar_lea.vmem [#allocation17], %s3782
        %p3784 = scmp.lt.s32.totalorder %s50, 1
        %s3785 = scalar_select %p3784, %s50, 1
        %s3786 = scalar_lea.vmem %s17, %s3785
        %p3787 = scmp.lt.s32.totalorder %s50, 1
        %s3788 = scalar_select %p3787, %s50, 1
        %s3789 = scalar_lea.vmem %s18, %s3788
        // Predicated region
        $region125: #{tpu_custom_call.1} parent=83 // pred_check
          %p3790 = pneg %p477
        $region126: #{tpu_custom_call.1} parent=83 // pred_check_branch
          %3792 = sbr.rel (%p3790) target = $region128
        $region127: #{tpu_custom_call.1} parent=83 // pred_region
          %3794 = vsyncadd %s3780, 0
          %s3795 = smul.addr %s50, 4
          %s3796 = smul.addr %s3795, 8
          %s3797 = scalar_lea.hbm %s16, %s3796
          %s3798 = sshll.u32 %s3783, 4
          %s3799 = int_to_ptr.vmem [resolvable:$true] %s3798
          %s3800 = sshll.u32 %s3797, 4
          %s3801 = int_to_ptr.hbm [resolvable:$true] %s3800
          %3806 = dma.vmem_to_hbm [thread:$0]  %s3799, 512, %s3801, %s3780, 256, 256, 16
        $region128: #{tpu_custom_call.1} parent=83 // pred_fallthru
          _
        // Predicated region
        $region129: #{tpu_custom_call.1} parent=83 // pred_check
          %p3807 = pneg %p503
        $region130: #{tpu_custom_call.1} parent=83 // pred_check_branch
          %3809 = sbr.rel (%p3807) target = $region132
        $region131: #{tpu_custom_call.1} parent=83 // pred_region
          _
        $region132: #{tpu_custom_call.1} parent=83 // pred_fallthru
          _
        // Predicated region
        $region133: #{tpu_custom_call.1} parent=83 // pred_check
          %p3810 = pneg %p529
        $region134: #{tpu_custom_call.1} parent=83 // pred_check_branch
          %3812 = sbr.rel (%p3810) target = $region136
        $region135: #{tpu_custom_call.1} parent=83 // pred_region
          _
        $region136: #{tpu_custom_call.1} parent=83 // pred_fallthru
          _
      $region84: #{tpu_custom_call.1} parent=5 // pred_fallthru
        _
      %p3813 = scmp.le.s32.totalorder 2, %s41
      // Predicated region
      $region137: #{tpu_custom_call.1} parent=5 // pred_check
        %p3814 = pneg %p3813
      $region138: #{tpu_custom_call.1} parent=5 // pred_check_branch
        %3816 = sbr.rel (%p3814) target = $region140
      $region139: #{tpu_custom_call.1} parent=5 // pred_region
        %s3817 = ssub.s32 %s41, 2
        // Predicated region
        $region141: #{tpu_custom_call.1} parent=139 // pred_check
          %p3818 = pneg %p483
        $region142: #{tpu_custom_call.1} parent=139 // pred_check_branch
          %3820 = sbr.rel (%p3818) target = $region144
        $region143: #{tpu_custom_call.1} parent=139 // pred_region
          %s3821 = sand.u32 %s468, 1
          %s3822 = scalar_lea.sflag [#allocation5], %s3821
          %s3823 = sand.u32 %s468, 1
          %s3824 = smul.addr %s3823, 32
          %s3825 = scalar_lea.vmem [#allocation17], %s3824
          %3827 = dma.done %s3822, 512
        $region144: #{tpu_custom_call.1} parent=139 // pred_fallthru
          _
        // Predicated region
        $region145: #{tpu_custom_call.1} parent=139 // pred_check
          %p3828 = pneg %p509
        $region146: #{tpu_custom_call.1} parent=139 // pred_check_branch
          %3830 = sbr.rel (%p3828) target = $region148
        $region147: #{tpu_custom_call.1} parent=139 // pred_region
          %p3831 = scmp.lt.s32.totalorder %s52, 1
          %s3832 = scalar_select %p3831, %s52, 1
          %s3833 = scalar_lea.vmem %s17, %s3832
        $region148: #{tpu_custom_call.1} parent=139 // pred_fallthru
          _
        // Predicated region
        $region149: #{tpu_custom_call.1} parent=139 // pred_check
          %p3834 = pneg %p535
        $region150: #{tpu_custom_call.1} parent=139 // pred_check_branch
          %3836 = sbr.rel (%p3834) target = $region152
        $region151: #{tpu_custom_call.1} parent=139 // pred_region
          %p3837 = scmp.lt.s32.totalorder %s52, 1
          %s3838 = scalar_select %p3837, %s52, 1
          %s3839 = scalar_lea.vmem %s18, %s3838
        $region152: #{tpu_custom_call.1} parent=139 // pred_fallthru
          _
      $region140: #{tpu_custom_call.1} parent=5 // pred_fallthru
        _
    $region6: #{tpu_custom_call.1} parent=1 // loop_footer
      %s45 = sadd.s32 1, %s41
    $region7: #{tpu_custom_call.1} parent=1 // loop_footer_branch
      %40 = sbr.rel target = $region3
    $region8: #{tpu_custom_call.1} parent=1 // loop_exit
      _
    %3840 = vsyncpa [#allocation4], 1
    %s3841 = scalar_lea.sflag [#allocation4], 1
    %3842 = vsyncpa %s3841, 1
    %3843 = vsyncpa [#allocation7], 1
    %s3844 = scalar_lea.sflag [#allocation7], 1
    %3845 = vsyncpa %s3844, 1
    %3846 = vsyncpa [#allocation10], 1
    %s3847 = scalar_lea.sflag [#allocation10], 1
    %3848 = vsyncpa %s3847, 1
    %3849 = vsyncpa [#allocation13], 1
    %s3850 = scalar_lea.sflag [#allocation13], 1
    %3851 = vsyncpa %s3850, 1
    %3852 = vsyncpa [#allocation16], 1
    %3853 = vsyncpa [#allocation5], 1
    %s3854 = scalar_lea.sflag [#allocation5], 1
    %3855 = vsyncpa %s3854, 1

</llo_original>
